<compile_context>
chip_gen: v7x
topology: tpu7x:2x2x1
jax: 0.10.0
libtpu: 0.0.40
codegen_flags: <defaults>
</compile_context>

<pallas_src>
import functools
import math

import jax
import jax.numpy as jnp
from jax import lax
from jax.experimental import pallas as pl
from jax.experimental.pallas import tpu as pltpu

LN_EPS = 1e-5
NEG_INF = -1e30
LANE = 128


# ---------------------------------------------------------------------------
# Shared math helpers (pure jnp -> usable both inside kernels and in the ref).
# ---------------------------------------------------------------------------
def _layer_norm(x, gamma, beta, eps=LN_EPS):
    mu = jnp.mean(x, axis=-1, keepdims=True)
    xc = x - mu
    var = jnp.mean(xc * xc, axis=-1, keepdims=True)
    return xc * lax.rsqrt(var + eps) * gamma + beta


def _gelu_tanh(x):
    c = math.sqrt(2.0 / math.pi)
    return 0.5 * x * (1.0 + jnp.tanh(c * (x + 0.044715 * x * x * x)))


def _positional_encoding(T, D):
    pos = jnp.arange(T, dtype=jnp.float32)[:, None]
    div = jnp.exp(jnp.arange(0, D, 2, dtype=jnp.float32) * (-math.log(10000.0) / D))
    ang = pos * div
    pe = jnp.zeros((T, D), jnp.float32)
    pe = pe.at[:, 0::2].set(jnp.sin(ang))
    pe = pe.at[:, 1::2].set(jnp.cos(ang))
    return pe


# ---------------------------------------------------------------------------
# Fused decoder-stack kernel
# ---------------------------------------------------------------------------
def _fused_decoder_kernel(x_in_ref, kbias_ref, maskq_ref, cross_ref,
                          wqkv_ref, bqkv_ref, wo_ref, bo_ref,
                          ln1g_ref, ln1b_ref, ln2g_ref, ln2b_ref,
                          ln3g_ref, ln3b_ref,
                          w1_ref, b1_ref, w2_ref, b2_ref,
                          wf_ref, bf_ref,
                          o_ref, x_vmem, *, num_heads, btile, t, d):
    """One layer of the decoder for one batch tile; x carried in VMEM scratch."""
    layer = pl.program_id(1)
    n_layers = pl.num_programs(1)
    dh = d // num_heads

    # Initialize the carried activations from the positional-encoding queries.
    @pl.when(layer == 0)
    def _():
        x_vmem[...] = x_in_ref[...]

    x = x_vmem[...]                                        # (R, D) f32, R = btile*T

    # ---- self-attention: fused full-width QKV (scale folded into Wq) -------
    qkv = jnp.dot(x, wqkv_ref[0], preferred_element_type=jnp.float32) + bqkv_ref[0]
    q, k, v = qkv[:, :d], qkv[:, d:2 * d], qkv[:, 2 * d:]

    ctx_rows = []
    for i in range(btile):                                 # static per-batch loop
        r0 = i * t
        qb, kb, vb = q[r0:r0 + t], k[r0:r0 + t], v[r0:r0 + t]
        bias = kbias_ref[i]                                # (1, T) key-padding bias
        heads = []
        for h in range(num_heads):                         # tiny (T,T) math per head
            c0 = h * dh
            s = lax.dot_general(qb[:, c0:c0 + dh], kb[:, c0:c0 + dh],
                                (((1,), (1,)), ((), ())),
                                preferred_element_type=jnp.float32) + bias
            m = jnp.max(s, axis=-1, keepdims=True)
            e = jnp.exp(s - m)
            p = e * pl.reciprocal(jnp.sum(e, axis=-1, keepdims=True), approx=True)
            heads.append(jnp.dot(p, vb[:, c0:c0 + dh],
                                 preferred_element_type=jnp.float32))
        ctx_rows.append(jnp.concatenate(heads, axis=-1))   # (T, D)
    ctx = jnp.concatenate(ctx_rows, axis=0)                # (R, D)

    sa = jnp.dot(ctx, wo_ref[0], preferred_element_type=jnp.float32) + bo_ref[0]
    x = _layer_norm(x + sa, ln1g_ref[0], ln1b_ref[0])

    # ---- cross-attention: memory length 1 => softmax == 1 exactly.
    #      cross = out_proj(v_proj(z)) is precomputed per layer in the wrapper.
    cross_rows = jnp.concatenate(
        [jnp.broadcast_to(cross_ref[0, i], (t, d)) for i in range(btile)], axis=0)
    x = _layer_norm(x + cross_rows, ln2g_ref[0], ln2b_ref[0])

    # ---- feed-forward --------------------------------------------------------
    h1 = _gelu_tanh(jnp.dot(x, w1_ref[0], preferred_element_type=jnp.float32)
                    + b1_ref[0])
    ff = jnp.dot(h1, w2_ref[0], preferred_element_type=jnp.float32) + b2_ref[0]
    x = _layer_norm(x + ff, ln3g_ref[0], ln3b_ref[0])

    x_vmem[...] = x

    # ---- final projection + padded-frame zeroing, fused into the last layer --
    @pl.when(layer == n_layers - 1)
    def _():
        y = jnp.dot(x, wf_ref[...], preferred_element_type=jnp.float32) + bf_ref[...]
        mrows = jnp.concatenate([maskq_ref[i] for i in range(btile)], axis=0)  # (R,1)
        o_ref[...] = (y * mrows).astype(o_ref.dtype)       # lane-dense (R, Fpad) store


# ---------------------------------------------------------------------------
# Wrapper
# ---------------------------------------------------------------------------
def _choose_btile(bs, T, target_rows=256):
    """Batch elements per grid step: keep >=8 sublane rows per tile (unless the
    tile spans the full batch) and try to reach `target_rows` MXU rows."""
    cands = [d for d in range(1, bs + 1)
             if bs % d == 0 and (d == bs or (d * T) % 8 == 0)]
    for d in cands:
        if d * T >= target_rows:
            return d
    return cands[-1]


def _prepare_params(params, z):
    """Pre-transpose weights to (in,out), fold 1/sqrt(Dh) into Wq/bq, stack over
    layers, and hoist the length-1 cross-attention out of the kernel."""
    L = len(params["layers"])
    D = z.shape[1]
    num_heads = params["num_heads"]
    scale = 1.0 / math.sqrt(D // num_heads)

    wqkv, bqkv, wo, bo = [], [], [], []
    ln = {k: [] for k in ("ln1_g", "ln1_b", "ln2_g", "ln2_b", "ln3_g", "ln3_b")}
    w1, b1, w2, b2, cross = [], [], [], [], []
    for lp in params["layers"]:
        w_in, b_in = lp["w_self_in"], lp["b_self_in"]
        wq = w_in[:D] * scale
        bq = b_in[:D] * scale
        wqkv.append(jnp.concatenate([wq, w_in[D:]], axis=0).T)        # (D, 3D)
        bqkv.append(jnp.concatenate([bq, b_in[D:]]).reshape(1, 3 * D))
        wo.append(lp["w_self_out"].T)                                  # (D, D)
        bo.append(lp["b_self_out"].reshape(1, D))
        for kname in ln:
            ln[kname].append(lp[kname].reshape(1, D))
        w1.append(lp["w1"].T)                                          # (D, FF)
        b1.append(lp["b1"].reshape(1, -1))
        w2.append(lp["w2"].T)                                          # (FF, D)
        b2.append(lp["b2"].reshape(1, D))
        # Cross-attention collapse (softmax over a length-1 memory is exactly 1):
        wvm = lp["w_cross_in"][2 * D:]
        bvm = lp["b_cross_in"][2 * D:]
        c = (z @ wvm.T + bvm) @ lp["w_cross_out"].T + lp["b_cross_out"]  # (bs, D)
        cross.append(c)

    stack = lambda xs: jnp.stack(xs, axis=0)
    out = dict(wqkv=stack(wqkv), bqkv=stack(bqkv), wo=stack(wo), bo=stack(bo),
               w1=stack(w1), b1=stack(b1), w2=stack(w2), b2=stack(b2),
               cross=stack(cross)[:, :, None, :])                       # (L, bs, 1, D)
    out.update({k: stack(v) for k, v in ln.items()})
    del L
    return out


@functools.partial(jax.jit, static_argnames=("njoints", "nfeats", "num_heads"))
def decoder_transformer_forward(z, mask, lengths, params, *,
                                njoints, nfeats, num_heads):
    """z: (bs, D); mask: (bs, T) bool; lengths unused in the default path."""
    del lengths  # only used by the 'time_encoding' ablation (not implemented)
    bs, T = mask.shape
    D = z.shape[1]
    L = len(params["layers"])
    FF = params["layers"][0]["w1"].shape[0]
    F = njoints * nfeats
    Fpad = ((F + LANE - 1) // LANE) * LANE                 # lane-dense output width

    btile = _choose_btile(bs, T)
    nbt = bs // btile
    R = btile * T

    # timequeries = PositionalEncoding(zeros) == pe rows broadcast over batch.
    pe = _positional_encoding(T, D)
    x_rows = jnp.broadcast_to(pe[None], (bs, T, D)).reshape(bs * T, D)

    kbias = jnp.where(mask, 0.0, NEG_INF).astype(jnp.float32).reshape(bs, 1, T)
    maskq = mask.astype(jnp.float32).reshape(bs, T, 1)

    sp = _prepare_params(dict(params, num_heads=num_heads), z.astype(jnp.float32))

    # Zero-padded final projection (lane-dense store; wrapper slices back to F).
    wf = jnp.zeros((D, Fpad), jnp.float32).at[:, :F].set(params["wf"].T)
    bf = jnp.zeros((1, Fpad), jnp.float32).at[:, :F].set(params["bf"][None])

    flops = (L * bs * (2 * T * D * 3 * D + 4 * num_heads * T * T * (D // num_heads)
                       + 2 * T * D * D + 4 * T * D * FF)
             + 2 * bs * T * D * Fpad)
    trans = L * bs * (num_heads * T * T + T * FF)
    wbytes = 4 * L * (4 * D * D + 2 * D * FF + 10 * D + FF + bs * D) \
        + 4 * (D * Fpad + Fpad)
    abytes = 4 * bs * T * (D + Fpad + 2)
    cost = pl.CostEstimate(flops=int(flops), transcendentals=int(trans),
                           bytes_accessed=int(wbytes + abytes))

    def lspec(shape):
        nd = len(shape)
        return pl.BlockSpec((1,) + shape, lambda b, l, _nd=nd: (l,) + (0,) * _nd)

    def rspec(shape):
        nd = len(shape)
        return pl.BlockSpec(shape, lambda b, l, _nd=nd: (0,) * _nd)

    kernel = functools.partial(_fused_decoder_kernel, num_heads=num_heads,
                               btile=btile, t=T, d=D)

    y = pl.pallas_call(
        kernel,
        out_shape=jax.ShapeDtypeStruct((bs * T, Fpad), jnp.float32),
        grid_spec=pltpu.PrefetchScalarGridSpec(
            num_scalar_prefetch=0,
            grid=(nbt, L),
            in_specs=[
                pl.BlockSpec((R, D), lambda b, l: (b, 0)),              # PE queries
                pl.BlockSpec((btile, 1, T), lambda b, l: (b, 0, 0)),    # key-pad bias
                pl.BlockSpec((btile, T, 1), lambda b, l: (b, 0, 0)),    # query mask
                pl.BlockSpec((1, btile, 1, D), lambda b, l: (l, b, 0, 0)),  # cross
                lspec((D, 3 * D)), lspec((1, 3 * D)),                   # Wqkv, bqkv
                lspec((D, D)), lspec((1, D)),                           # Wo, bo
                lspec((1, D)), lspec((1, D)),                           # ln1 g/b
                lspec((1, D)), lspec((1, D)),                           # ln2 g/b
                lspec((1, D)), lspec((1, D)),                           # ln3 g/b
                lspec((D, FF)), lspec((1, FF)),                         # linear1
                lspec((FF, D)), lspec((1, D)),                          # linear2
                rspec((D, Fpad)), rspec((1, Fpad)),                     # final layer
            ],
            out_specs=pl.BlockSpec((R, Fpad), lambda b, l: (b, 0)),
            scratch_shapes=[pltpu.VMEM((R, D), jnp.float32)],
        ),
        compiler_params=pltpu.CompilerParams(
            dimension_semantics=("parallel", "arbitrary")),
        cost_estimate=cost,
    )(x_rows, kbias, maskq, sp["cross"],
      sp["wqkv"], sp["bqkv"], sp["wo"], sp["bo"],
      sp["ln1_g"], sp["ln1_b"], sp["ln2_g"], sp["ln2_b"],
      sp["ln3_g"], sp["ln3_b"],
      sp["w1"], sp["b1"], sp["w2"], sp["b2"],
      wf, bf)

    # reshape(T, bs, nj, nf); permute(1,2,3,0)  ==  (bs, nj, nf, T) in this layout.
    y = y[:, :F].reshape(bs, T, njoints, nfeats)
    return y.transpose(0, 2, 3, 1)


# ---------------------------------------------------------------------------
# Pure-JAX reference (full general multi-head attention, incl. cross-attn Q/K)
# ---------------------------------------------------------------------------
def _reference_forward(z, mask, params, njoints, nfeats, num_heads):
    bs, T = mask.shape
    D = z.shape[1]
    Dh = D // num_heads
    pe = _positional_encoding(T, D)
    x = jnp.broadcast_to(pe[None], (bs, T, D)).astype(jnp.float32)
    neg = jnp.where(mask, 0.0, NEG_INF).astype(jnp.float32)[:, None, None, :]
    mem = z[:, None, :].astype(jnp.float32)                      # (bs, 1, D)

    def heads(a):
        return a.reshape(a.shape[0], a.shape[1], num_heads, Dh).transpose(0, 2, 1, 3)

    def merge(a):
        return a.transpose(0, 2, 1, 3).reshape(a.shape[0], a.shape[2], D)

    def mha(q_in, kv_in, w_in, b_in, w_out, b_out, bias):
        q = q_in @ w_in[:D].T + b_in[:D]
        k = kv_in @ w_in[D:2 * D].T + b_in[D:2 * D]
        v = kv_in @ w_in[2 * D:].T + b_in[2 * D:]
        s = jnp.einsum("bhqd,bhkd->bhqk", heads(q), heads(k)) / math.sqrt(Dh)
        if bias is not None:
            s = s + bias
        p = jax.nn.softmax(s, axis=-1)
        o = merge(jnp.einsum("bhqk,bhkd->bhqd", p, heads(v)))
        return o @ w_out.T + b_out

    for lp in params["layers"]:
        sa = mha(x, x, lp["w_self_in"], lp["b_self_in"],
                 lp["w_self_out"], lp["b_self_out"], neg)
        x = _layer_norm(x + sa, lp["ln1_g"], lp["ln1_b"])
        ca = mha(x, mem, lp["w_cross_in"], lp["b_cross_in"],
                 lp["w_cross_out"], lp["b_cross_out"], None)
        x = _layer_norm(x + ca, lp["ln2_g"], lp["ln2_b"])
        h = _gelu_tanh(x @ lp["w1"].T + lp["b1"])
        x = _layer_norm(x + (h @ lp["w2"].T + lp["b2"]), lp["ln3_g"], lp["ln3_b"])

    y = x @ params["wf"].T + params["bf"]
    y = y * mask.astype(jnp.float32)[..., None]
    return y.reshape(bs, T, njoints, nfeats).transpose(0, 2, 3, 1)


# ---------------------------------------------------------------------------
if __name__ == "__main__":
    # Small shapes consistent with the module defaults (scaled down):
    bs, nframes = 2, 8
    njoints, nfeats = 8, 4            # input_feats = 32
    latent_dim, ff_size = 128, 256
    num_layers, num_heads = 2, 4

    key = jax.random.PRNGKey(0)
    keys = iter(jax.random.split(key, 64))

    def nrm(shape, scale=0.05):
        return scale * jax.random.normal(next(keys), shape, jnp.float32)

    D, FF = latent_dim, ff_size
    layers = []
    for _ in range(num_layers):
        layers.append(dict(
            w_self_in=nrm((3 * D, D)), b_self_in=nrm((3 * D,)),
            w_self_out=nrm((D, D)), b_self_out=nrm((D,)),
            w_cross_in=nrm((3 * D, D)), b_cross_in=nrm((3 * D,)),
            w_cross_out=nrm((D, D)), b_cross_out=nrm((D,)),
            ln1_g=1.0 + nrm((D,)), ln1_b=nrm((D,)),
            ln2_g=1.0 + nrm((D,)), ln2_b=nrm((D,)),
            ln3_g=1.0 + nrm((D,)), ln3_b=nrm((D,)),
            w1=nrm((FF, D)), b1=nrm((FF,)),
            w2=nrm((D, FF)), b2=nrm((D,)),
        ))
    params = dict(layers=tuple(layers),
                  wf=nrm((njoints * nfeats, D)),
                  bf=nrm((njoints * nfeats,)))

    z = jax.random.normal(next(keys), (bs, latent_dim), jnp.float32)
    lengths = jnp.array([nframes, 5], jnp.int32)
    mask = jnp.arange(nframes)[None, :] < lengths[:, None]        # (bs, nframes) bool

    out = decoder_transformer_forward(z, mask, lengths, params,
                                      njoints=njoints, nfeats=nfeats,
                                      num_heads=num_heads)
    out = jax.block_until_ready(out)

    ref = _reference_forward(z, mask, params, njoints, nfeats, num_heads)
    assert out.shape == (bs, njoints, nfeats, nframes), out.shape
    assert jnp.all(out[1, :, :, 5:] == 0.0), "padded frames not zeroed"
    err = float(jnp.max(jnp.abs(out - ref)))
    # Tolerance accounts for the EUP approximate reciprocal in the softmax.
    assert jnp.allclose(out, ref, rtol=2e-3, atol=2e-3), f"mismatch vs reference: {err}"

    print("KERNEL_OK")
</pallas_src>

<mosaic_0001>
module attributes {stable_mosaic.version = 11 : i64} {
  func.func @_fused_decoder_kernel(%arg0: i32, %arg1: i32, %arg2: memref<16x128xf32, #tpu.memory_space<vmem>>, %arg3: memref<2x1x8xf32, #tpu.memory_space<vmem>>, %arg4: memref<2x8x1xf32, #tpu.memory_space<vmem>>, %arg5: memref<1x2x1x128xf32, #tpu.memory_space<vmem>>, %arg6: memref<1x128x384xf32, #tpu.memory_space<vmem>>, %arg7: memref<1x1x384xf32, #tpu.memory_space<vmem>>, %arg8: memref<1x128x128xf32, #tpu.memory_space<vmem>>, %arg9: memref<1x1x128xf32, #tpu.memory_space<vmem>>, %arg10: memref<1x1x128xf32, #tpu.memory_space<vmem>>, %arg11: memref<1x1x128xf32, #tpu.memory_space<vmem>>, %arg12: memref<1x1x128xf32, #tpu.memory_space<vmem>>, %arg13: memref<1x1x128xf32, #tpu.memory_space<vmem>>, %arg14: memref<1x1x128xf32, #tpu.memory_space<vmem>>, %arg15: memref<1x1x128xf32, #tpu.memory_space<vmem>>, %arg16: memref<1x128x256xf32, #tpu.memory_space<vmem>>, %arg17: memref<1x1x256xf32, #tpu.memory_space<vmem>>, %arg18: memref<1x256x128xf32, #tpu.memory_space<vmem>>, %arg19: memref<1x1x128xf32, #tpu.memory_space<vmem>>, %arg20: memref<128x128xf32, #tpu.memory_space<vmem>>, %arg21: memref<1x128xf32, #tpu.memory_space<vmem>>, %arg22: memref<16x128xf32, #tpu.memory_space<vmem>>, %arg23: memref<16x128xf32, #tpu.memory_space<vmem>>) attributes {dimension_semantics = [#tpu.dimension_semantics<parallel>, #tpu.dimension_semantics<arbitrary>], iteration_bounds = array<i64: 1, 2>, scalar_prefetch = 0 : i64, scratch_operands = 1 : i64, tpu.core_type = #tpu.core_type<tc>, window_params = [{transform_indices = @transform_0, window_bounds = array<i64: 16, 128>}, {transform_indices = @transform_1, window_bounds = array<i64: 2, 1, 8>}, {transform_indices = @transform_2, window_bounds = array<i64: 2, 8, 1>}, {transform_indices = @transform_3, window_bounds = array<i64: 1, 2, 1, 128>}, {transform_indices = @transform_4, window_bounds = array<i64: 1, 128, 384>}, {transform_indices = @transform_5, window_bounds = array<i64: 1, 1, 384>}, {transform_indices = @transform_6, window_bounds = array<i64: 1, 128, 128>}, {transform_indices = @transform_7, window_bounds = array<i64: 1, 1, 128>}, {transform_indices = @transform_8, window_bounds = array<i64: 1, 1, 128>}, {transform_indices = @transform_9, window_bounds = array<i64: 1, 1, 128>}, {transform_indices = @transform_10, window_bounds = array<i64: 1, 1, 128>}, {transform_indices = @transform_11, window_bounds = array<i64: 1, 1, 128>}, {transform_indices = @transform_12, window_bounds = array<i64: 1, 1, 128>}, {transform_indices = @transform_13, window_bounds = array<i64: 1, 1, 128>}, {transform_indices = @transform_14, window_bounds = array<i64: 1, 128, 256>}, {transform_indices = @transform_15, window_bounds = array<i64: 1, 1, 256>}, {transform_indices = @transform_16, window_bounds = array<i64: 1, 256, 128>}, {transform_indices = @transform_17, window_bounds = array<i64: 1, 1, 128>}, {pipeline_mode = #tpu.pipeline_mode<synchronous>, transform_indices = @transform_18, window_bounds = array<i64: 128, 128>}, {pipeline_mode = #tpu.pipeline_mode<synchronous>, transform_indices = @transform_19, window_bounds = array<i64: 1, 128>}, {transform_indices = @transform_20, window_bounds = array<i64: 16, 128>}]} {
    %c0_i32 = arith.constant 0 : i32
    %0 = arith.cmpi eq, %arg1, %c0_i32 : i32
    %1 = arith.extui %0 : i1 to i32
    %c0_i32_0 = arith.constant 0 : i32
    %2 = arith.cmpi ne, %1, %c0_i32_0 : i32
    scf.if %2 {
      %c0_114 = arith.constant 0 : index
      %c0_115 = arith.constant 0 : index
      %285 = vector.load %arg2[%c0_114, %c0_115] : memref<16x128xf32, #tpu.memory_space<vmem>>, vector<16x128xf32>
      %c0_116 = arith.constant 0 : index
      %c0_117 = arith.constant 0 : index
      %286 = vector.load %arg23[%c0_116, %c0_117] : memref<16x128xf32, #tpu.memory_space<vmem>>, vector<16x128xf32>
      tpu.vector_store %arg23[%c0_116, %c0_117], %285 {strides = array<i32>} : memref<16x128xf32, #tpu.memory_space<vmem>>, vector<16x128xf32>,
    } else {
    }
    %c0 = arith.constant 0 : index
    %c0_1 = arith.constant 0 : index
    %3 = vector.load %arg23[%c0, %c0_1] : memref<16x128xf32, #tpu.memory_space<vmem>>, vector<16x128xf32>
    %c0_2 = arith.constant 0 : index
    %c0_3 = arith.constant 0 : index
    %c0_4 = arith.constant 0 : index
    %4 = vector.load %arg6[%c0_2, %c0_3, %c0_4] : memref<1x128x384xf32, #tpu.memory_space<vmem>>, vector<1x128x384xf32>
    %5 = vector.shape_cast %4 : vector<1x128x384xf32> to vector<128x384xf32>
    %cst = arith.constant dense<0.000000e+00> : vector<16x384xf32>
    %6 = tpu.matmul %3, %5, %cst {dimension_numbers = #tpu.dot_dimension_numbers<[1], [0], [0], [1], [0, 0, 1, 1], [], []>} : vector<16x128xf32>, vector<128x384xf32>, vector<16x384xf32> -> vector<16x384xf32>
    %c0_5 = arith.constant 0 : index
    %c0_6 = arith.constant 0 : index
    %c0_7 = arith.constant 0 : index
    %7 = vector.load %arg7[%c0_5, %c0_6, %c0_7] : memref<1x1x384xf32, #tpu.memory_space<vmem>>, vector<1x1x384xf32>
    %8 = vector.shape_cast %7 : vector<1x1x384xf32> to vector<1x384xf32>
    %9 = vector.broadcast %8 : vector<1x384xf32> to vector<16x384xf32>
    %10 = arith.addf %6, %9 : vector<16x384xf32>
    %11 = vector.extract_strided_slice %10 {offsets = [0, 0], sizes = [16, 128], strides = [1, 1]} : vector<16x384xf32> to vector<16x128xf32>
    %12 = vector.extract_strided_slice %10 {offsets = [0, 128], sizes = [16, 128], strides = [1, 1]} : vector<16x384xf32> to vector<16x128xf32>
    %13 = vector.extract_strided_slice %10 {offsets = [0, 256], sizes = [16, 128], strides = [1, 1]} : vector<16x384xf32> to vector<16x128xf32>
    %14 = vector.extract_strided_slice %11 {offsets = [0, 0], sizes = [8, 128], strides = [1, 1]} : vector<16x128xf32> to vector<8x128xf32>
    %15 = vector.extract_strided_slice %12 {offsets = [0, 0], sizes = [8, 128], strides = [1, 1]} : vector<16x128xf32> to vector<8x128xf32>
    %16 = vector.extract_strided_slice %13 {offsets = [0, 0], sizes = [8, 128], strides = [1, 1]} : vector<16x128xf32> to vector<8x128xf32>
    %c0_8 = arith.constant 0 : index
    %c0_9 = arith.constant 0 : index
    %c0_10 = arith.constant 0 : index
    %17 = vector.load %arg3[%c0_8, %c0_9, %c0_10] : memref<2x1x8xf32, #tpu.memory_space<vmem>>, vector<1x1x8xf32>
    %18 = vector.shape_cast %17 : vector<1x1x8xf32> to vector<1x8xf32>
    %19 = vector.extract_strided_slice %14 {offsets = [0, 0], sizes = [8, 32], strides = [1, 1]} : vector<8x128xf32> to vector<8x32xf32>
    %20 = vector.extract_strided_slice %15 {offsets = [0, 0], sizes = [8, 32], strides = [1, 1]} : vector<8x128xf32> to vector<8x32xf32>
    %cst_11 = arith.constant dense<0.000000e+00> : vector<8x8xf32>
    %21 = tpu.matmul %19, %20, %cst_11 {dimension_numbers = #tpu.dot_dimension_numbers<[1], [1], [0], [0], [0, 0, 1, 0], [], []>} : vector<8x32xf32>, vector<8x32xf32>, vector<8x8xf32> -> vector<8x8xf32>
    %22 = vector.broadcast %18 : vector<1x8xf32> to vector<8x8xf32>
    %23 = arith.addf %21, %22 : vector<8x8xf32>
    %cst_12 = arith.constant dense<0xFF800000> : vector<8xf32>
    %24 = vector.multi_reduction <maximumf>, %23, %cst_12 [1] : vector<8x8xf32> to vector<8xf32>
    %25 = vector.shape_cast %24 : vector<8xf32> to vector<8x1xf32>
    %26 = vector.broadcast %25 : vector<8x1xf32> to vector<8x8xf32>
    %27 = arith.subf %23, %26 : vector<8x8xf32>
    %28 = math.exp %27 : vector<8x8xf32>
    %cst_13 = arith.constant dense<0.000000e+00> : vector<8xf32>
    %29 = vector.multi_reduction <add>, %28, %cst_13 [1] : vector<8x8xf32> to vector<8xf32>
    %30 = vector.shape_cast %29 : vector<8xf32> to vector<8x1xf32>
    %31 = tpu.reciprocal %30 {approx = true} : vector<8x1xf32> -> vector<8x1xf32>
    %32 = vector.broadcast %31 : vector<8x1xf32> to vector<8x8xf32>
    %33 = arith.mulf %28, %32 : vector<8x8xf32>
    %34 = vector.extract_strided_slice %16 {offsets = [0, 0], sizes = [8, 32], strides = [1, 1]} : vector<8x128xf32> to vector<8x32xf32>
    %cst_14 = arith.constant dense<0.000000e+00> : vector<8x32xf32>
    %35 = tpu.matmul %33, %34, %cst_14 {dimension_numbers = #tpu.dot_dimension_numbers<[1], [0], [0], [1], [0, 0, 1, 1], [], []>} : vector<8x8xf32>, vector<8x32xf32>, vector<8x32xf32> -> vector<8x32xf32>
    %36 = vector.extract_strided_slice %14 {offsets = [0, 32], sizes = [8, 32], strides = [1, 1]} : vector<8x128xf32> to vector<8x32xf32>
    %37 = vector.extract_strided_slice %15 {offsets = [0, 32], sizes = [8, 32], strides = [1, 1]} : vector<8x128xf32> to vector<8x32xf32>
    %cst_15 = arith.constant dense<0.000000e+00> : vector<8x8xf32>
    %38 = tpu.matmul %36, %37, %cst_15 {dimension_numbers = #tpu.dot_dimension_numbers<[1], [1], [0], [0], [0, 0, 1, 0], [], []>} : vector<8x32xf32>, vector<8x32xf32>, vector<8x8xf32> -> vector<8x8xf32>
    %39 = vector.broadcast %18 : vector<1x8xf32> to vector<8x8xf32>
    %40 = arith.addf %38, %39 : vector<8x8xf32>
    %cst_16 = arith.constant dense<0xFF800000> : vector<8xf32>
    %41 = vector.multi_reduction <maximumf>, %40, %cst_16 [1] : vector<8x8xf32> to vector<8xf32>
    %42 = vector.shape_cast %41 : vector<8xf32> to vector<8x1xf32>
    %43 = vector.broadcast %42 : vector<8x1xf32> to vector<8x8xf32>
    %44 = arith.subf %40, %43 : vector<8x8xf32>
    %45 = math.exp %44 : vector<8x8xf32>
    %cst_17 = arith.constant dense<0.000000e+00> : vector<8xf32>
    %46 = vector.multi_reduction <add>, %45, %cst_17 [1] : vector<8x8xf32> to vector<8xf32>
    %47 = vector.shape_cast %46 : vector<8xf32> to vector<8x1xf32>
    %48 = tpu.reciprocal %47 {approx = true} : vector<8x1xf32> -> vector<8x1xf32>
    %49 = vector.broadcast %48 : vector<8x1xf32> to vector<8x8xf32>
    %50 = arith.mulf %45, %49 : vector<8x8xf32>
    %51 = vector.extract_strided_slice %16 {offsets = [0, 32], sizes = [8, 32], strides = [1, 1]} : vector<8x128xf32> to vector<8x32xf32>
    %cst_18 = arith.constant dense<0.000000e+00> : vector<8x32xf32>
    %52 = tpu.matmul %50, %51, %cst_18 {dimension_numbers = #tpu.dot_dimension_numbers<[1], [0], [0], [1], [0, 0, 1, 1], [], []>} : vector<8x8xf32>, vector<8x32xf32>, vector<8x32xf32> -> vector<8x32xf32>
    %53 = vector.extract_strided_slice %14 {offsets = [0, 64], sizes = [8, 32], strides = [1, 1]} : vector<8x128xf32> to vector<8x32xf32>
    %54 = vector.extract_strided_slice %15 {offsets = [0, 64], sizes = [8, 32], strides = [1, 1]} : vector<8x128xf32> to vector<8x32xf32>
    %cst_19 = arith.constant dense<0.000000e+00> : vector<8x8xf32>
    %55 = tpu.matmul %53, %54, %cst_19 {dimension_numbers = #tpu.dot_dimension_numbers<[1], [1], [0], [0], [0, 0, 1, 0], [], []>} : vector<8x32xf32>, vector<8x32xf32>, vector<8x8xf32> -> vector<8x8xf32>
    %56 = vector.broadcast %18 : vector<1x8xf32> to vector<8x8xf32>
    %57 = arith.addf %55, %56 : vector<8x8xf32>
    %cst_20 = arith.constant dense<0xFF800000> : vector<8xf32>
    %58 = vector.multi_reduction <maximumf>, %57, %cst_20 [1] : vector<8x8xf32> to vector<8xf32>
    %59 = vector.shape_cast %58 : vector<8xf32> to vector<8x1xf32>
    %60 = vector.broadcast %59 : vector<8x1xf32> to vector<8x8xf32>
    %61 = arith.subf %57, %60 : vector<8x8xf32>
    %62 = math.exp %61 : vector<8x8xf32>
    %cst_21 = arith.constant dense<0.000000e+00> : vector<8xf32>
    %63 = vector.multi_reduction <add>, %62, %cst_21 [1] : vector<8x8xf32> to vector<8xf32>
    %64 = vector.shape_cast %63 : vector<8xf32> to vector<8x1xf32>
    %65 = tpu.reciprocal %64 {approx = true} : vector<8x1xf32> -> vector<8x1xf32>
    %66 = vector.broadcast %65 : vector<8x1xf32> to vector<8x8xf32>
    %67 = arith.mulf %62, %66 : vector<8x8xf32>
    %68 = vector.extract_strided_slice %16 {offsets = [0, 64], sizes = [8, 32], strides = [1, 1]} : vector<8x128xf32> to vector<8x32xf32>
    %cst_22 = arith.constant dense<0.000000e+00> : vector<8x32xf32>
    %69 = tpu.matmul %67, %68, %cst_22 {dimension_numbers = #tpu.dot_dimension_numbers<[1], [0], [0], [1], [0, 0, 1, 1], [], []>} : vector<8x8xf32>, vector<8x32xf32>, vector<8x32xf32> -> vector<8x32xf32>
    %70 = vector.extract_strided_slice %14 {offsets = [0, 96], sizes = [8, 32], strides = [1, 1]} : vector<8x128xf32> to vector<8x32xf32>
    %71 = vector.extract_strided_slice %15 {offsets = [0, 96], sizes = [8, 32], strides = [1, 1]} : vector<8x128xf32> to vector<8x32xf32>
    %cst_23 = arith.constant dense<0.000000e+00> : vector<8x8xf32>
    %72 = tpu.matmul %70, %71, %cst_23 {dimension_numbers = #tpu.dot_dimension_numbers<[1], [1], [0], [0], [0, 0, 1, 0], [], []>} : vector<8x32xf32>, vector<8x32xf32>, vector<8x8xf32> -> vector<8x8xf32>
    %73 = vector.broadcast %18 : vector<1x8xf32> to vector<8x8xf32>
    %74 = arith.addf %72, %73 : vector<8x8xf32>
    %cst_24 = arith.constant dense<0xFF800000> : vector<8xf32>
    %75 = vector.multi_reduction <maximumf>, %74, %cst_24 [1] : vector<8x8xf32> to vector<8xf32>
    %76 = vector.shape_cast %75 : vector<8xf32> to vector<8x1xf32>
    %77 = vector.broadcast %76 : vector<8x1xf32> to vector<8x8xf32>
    %78 = arith.subf %74, %77 : vector<8x8xf32>
    %79 = math.exp %78 : vector<8x8xf32>
    %cst_25 = arith.constant dense<0.000000e+00> : vector<8xf32>
    %80 = vector.multi_reduction <add>, %79, %cst_25 [1] : vector<8x8xf32> to vector<8xf32>
    %81 = vector.shape_cast %80 : vector<8xf32> to vector<8x1xf32>
    %82 = tpu.reciprocal %81 {approx = true} : vector<8x1xf32> -> vector<8x1xf32>
    %83 = vector.broadcast %82 : vector<8x1xf32> to vector<8x8xf32>
    %84 = arith.mulf %79, %83 : vector<8x8xf32>
    %85 = vector.extract_strided_slice %16 {offsets = [0, 96], sizes = [8, 32], strides = [1, 1]} : vector<8x128xf32> to vector<8x32xf32>
    %cst_26 = arith.constant dense<0.000000e+00> : vector<8x32xf32>
    %86 = tpu.matmul %84, %85, %cst_26 {dimension_numbers = #tpu.dot_dimension_numbers<[1], [0], [0], [1], [0, 0, 1, 1], [], []>} : vector<8x8xf32>, vector<8x32xf32>, vector<8x32xf32> -> vector<8x32xf32>
    %87 = tpu.concatenate %35, %52, %69, %86 in 1 : vector<8x32xf32>, vector<8x32xf32>, vector<8x32xf32>, vector<8x32xf32> -> vector<8x128xf32>
    %88 = vector.extract_strided_slice %11 {offsets = [8, 0], sizes = [8, 128], strides = [1, 1]} : vector<16x128xf32> to vector<8x128xf32>
    %89 = vector.extract_strided_slice %12 {offsets = [8, 0], sizes = [8, 128], strides = [1, 1]} : vector<16x128xf32> to vector<8x128xf32>
    %90 = vector.extract_strided_slice %13 {offsets = [8, 0], sizes = [8, 128], strides = [1, 1]} : vector<16x128xf32> to vector<8x128xf32>
    %c1 = arith.constant 1 : index
    %c0_27 = arith.constant 0 : index
    %c0_28 = arith.constant 0 : index
    %91 = vector.load %arg3[%c1, %c0_27, %c0_28] : memref<2x1x8xf32, #tpu.memory_space<vmem>>, vector<1x1x8xf32>
    %92 = vector.shape_cast %91 : vector<1x1x8xf32> to vector<1x8xf32>
    %93 = vector.extract_strided_slice %88 {offsets = [0, 0], sizes = [8, 32], strides = [1, 1]} : vector<8x128xf32> to vector<8x32xf32>
    %94 = vector.extract_strided_slice %89 {offsets = [0, 0], sizes = [8, 32], strides = [1, 1]} : vector<8x128xf32> to vector<8x32xf32>
    %cst_29 = arith.constant dense<0.000000e+00> : vector<8x8xf32>
    %95 = tpu.matmul %93, %94, %cst_29 {dimension_numbers = #tpu.dot_dimension_numbers<[1], [1], [0], [0], [0, 0, 1, 0], [], []>} : vector<8x32xf32>, vector<8x32xf32>, vector<8x8xf32> -> vector<8x8xf32>
    %96 = vector.broadcast %92 : vector<1x8xf32> to vector<8x8xf32>
    %97 = arith.addf %95, %96 : vector<8x8xf32>
    %cst_30 = arith.constant dense<0xFF800000> : vector<8xf32>
    %98 = vector.multi_reduction <maximumf>, %97, %cst_30 [1] : vector<8x8xf32> to vector<8xf32>
    %99 = vector.shape_cast %98 : vector<8xf32> to vector<8x1xf32>
    %100 = vector.broadcast %99 : vector<8x1xf32> to vector<8x8xf32>
    %101 = arith.subf %97, %100 : vector<8x8xf32>
    %102 = math.exp %101 : vector<8x8xf32>
    %cst_31 = arith.constant dense<0.000000e+00> : vector<8xf32>
    %103 = vector.multi_reduction <add>, %102, %cst_31 [1] : vector<8x8xf32> to vector<8xf32>
    %104 = vector.shape_cast %103 : vector<8xf32> to vector<8x1xf32>
    %105 = tpu.reciprocal %104 {approx = true} : vector<8x1xf32> -> vector<8x1xf32>
    %106 = vector.broadcast %105 : vector<8x1xf32> to vector<8x8xf32>
    %107 = arith.mulf %102, %106 : vector<8x8xf32>
    %108 = vector.extract_strided_slice %90 {offsets = [0, 0], sizes = [8, 32], strides = [1, 1]} : vector<8x128xf32> to vector<8x32xf32>
    %cst_32 = arith.constant dense<0.000000e+00> : vector<8x32xf32>
    %109 = tpu.matmul %107, %108, %cst_32 {dimension_numbers = #tpu.dot_dimension_numbers<[1], [0], [0], [1], [0, 0, 1, 1], [], []>} : vector<8x8xf32>, vector<8x32xf32>, vector<8x32xf32> -> vector<8x32xf32>
    %110 = vector.extract_strided_slice %88 {offsets = [0, 32], sizes = [8, 32], strides = [1, 1]} : vector<8x128xf32> to vector<8x32xf32>
    %111 = vector.extract_strided_slice %89 {offsets = [0, 32], sizes = [8, 32], strides = [1, 1]} : vector<8x128xf32> to vector<8x32xf32>
    %cst_33 = arith.constant dense<0.000000e+00> : vector<8x8xf32>
    %112 = tpu.matmul %110, %111, %cst_33 {dimension_numbers = #tpu.dot_dimension_numbers<[1], [1], [0], [0], [0, 0, 1, 0], [], []>} : vector<8x32xf32>, vector<8x32xf32>, vector<8x8xf32> -> vector<8x8xf32>
    %113 = vector.broadcast %92 : vector<1x8xf32> to vector<8x8xf32>
    %114 = arith.addf %112, %113 : vector<8x8xf32>
    %cst_34 = arith.constant dense<0xFF800000> : vector<8xf32>
    %115 = vector.multi_reduction <maximumf>, %114, %cst_34 [1] : vector<8x8xf32> to vector<8xf32>
    %116 = vector.shape_cast %115 : vector<8xf32> to vector<8x1xf32>
    %117 = vector.broadcast %116 : vector<8x1xf32> to vector<8x8xf32>
    %118 = arith.subf %114, %117 : vector<8x8xf32>
    %119 = math.exp %118 : vector<8x8xf32>
    %cst_35 = arith.constant dense<0.000000e+00> : vector<8xf32>
    %120 = vector.multi_reduction <add>, %119, %cst_35 [1] : vector<8x8xf32> to vector<8xf32>
    %121 = vector.shape_cast %120 : vector<8xf32> to vector<8x1xf32>
    %122 = tpu.reciprocal %121 {approx = true} : vector<8x1xf32> -> vector<8x1xf32>
    %123 = vector.broadcast %122 : vector<8x1xf32> to vector<8x8xf32>
    %124 = arith.mulf %119, %123 : vector<8x8xf32>
    %125 = vector.extract_strided_slice %90 {offsets = [0, 32], sizes = [8, 32], strides = [1, 1]} : vector<8x128xf32> to vector<8x32xf32>
    %cst_36 = arith.constant dense<0.000000e+00> : vector<8x32xf32>
    %126 = tpu.matmul %124, %125, %cst_36 {dimension_numbers = #tpu.dot_dimension_numbers<[1], [0], [0], [1], [0, 0, 1, 1], [], []>} : vector<8x8xf32>, vector<8x32xf32>, vector<8x32xf32> -> vector<8x32xf32>
    %127 = vector.extract_strided_slice %88 {offsets = [0, 64], sizes = [8, 32], strides = [1, 1]} : vector<8x128xf32> to vector<8x32xf32>
    %128 = vector.extract_strided_slice %89 {offsets = [0, 64], sizes = [8, 32], strides = [1, 1]} : vector<8x128xf32> to vector<8x32xf32>
    %cst_37 = arith.constant dense<0.000000e+00> : vector<8x8xf32>
    %129 = tpu.matmul %127, %128, %cst_37 {dimension_numbers = #tpu.dot_dimension_numbers<[1], [1], [0], [0], [0, 0, 1, 0], [], []>} : vector<8x32xf32>, vector<8x32xf32>, vector<8x8xf32> -> vector<8x8xf32>
    %130 = vector.broadcast %92 : vector<1x8xf32> to vector<8x8xf32>
    %131 = arith.addf %129, %130 : vector<8x8xf32>
    %cst_38 = arith.constant dense<0xFF800000> : vector<8xf32>
    %132 = vector.multi_reduction <maximumf>, %131, %cst_38 [1] : vector<8x8xf32> to vector<8xf32>
    %133 = vector.shape_cast %132 : vector<8xf32> to vector<8x1xf32>
    %134 = vector.broadcast %133 : vector<8x1xf32> to vector<8x8xf32>
    %135 = arith.subf %131, %134 : vector<8x8xf32>
    %136 = math.exp %135 : vector<8x8xf32>
    %cst_39 = arith.constant dense<0.000000e+00> : vector<8xf32>
    %137 = vector.multi_reduction <add>, %136, %cst_39 [1] : vector<8x8xf32> to vector<8xf32>
    %138 = vector.shape_cast %137 : vector<8xf32> to vector<8x1xf32>
    %139 = tpu.reciprocal %138 {approx = true} : vector<8x1xf32> -> vector<8x1xf32>
    %140 = vector.broadcast %139 : vector<8x1xf32> to vector<8x8xf32>
    %141 = arith.mulf %136, %140 : vector<8x8xf32>
    %142 = vector.extract_strided_slice %90 {offsets = [0, 64], sizes = [8, 32], strides = [1, 1]} : vector<8x128xf32> to vector<8x32xf32>
    %cst_40 = arith.constant dense<0.000000e+00> : vector<8x32xf32>
    %143 = tpu.matmul %141, %142, %cst_40 {dimension_numbers = #tpu.dot_dimension_numbers<[1], [0], [0], [1], [0, 0, 1, 1], [], []>} : vector<8x8xf32>, vector<8x32xf32>, vector<8x32xf32> -> vector<8x32xf32>
    %144 = vector.extract_strided_slice %88 {offsets = [0, 96], sizes = [8, 32], strides = [1, 1]} : vector<8x128xf32> to vector<8x32xf32>
    %145 = vector.extract_strided_slice %89 {offsets = [0, 96], sizes = [8, 32], strides = [1, 1]} : vector<8x128xf32> to vector<8x32xf32>
    %cst_41 = arith.constant dense<0.000000e+00> : vector<8x8xf32>
    %146 = tpu.matmul %144, %145, %cst_41 {dimension_numbers = #tpu.dot_dimension_numbers<[1], [1], [0], [0], [0, 0, 1, 0], [], []>} : vector<8x32xf32>, vector<8x32xf32>, vector<8x8xf32> -> vector<8x8xf32>
    %147 = vector.broadcast %92 : vector<1x8xf32> to vector<8x8xf32>
    %148 = arith.addf %146, %147 : vector<8x8xf32>
    %cst_42 = arith.constant dense<0xFF800000> : vector<8xf32>
    %149 = vector.multi_reduction <maximumf>, %148, %cst_42 [1] : vector<8x8xf32> to vector<8xf32>
    %150 = vector.shape_cast %149 : vector<8xf32> to vector<8x1xf32>
    %151 = vector.broadcast %150 : vector<8x1xf32> to vector<8x8xf32>
    %152 = arith.subf %148, %151 : vector<8x8xf32>
    %153 = math.exp %152 : vector<8x8xf32>
    %cst_43 = arith.constant dense<0.000000e+00> : vector<8xf32>
    %154 = vector.multi_reduction <add>, %153, %cst_43 [1] : vector<8x8xf32> to vector<8xf32>
    %155 = vector.shape_cast %154 : vector<8xf32> to vector<8x1xf32>
    %156 = tpu.reciprocal %155 {approx = true} : vector<8x1xf32> -> vector<8x1xf32>
    %157 = vector.broadcast %156 : vector<8x1xf32> to vector<8x8xf32>
    %158 = arith.mulf %153, %157 : vector<8x8xf32>
    %159 = vector.extract_strided_slice %90 {offsets = [0, 96], sizes = [8, 32], strides = [1, 1]} : vector<8x128xf32> to vector<8x32xf32>
    %cst_44 = arith.constant dense<0.000000e+00> : vector<8x32xf32>
    %160 = tpu.matmul %158, %159, %cst_44 {dimension_numbers = #tpu.dot_dimension_numbers<[1], [0], [0], [1], [0, 0, 1, 1], [], []>} : vector<8x8xf32>, vector<8x32xf32>, vector<8x32xf32> -> vector<8x32xf32>
    %161 = tpu.concatenate %109, %126, %143, %160 in 1 : vector<8x32xf32>, vector<8x32xf32>, vector<8x32xf32>, vector<8x32xf32> -> vector<8x128xf32>
    %162 = tpu.concatenate %87, %161 in 0 : vector<8x128xf32>, vector<8x128xf32> -> vector<16x128xf32>
    %c0_45 = arith.constant 0 : index
    %c0_46 = arith.constant 0 : index
    %c0_47 = arith.constant 0 : index
    %163 = vector.load %arg8[%c0_45, %c0_46, %c0_47] : memref<1x128x128xf32, #tpu.memory_space<vmem>>, vector<1x128x128xf32>
    %164 = vector.shape_cast %163 : vector<1x128x128xf32> to vector<128x128xf32>
    %cst_48 = arith.constant dense<0.000000e+00> : vector<16x128xf32>
    %165 = tpu.matmul %162, %164, %cst_48 {dimension_numbers = #tpu.dot_dimension_numbers<[1], [0], [0], [1], [0, 0, 1, 1], [], []>} : vector<16x128xf32>, vector<128x128xf32>, vector<16x128xf32> -> vector<16x128xf32>
    %c0_49 = arith.constant 0 : index
    %c0_50 = arith.constant 0 : index
    %c0_51 = arith.constant 0 : index
    %166 = vector.load %arg9[%c0_49, %c0_50, %c0_51] : memref<1x1x128xf32, #tpu.memory_space<vmem>>, vector<1x1x128xf32>
    %167 = vector.shape_cast %166 : vector<1x1x128xf32> to vector<1x128xf32>
    %168 = vector.broadcast %167 : vector<1x128xf32> to vector<16x128xf32>
    %169 = arith.addf %165, %168 : vector<16x128xf32>
    %170 = arith.addf %3, %169 : vector<16x128xf32>
    %c0_52 = arith.constant 0 : index
    %c0_53 = arith.constant 0 : index
    %c0_54 = arith.constant 0 : index
    %171 = vector.load %arg10[%c0_52, %c0_53, %c0_54] : memref<1x1x128xf32, #tpu.memory_space<vmem>>, vector<1x1x128xf32>
    %172 = vector.shape_cast %171 : vector<1x1x128xf32> to vector<1x128xf32>
    %c0_55 = arith.constant 0 : index
    %c0_56 = arith.constant 0 : index
    %c0_57 = arith.constant 0 : index
    %173 = vector.load %arg11[%c0_55, %c0_56, %c0_57] : memref<1x1x128xf32, #tpu.memory_space<vmem>>, vector<1x1x128xf32>
    %174 = vector.shape_cast %173 : vector<1x1x128xf32> to vector<1x128xf32>
    %cst_58 = arith.constant dense<0.000000e+00> : vector<16xf32>
    %175 = vector.multi_reduction <add>, %170, %cst_58 [1] : vector<16x128xf32> to vector<16xf32>
    %176 = vector.shape_cast %175 : vector<16xf32> to vector<16x1xf32>
    %cst_59 = arith.constant 1.280000e+02 : f32
    %177 = vector.broadcast %cst_59 : f32 to vector<16x1xf32>
    %178 = arith.divf %176, %177 : vector<16x1xf32>
    %179 = vector.broadcast %178 : vector<16x1xf32> to vector<16x128xf32>
    %180 = arith.subf %170, %179 : vector<16x128xf32>
    %181 = arith.mulf %180, %180 : vector<16x128xf32>
    %cst_60 = arith.constant dense<0.000000e+00> : vector<16xf32>
    %182 = vector.multi_reduction <add>, %181, %cst_60 [1] : vector<16x128xf32> to vector<16xf32>
    %183 = vector.shape_cast %182 : vector<16xf32> to vector<16x1xf32>
    %cst_61 = arith.constant 1.280000e+02 : f32
    %184 = vector.broadcast %cst_61 : f32 to vector<16x1xf32>
    %185 = arith.divf %183, %184 : vector<16x1xf32>
    %cst_62 = arith.constant 9.99999974E-6 : f32
    %186 = vector.broadcast %cst_62 : f32 to vector<16x1xf32>
    %187 = arith.addf %185, %186 : vector<16x1xf32>
    %188 = math.rsqrt %187 : vector<16x1xf32>
    %189 = vector.broadcast %188 : vector<16x1xf32> to vector<16x128xf32>
    %190 = arith.mulf %180, %189 : vector<16x128xf32>
    %191 = vector.broadcast %172 : vector<1x128xf32> to vector<16x128xf32>
    %192 = arith.mulf %190, %191 : vector<16x128xf32>
    %193 = vector.broadcast %174 : vector<1x128xf32> to vector<16x128xf32>
    %194 = arith.addf %192, %193 : vector<16x128xf32>
    %c0_63 = arith.constant 0 : index
    %c0_64 = arith.constant 0 : index
    %c0_65 = arith.constant 0 : index
    %c0_66 = arith.constant 0 : index
    %195 = vector.load %arg5[%c0_63, %c0_64, %c0_65, %c0_66] : memref<1x2x1x128xf32, #tpu.memory_space<vmem>>, vector<1x1x1x128xf32>
    %196 = vector.shape_cast %195 : vector<1x1x1x128xf32> to vector<1x128xf32>
    %197 = vector.shape_cast %196 : vector<1x128xf32> to vector<1x128xf32>
    %198 = vector.broadcast %197 : vector<1x128xf32> to vector<8x128xf32>
    %c0_67 = arith.constant 0 : index
    %c1_68 = arith.constant 1 : index
    %c0_69 = arith.constant 0 : index
    %c0_70 = arith.constant 0 : index
    %199 = vector.load %arg5[%c0_67, %c1_68, %c0_69, %c0_70] : memref<1x2x1x128xf32, #tpu.memory_space<vmem>>, vector<1x1x1x128xf32>
    %200 = vector.shape_cast %199 : vector<1x1x1x128xf32> to vector<1x128xf32>
    %201 = vector.shape_cast %200 : vector<1x128xf32> to vector<1x128xf32>
    %202 = vector.broadcast %201 : vector<1x128xf32> to vector<8x128xf32>
    %203 = tpu.concatenate %198, %202 in 0 : vector<8x128xf32>, vector<8x128xf32> -> vector<16x128xf32>
    %204 = arith.addf %194, %203 : vector<16x128xf32>
    %c0_71 = arith.constant 0 : index
    %c0_72 = arith.constant 0 : index
    %c0_73 = arith.constant 0 : index
    %205 = vector.load %arg12[%c0_71, %c0_72, %c0_73] : memref<1x1x128xf32, #tpu.memory_space<vmem>>, vector<1x1x128xf32>
    %206 = vector.shape_cast %205 : vector<1x1x128xf32> to vector<1x128xf32>
    %c0_74 = arith.constant 0 : index
    %c0_75 = arith.constant 0 : index
    %c0_76 = arith.constant 0 : index
    %207 = vector.load %arg13[%c0_74, %c0_75, %c0_76] : memref<1x1x128xf32, #tpu.memory_space<vmem>>, vector<1x1x128xf32>
    %208 = vector.shape_cast %207 : vector<1x1x128xf32> to vector<1x128xf32>
    %cst_77 = arith.constant dense<0.000000e+00> : vector<16xf32>
    %209 = vector.multi_reduction <add>, %204, %cst_77 [1] : vector<16x128xf32> to vector<16xf32>
    %210 = vector.shape_cast %209 : vector<16xf32> to vector<16x1xf32>
    %cst_78 = arith.constant 1.280000e+02 : f32
    %211 = vector.broadcast %cst_78 : f32 to vector<16x1xf32>
    %212 = arith.divf %210, %211 : vector<16x1xf32>
    %213 = vector.broadcast %212 : vector<16x1xf32> to vector<16x128xf32>
    %214 = arith.subf %204, %213 : vector<16x128xf32>
    %215 = arith.mulf %214, %214 : vector<16x128xf32>
    %cst_79 = arith.constant dense<0.000000e+00> : vector<16xf32>
    %216 = vector.multi_reduction <add>, %215, %cst_79 [1] : vector<16x128xf32> to vector<16xf32>
    %217 = vector.shape_cast %216 : vector<16xf32> to vector<16x1xf32>
    %cst_80 = arith.constant 1.280000e+02 : f32
    %218 = vector.broadcast %cst_80 : f32 to vector<16x1xf32>
    %219 = arith.divf %217, %218 : vector<16x1xf32>
    %cst_81 = arith.constant 9.99999974E-6 : f32
    %220 = vector.broadcast %cst_81 : f32 to vector<16x1xf32>
    %221 = arith.addf %219, %220 : vector<16x1xf32>
    %222 = math.rsqrt %221 : vector<16x1xf32>
    %223 = vector.broadcast %222 : vector<16x1xf32> to vector<16x128xf32>
    %224 = arith.mulf %214, %223 : vector<16x128xf32>
    %225 = vector.broadcast %206 : vector<1x128xf32> to vector<16x128xf32>
    %226 = arith.mulf %224, %225 : vector<16x128xf32>
    %227 = vector.broadcast %208 : vector<1x128xf32> to vector<16x128xf32>
    %228 = arith.addf %226, %227 : vector<16x128xf32>
    %c0_82 = arith.constant 0 : index
    %c0_83 = arith.constant 0 : index
    %c0_84 = arith.constant 0 : index
    %229 = vector.load %arg16[%c0_82, %c0_83, %c0_84] : memref<1x128x256xf32, #tpu.memory_space<vmem>>, vector<1x128x256xf32>
    %230 = vector.shape_cast %229 : vector<1x128x256xf32> to vector<128x256xf32>
    %cst_85 = arith.constant dense<0.000000e+00> : vector<16x256xf32>
    %231 = tpu.matmul %228, %230, %cst_85 {dimension_numbers = #tpu.dot_dimension_numbers<[1], [0], [0], [1], [0, 0, 1, 1], [], []>} : vector<16x128xf32>, vector<128x256xf32>, vector<16x256xf32> -> vector<16x256xf32>
    %c0_86 = arith.constant 0 : index
    %c0_87 = arith.constant 0 : index
    %c0_88 = arith.constant 0 : index
    %232 = vector.load %arg17[%c0_86, %c0_87, %c0_88] : memref<1x1x256xf32, #tpu.memory_space<vmem>>, vector<1x1x256xf32>
    %233 = vector.shape_cast %232 : vector<1x1x256xf32> to vector<1x256xf32>
    %234 = vector.broadcast %233 : vector<1x256xf32> to vector<16x256xf32>
    %235 = arith.addf %231, %234 : vector<16x256xf32>
    %cst_89 = arith.constant 5.000000e-01 : f32
    %236 = vector.broadcast %cst_89 : f32 to vector<16x256xf32>
    %237 = arith.mulf %236, %235 : vector<16x256xf32>
    %cst_90 = arith.constant 4.471500e-02 : f32
    %238 = vector.broadcast %cst_90 : f32 to vector<16x256xf32>
    %239 = arith.mulf %238, %235 : vector<16x256xf32>
    %240 = arith.mulf %239, %235 : vector<16x256xf32>
    %241 = arith.mulf %240, %235 : vector<16x256xf32>
    %242 = arith.addf %235, %241 : vector<16x256xf32>
    %cst_91 = arith.constant 0.797884583 : f32
    %243 = vector.broadcast %cst_91 : f32 to vector<16x256xf32>
    %244 = arith.mulf %243, %242 : vector<16x256xf32>
    %245 = math.tanh %244 : vector<16x256xf32>
    %cst_92 = arith.constant 1.000000e+00 : f32
    %246 = vector.broadcast %cst_92 : f32 to vector<16x256xf32>
    %247 = arith.addf %246, %245 : vector<16x256xf32>
    %248 = arith.mulf %237, %247 : vector<16x256xf32>
    %c0_93 = arith.constant 0 : index
    %c0_94 = arith.constant 0 : index
    %c0_95 = arith.constant 0 : index
    %249 = vector.load %arg18[%c0_93, %c0_94, %c0_95] : memref<1x256x128xf32, #tpu.memory_space<vmem>>, vector<1x256x128xf32>
    %250 = vector.shape_cast %249 : vector<1x256x128xf32> to vector<256x128xf32>
    %cst_96 = arith.constant dense<0.000000e+00> : vector<16x128xf32>
    %251 = tpu.matmul %248, %250, %cst_96 {dimension_numbers = #tpu.dot_dimension_numbers<[1], [0], [0], [1], [0, 0, 1, 1], [], []>} : vector<16x256xf32>, vector<256x128xf32>, vector<16x128xf32> -> vector<16x128xf32>
    %c0_97 = arith.constant 0 : index
    %c0_98 = arith.constant 0 : index
    %c0_99 = arith.constant 0 : index
    %252 = vector.load %arg19[%c0_97, %c0_98, %c0_99] : memref<1x1x128xf32, #tpu.memory_space<vmem>>, vector<1x1x128xf32>
    %253 = vector.shape_cast %252 : vector<1x1x128xf32> to vector<1x128xf32>
    %254 = vector.broadcast %253 : vector<1x128xf32> to vector<16x128xf32>
    %255 = arith.addf %251, %254 : vector<16x128xf32>
    %256 = arith.addf %228, %255 : vector<16x128xf32>
    %c0_100 = arith.constant 0 : index
    %c0_101 = arith.constant 0 : index
    %c0_102 = arith.constant 0 : index
    %257 = vector.load %arg14[%c0_100, %c0_101, %c0_102] : memref<1x1x128xf32, #tpu.memory_space<vmem>>, vector<1x1x128xf32>
    %258 = vector.shape_cast %257 : vector<1x1x128xf32> to vector<1x128xf32>
    %c0_103 = arith.constant 0 : index
    %c0_104 = arith.constant 0 : index
    %c0_105 = arith.constant 0 : index
    %259 = vector.load %arg15[%c0_103, %c0_104, %c0_105] : memref<1x1x128xf32, #tpu.memory_space<vmem>>, vector<1x1x128xf32>
    %260 = vector.shape_cast %259 : vector<1x1x128xf32> to vector<1x128xf32>
    %cst_106 = arith.constant dense<0.000000e+00> : vector<16xf32>
    %261 = vector.multi_reduction <add>, %256, %cst_106 [1] : vector<16x128xf32> to vector<16xf32>
    %262 = vector.shape_cast %261 : vector<16xf32> to vector<16x1xf32>
    %cst_107 = arith.constant 1.280000e+02 : f32
    %263 = vector.broadcast %cst_107 : f32 to vector<16x1xf32>
    %264 = arith.divf %262, %263 : vector<16x1xf32>
    %265 = vector.broadcast %264 : vector<16x1xf32> to vector<16x128xf32>
    %266 = arith.subf %256, %265 : vector<16x128xf32>
    %267 = arith.mulf %266, %266 : vector<16x128xf32>
    %cst_108 = arith.constant dense<0.000000e+00> : vector<16xf32>
    %268 = vector.multi_reduction <add>, %267, %cst_108 [1] : vector<16x128xf32> to vector<16xf32>
    %269 = vector.shape_cast %268 : vector<16xf32> to vector<16x1xf32>
    %cst_109 = arith.constant 1.280000e+02 : f32
    %270 = vector.broadcast %cst_109 : f32 to vector<16x1xf32>
    %271 = arith.divf %269, %270 : vector<16x1xf32>
    %cst_110 = arith.constant 9.99999974E-6 : f32
    %272 = vector.broadcast %cst_110 : f32 to vector<16x1xf32>
    %273 = arith.addf %271, %272 : vector<16x1xf32>
    %274 = math.rsqrt %273 : vector<16x1xf32>
    %275 = vector.broadcast %274 : vector<16x1xf32> to vector<16x128xf32>
    %276 = arith.mulf %266, %275 : vector<16x128xf32>
    %277 = vector.broadcast %258 : vector<1x128xf32> to vector<16x128xf32>
    %278 = arith.mulf %276, %277 : vector<16x128xf32>
    %279 = vector.broadcast %260 : vector<1x128xf32> to vector<16x128xf32>
    %280 = arith.addf %278, %279 : vector<16x128xf32>
    %c0_111 = arith.constant 0 : index
    %c0_112 = arith.constant 0 : index
    %281 = vector.load %arg23[%c0_111, %c0_112] : memref<16x128xf32, #tpu.memory_space<vmem>>, vector<16x128xf32>
    tpu.vector_store %arg23[%c0_111, %c0_112], %280 {strides = array<i32>} : memref<16x128xf32, #tpu.memory_space<vmem>>, vector<16x128xf32>,
    %c1_i32 = arith.constant 1 : i32
    %282 = arith.cmpi eq, %arg1, %c1_i32 : i32
    %283 = arith.extui %282 : i1 to i32
    %c0_i32_113 = arith.constant 0 : i32
    %284 = arith.cmpi ne, %283, %c0_i32_113 : i32
    scf.if %284 {
      %c0_114 = arith.constant 0 : index
      %c0_115 = arith.constant 0 : index
      %285 = vector.load %arg20[%c0_114, %c0_115] : memref<128x128xf32, #tpu.memory_space<vmem>>, vector<128x128xf32>
      %cst_116 = arith.constant dense<0.000000e+00> : vector<16x128xf32>
      %286 = tpu.matmul %280, %285, %cst_116 {dimension_numbers = #tpu.dot_dimension_numbers<[1], [0], [0], [1], [0, 0, 1, 1], [], []>} : vector<16x128xf32>, vector<128x128xf32>, vector<16x128xf32> -> vector<16x128xf32>
      %c0_117 = arith.constant 0 : index
      %c0_118 = arith.constant 0 : index
      %287 = vector.load %arg21[%c0_117, %c0_118] : memref<1x128xf32, #tpu.memory_space<vmem>>, vector<1x128xf32>
      %288 = vector.broadcast %287 : vector<1x128xf32> to vector<16x128xf32>
      %289 = arith.addf %286, %288 : vector<16x128xf32>
      %c0_119 = arith.constant 0 : index
      %c0_120 = arith.constant 0 : index
      %c0_121 = arith.constant 0 : index
      %290 = vector.load %arg4[%c0_119, %c0_120, %c0_121] : memref<2x8x1xf32, #tpu.memory_space<vmem>>, vector<1x8x1xf32>
      %291 = vector.shape_cast %290 : vector<1x8x1xf32> to vector<8x1xf32>
      %c1_122 = arith.constant 1 : index
      %c0_123 = arith.constant 0 : index
      %c0_124 = arith.constant 0 : index
      %292 = vector.load %arg4[%c1_122, %c0_123, %c0_124] : memref<2x8x1xf32, #tpu.memory_space<vmem>>, vector<1x8x1xf32>
      %293 = vector.shape_cast %292 : vector<1x8x1xf32> to vector<8x1xf32>
      %294 = tpu.concatenate %291, %293 in 0 : vector<8x1xf32>, vector<8x1xf32> -> vector<16x1xf32>
      %295 = vector.broadcast %294 : vector<16x1xf32> to vector<16x128xf32>
      %296 = arith.mulf %289, %295 : vector<16x128xf32>
      %c0_125 = arith.constant 0 : index
      %c0_126 = arith.constant 0 : index
      %297 = vector.load %arg22[%c0_125, %c0_126] : memref<16x128xf32, #tpu.memory_space<vmem>>, vector<16x128xf32>
      tpu.vector_store %arg22[%c0_125, %c0_126], %296 {strides = array<i32>} : memref<16x128xf32, #tpu.memory_space<vmem>>, vector<16x128xf32>,
    } else {
    }
    return
  }
  func.func @transform_0(%arg0: i32, %arg1: i32) -> (i32, i32) {
    %c0_i32 = arith.constant 0 : i32
    %c0_i32_0 = arith.constant 0 : i32
    return %arg0, %c0_i32 : i32, i32
  }
  func.func @transform_1(%arg0: i32, %arg1: i32) -> (i32, i32, i32) {
    %c0_i32 = arith.constant 0 : i32
    %c0_i32_0 = arith.constant 0 : i32
    %c0_i32_1 = arith.constant 0 : i32
    return %arg0, %c0_i32, %c0_i32_0 : i32, i32, i32
  }
  func.func @transform_2(%arg0: i32, %arg1: i32) -> (i32, i32, i32) {
    %c0_i32 = arith.constant 0 : i32
    %c0_i32_0 = arith.constant 0 : i32
    %c0_i32_1 = arith.constant 0 : i32
    return %arg0, %c0_i32, %c0_i32_0 : i32, i32, i32
  }
  func.func @transform_3(%arg0: i32, %arg1: i32) -> (i32, i32, i32, i32) {
    %c0_i32 = arith.constant 0 : i32
    %c0_i32_0 = arith.constant 0 : i32
    %c0_i32_1 = arith.constant 0 : i32
    return %arg1, %arg0, %c0_i32, %c0_i32_0 : i32, i32, i32, i32
  }
  func.func @transform_4(%arg0: i32, %arg1: i32) -> (i32, i32, i32) {
    %c0_i32 = arith.constant 0 : i32
    %c0_i32_0 = arith.constant 0 : i32
    %c0_i32_1 = arith.constant 0 : i32
    return %arg1, %c0_i32, %c0_i32_0 : i32, i32, i32
  }
  func.func @transform_5(%arg0: i32, %arg1: i32) -> (i32, i32, i32) {
    %c0_i32 = arith.constant 0 : i32
    %c0_i32_0 = arith.constant 0 : i32
    %c0_i32_1 = arith.constant 0 : i32
    return %arg1, %c0_i32, %c0_i32_0 : i32, i32, i32
  }
  func.func @transform_6(%arg0: i32, %arg1: i32) -> (i32, i32, i32) {
    %c0_i32 = arith.constant 0 : i32
    %c0_i32_0 = arith.constant 0 : i32
    %c0_i32_1 = arith.constant 0 : i32
    return %arg1, %c0_i32, %c0_i32_0 : i32, i32, i32
  }
  func.func @transform_7(%arg0: i32, %arg1: i32) -> (i32, i32, i32) {
    %c0_i32 = arith.constant 0 : i32
    %c0_i32_0 = arith.constant 0 : i32
    %c0_i32_1 = arith.constant 0 : i32
    return %arg1, %c0_i32, %c0_i32_0 : i32, i32, i32
  }
  func.func @transform_8(%arg0: i32, %arg1: i32) -> (i32, i32, i32) {
    %c0_i32 = arith.constant 0 : i32
    %c0_i32_0 = arith.constant 0 : i32
    %c0_i32_1 = arith.constant 0 : i32
    return %arg1, %c0_i32, %c0_i32_0 : i32, i32, i32
  }
  func.func @transform_9(%arg0: i32, %arg1: i32) -> (i32, i32, i32) {
    %c0_i32 = arith.constant 0 : i32
    %c0_i32_0 = arith.constant 0 : i32
    %c0_i32_1 = arith.constant 0 : i32
    return %arg1, %c0_i32, %c0_i32_0 : i32, i32, i32
  }
  func.func @transform_10(%arg0: i32, %arg1: i32) -> (i32, i32, i32) {
    %c0_i32 = arith.constant 0 : i32
    %c0_i32_0 = arith.constant 0 : i32
    %c0_i32_1 = arith.constant 0 : i32
    return %arg1, %c0_i32, %c0_i32_0 : i32, i32, i32
  }
  func.func @transform_11(%arg0: i32, %arg1: i32) -> (i32, i32, i32) {
    %c0_i32 = arith.constant 0 : i32
    %c0_i32_0 = arith.constant 0 : i32
    %c0_i32_1 = arith.constant 0 : i32
    return %arg1, %c0_i32, %c0_i32_0 : i32, i32, i32
  }
  func.func @transform_12(%arg0: i32, %arg1: i32) -> (i32, i32, i32) {
    %c0_i32 = arith.constant 0 : i32
    %c0_i32_0 = arith.constant 0 : i32
    %c0_i32_1 = arith.constant 0 : i32
    return %arg1, %c0_i32, %c0_i32_0 : i32, i32, i32
  }
  func.func @transform_13(%arg0: i32, %arg1: i32) -> (i32, i32, i32) {
    %c0_i32 = arith.constant 0 : i32
    %c0_i32_0 = arith.constant 0 : i32
    %c0_i32_1 = arith.constant 0 : i32
    return %arg1, %c0_i32, %c0_i32_0 : i32, i32, i32
  }
  func.func @transform_14(%arg0: i32, %arg1: i32) -> (i32, i32, i32) {
    %c0_i32 = arith.constant 0 : i32
    %c0_i32_0 = arith.constant 0 : i32
    %c0_i32_1 = arith.constant 0 : i32
    return %arg1, %c0_i32, %c0_i32_0 : i32, i32, i32
  }
  func.func @transform_15(%arg0: i32, %arg1: i32) -> (i32, i32, i32) {
    %c0_i32 = arith.constant 0 : i32
    %c0_i32_0 = arith.constant 0 : i32
    %c0_i32_1 = arith.constant 0 : i32
    return %arg1, %c0_i32, %c0_i32_0 : i32, i32, i32
  }
  func.func @transform_16(%arg0: i32, %arg1: i32) -> (i32, i32, i32) {
    %c0_i32 = arith.constant 0 : i32
    %c0_i32_0 = arith.constant 0 : i32
    %c0_i32_1 = arith.constant 0 : i32
    return %arg1, %c0_i32, %c0_i32_0 : i32, i32, i32
  }
  func.func @transform_17(%arg0: i32, %arg1: i32) -> (i32, i32, i32) {
    %c0_i32 = arith.constant 0 : i32
    %c0_i32_0 = arith.constant 0 : i32
    %c0_i32_1 = arith.constant 0 : i32
    return %arg1, %c0_i32, %c0_i32_0 : i32, i32, i32
  }
  func.func @transform_18(%arg0: i32, %arg1: i32) -> (i32, i32) {
    %c0_i32 = arith.constant 0 : i32
    %c0_i32_0 = arith.constant 0 : i32
    %c0_i32_1 = arith.constant 0 : i32
    return %c0_i32, %c0_i32_0 : i32, i32
  }
  func.func @transform_19(%arg0: i32, %arg1: i32) -> (i32, i32) {
    %c0_i32 = arith.constant 0 : i32
    %c0_i32_0 = arith.constant 0 : i32
    %c0_i32_1 = arith.constant 0 : i32
    return %c0_i32, %c0_i32_0 : i32, i32
  }
  func.func @transform_20(%arg0: i32, %arg1: i32) -> (i32, i32) {
    %c0_i32 = arith.constant 0 : i32
    %c0_i32_0 = arith.constant 0 : i32
    return %arg0, %c0_i32 : i32, i32
  }
}

</mosaic_0001>

<llo_original>
// kernel: decoder_transformer_forward.1
$region0: #{decoder_transformer_forward.1}
  #allocation0 [shape = 'u32[]', space=smem, size = 0x4, offset = 0x4, fixed_abs, tag = 'smem constant byte address 0x4 - core index']
  #allocation1 [shape = 'u32[144,128]{1,0:T(1,128)}', space=vmem, size = 0x12000, scoped, tag = 'internal scratch']
  #allocation2 [shape = 'f32[16,128]{1,0:T(8,128)}', space=vmem, size = 0x2000, scoped, tag = 'scratch operand']
  %s0 = inlined_call_operand.vmem [shape: f32[16,128], index: 0, kind: input, shape index: {}]
  %s1 = inlined_call_operand.vmem [shape: f32[2,1,8], index: 1, kind: input, shape index: {}]
  %s2 = inlined_call_operand.vmem [shape: f32[2,8,1], index: 2, kind: input, shape index: {}]
  %s3 = inlined_call_operand.vmem [shape: f32[2,2,1,128], index: 3, kind: input, shape index: {}]
  %s4 = inlined_call_operand.vmem [shape: f32[2,128,384], index: 4, kind: input, shape index: {}]
  %s5 = inlined_call_operand.vmem [shape: f32[2,1,384], index: 5, kind: input, shape index: {}]
  %s6 = inlined_call_operand.vmem [shape: f32[2,128,128], index: 6, kind: input, shape index: {}]
  %s7 = inlined_call_operand.vmem [shape: f32[2,1,128], index: 7, kind: input, shape index: {}]
  %s8 = inlined_call_operand.vmem [shape: f32[2,1,128], index: 8, kind: input, shape index: {}]
  %s9 = inlined_call_operand.vmem [shape: f32[2,1,128], index: 9, kind: input, shape index: {}]
  %s10 = inlined_call_operand.vmem [shape: f32[2,1,128], index: 10, kind: input, shape index: {}]
  %s11 = inlined_call_operand.vmem [shape: f32[2,1,128], index: 11, kind: input, shape index: {}]
  %s12 = inlined_call_operand.vmem [shape: f32[2,1,128], index: 12, kind: input, shape index: {}]
  %s13 = inlined_call_operand.vmem [shape: f32[2,1,128], index: 13, kind: input, shape index: {}]
  %s14 = inlined_call_operand.vmem [shape: f32[2,128,256], index: 14, kind: input, shape index: {}]
  %s15 = inlined_call_operand.vmem [shape: f32[2,1,256], index: 15, kind: input, shape index: {}]
  %s16 = inlined_call_operand.vmem [shape: f32[2,256,128], index: 16, kind: input, shape index: {}]
  %s17 = inlined_call_operand.vmem [shape: f32[2,1,128], index: 17, kind: input, shape index: {}]
  %s18 = inlined_call_operand.vmem [shape: f32[128,128], index: 18, kind: input, shape index: {}]
  %s19 = inlined_call_operand.vmem [shape: f32[1,128], index: 19, kind: input, shape index: {}]
  %s20 = inlined_call_operand.vmem [shape: f32[16,128], index: 20, kind: output, shape index: {}]
  %s21 = sld [smem:[#allocation0]]
  $region121: #{decoder_transformer_forward.1} parent=0
    _
  %s23 = ssub.s32 1, %s21
  %s24 = scalar_select 0, %s23, %s21
  loop: start=0, step=1, limit=4
  $region2: #{decoder_transformer_forward.1} parent=0 // loop_pre_header
    _
  $region3: #{decoder_transformer_forward.1} parent=0 // loop_header
    %s26 = sphi 0, %s30
    %p27 = scmp.ge.s32.totalorder %s26, 4
    %s33 = sphi 0, %s45
    %s34 = sphi 0, %s41
    %s35 = sphi 0, %s33
    %s36 = sphi 0, %s34
    %s37 = sphi 0, %s35
    %s38 = sphi 0, %s36
    %s48 = sphi 0, %s50
    %s51 = sphi 0, %s48
    %s52 = sphi 0, %s51
    %s68 = sphi 0, %s52
    %s74 = sphi 0, %s76
    %s77 = sphi 0, %s74
    %s78 = sphi 0, %s77
    %s94 = sphi 0, %s78
    %s100 = sphi 0, %s102
    %s103 = sphi 0, %s100
    %s104 = sphi 0, %s103
    %s120 = sphi 0, %s104
    %s128 = sphi 0, %s130
    %s131 = sphi 0, %s128
    %s132 = sphi 0, %s131
    %s148 = sphi 0, %s132
    %s154 = sphi 0, %s156
    %s157 = sphi 0, %s154
    %s158 = sphi 0, %s157
    %s174 = sphi 0, %s158
    %s180 = sphi 0, %s182
    %s183 = sphi 0, %s180
    %s184 = sphi 0, %s183
    %s200 = sphi 0, %s184
    %s206 = sphi 0, %s208
    %s209 = sphi 0, %s206
    %s210 = sphi 0, %s209
    %s226 = sphi 0, %s210
    %s232 = sphi 0, %s234
    %s235 = sphi 0, %s232
    %s236 = sphi 0, %s235
    %s252 = sphi 0, %s236
    %s258 = sphi 0, %s260
    %s261 = sphi 0, %s258
    %s262 = sphi 0, %s261
    %s278 = sphi 0, %s262
    %s284 = sphi 0, %s286
    %s287 = sphi 0, %s284
    %s288 = sphi 0, %s287
    %s304 = sphi 0, %s288
    %s310 = sphi 0, %s312
    %s313 = sphi 0, %s310
    %s314 = sphi 0, %s313
    %s330 = sphi 0, %s314
    %s336 = sphi 0, %s338
    %s339 = sphi 0, %s336
    %s340 = sphi 0, %s339
    %s356 = sphi 0, %s340
    %s362 = sphi 0, %s364
    %s365 = sphi 0, %s362
    %s366 = sphi 0, %s365
    %s382 = sphi 0, %s366
    %s388 = sphi 0, %s390
    %s391 = sphi 0, %s388
    %s392 = sphi 0, %s391
    %s408 = sphi 0, %s392
    %s414 = sphi 0, %s416
    %s417 = sphi 0, %s414
    %s418 = sphi 0, %s417
    %s434 = sphi 0, %s418
    %s440 = sphi 0, %s442
    %s443 = sphi 0, %s440
    %s444 = sphi 0, %s443
    %s460 = sphi 0, %s444
    %s466 = sphi 0, %s468
    %s469 = sphi 0, %s466
    %s470 = sphi 0, %s469
    %s486 = sphi 0, %s470
    %s492 = sphi 0, %s494
    %s495 = sphi 0, %s492
    %s496 = sphi 0, %s495
    %s512 = sphi 0, %s496
    %s516 = sphi 0, %s516
    %s518 = sphi 0, %s516
    %s519 = sphi 0, %s518
    %s533 = sphi 0, %s519
    %s537 = sphi 0, %s537
    %s539 = sphi 0, %s537
    %s540 = sphi 0, %s539
    %s554 = sphi 0, %s540
    %s560 = sphi 0, %s562
    %s563 = sphi 0, %s560
    %s564 = sphi 0, %s563
    %s580 = sphi 0, %s564
  $region4: #{decoder_transformer_forward.1} parent=0 // loop_header_branch
    %29 = sbr.rel (%p27) target = $region8
  $region5: #{decoder_transformer_forward.1} parent=0 // loop_body
    %s31 = ssub.s32 %s26, 1
    %s32 = ssub.s32 %s26, 2
    %s39 = sadd.s32 1, %s34
    %p40 = scmp.ge.s32.totalorder %s39, 2
    %s41 = scalar_select %p40, 0, %s39
    %s42 = sadd.s32 1, %s33
    %s43 = scalar_select %p40, %s42, %s33
    %p44 = scmp.ge.s32.totalorder %s43, 1
    %s45 = scalar_select %p44, 0, %s43
    %s46 = ssub.s32 %s33, %s45
    %p47 = scmp.eq.s32.totalorder %s46, 0
    %s49 = sadd.s32 %s48, 1
    %s50 = scalar_select %p47, %s48, %s49
    %p53 = pneg %p47
    %p54 = scmp.eq.s32.totalorder %s26, 1
    %p55 = por %p53, %p54
    %p56 = scmp.ne.s32.totalorder %s48, %s51
    %p57 = scmp.eq.s32.totalorder %s26, 0
    %p58 = por %p56, %p57
    %p59 = scmp.ne.s32.totalorder %s48, %s51
    %p60 = scmp.eq.s32.totalorder %s31, 1
    %p61 = por %p59, %p60
    %p62 = scmp.ne.s32.totalorder %s51, %s52
    %p63 = scmp.eq.s32.totalorder %s31, 0
    %p64 = por %p62, %p63
    %p65 = scmp.ne.s32.totalorder %s51, %s52
    %p66 = scmp.eq.s32.totalorder %s32, 1
    %p67 = por %p65, %p66
    %p69 = scmp.ne.s32.totalorder %s52, %s68
    %p70 = scmp.eq.s32.totalorder %s32, 0
    %p71 = por %p69, %p70
    %s72 = ssub.s32 %s33, %s45
    %p73 = scmp.eq.s32.totalorder %s72, 0
    %s75 = sadd.s32 %s74, 1
    %s76 = scalar_select %p73, %s74, %s75
    %p79 = pneg %p73
    %p80 = scmp.eq.s32.totalorder %s26, 1
    %p81 = por %p79, %p80
    %p82 = scmp.ne.s32.totalorder %s74, %s77
    %p83 = scmp.eq.s32.totalorder %s26, 0
    %p84 = por %p82, %p83
    %p85 = scmp.ne.s32.totalorder %s74, %s77
    %p86 = scmp.eq.s32.totalorder %s31, 1
    %p87 = por %p85, %p86
    %p88 = scmp.ne.s32.totalorder %s77, %s78
    %p89 = scmp.eq.s32.totalorder %s31, 0
    %p90 = por %p88, %p89
    %p91 = scmp.ne.s32.totalorder %s77, %s78
    %p92 = scmp.eq.s32.totalorder %s32, 1
    %p93 = por %p91, %p92
    %p95 = scmp.ne.s32.totalorder %s78, %s94
    %p96 = scmp.eq.s32.totalorder %s32, 0
    %p97 = por %p95, %p96
    %s98 = ssub.s32 %s33, %s45
    %p99 = scmp.eq.s32.totalorder %s98, 0
    %s101 = sadd.s32 %s100, 1
    %s102 = scalar_select %p99, %s100, %s101
    %p105 = pneg %p99
    %p106 = scmp.eq.s32.totalorder %s26, 1
    %p107 = por %p105, %p106
    %p108 = scmp.ne.s32.totalorder %s100, %s103
    %p109 = scmp.eq.s32.totalorder %s26, 0
    %p110 = por %p108, %p109
    %p111 = scmp.ne.s32.totalorder %s100, %s103
    %p112 = scmp.eq.s32.totalorder %s31, 1
    %p113 = por %p111, %p112
    %p114 = scmp.ne.s32.totalorder %s103, %s104
    %p115 = scmp.eq.s32.totalorder %s31, 0
    %p116 = por %p114, %p115
    %p117 = scmp.ne.s32.totalorder %s103, %s104
    %p118 = scmp.eq.s32.totalorder %s32, 1
    %p119 = por %p117, %p118
    %p121 = scmp.ne.s32.totalorder %s104, %s120
    %p122 = scmp.eq.s32.totalorder %s32, 0
    %p123 = por %p121, %p122
    %s124 = ssub.s32 %s34, %s41
    %s125 = ssub.s32 %s33, %s45
    %s126 = sor.u32 %s124, %s125
    %p127 = scmp.eq.s32.totalorder %s126, 0
    %s129 = sadd.s32 %s128, 1
    %s130 = scalar_select %p127, %s128, %s129
    %p133 = pneg %p127
    %p134 = scmp.eq.s32.totalorder %s26, 1
    %p135 = por %p133, %p134
    %p136 = scmp.ne.s32.totalorder %s128, %s131
    %p137 = scmp.eq.s32.totalorder %s26, 0
    %p138 = por %p136, %p137
    %p139 = scmp.ne.s32.totalorder %s128, %s131
    %p140 = scmp.eq.s32.totalorder %s31, 1
    %p141 = por %p139, %p140
    %p142 = scmp.ne.s32.totalorder %s131, %s132
    %p143 = scmp.eq.s32.totalorder %s31, 0
    %p144 = por %p142, %p143
    %p145 = scmp.ne.s32.totalorder %s131, %s132
    %p146 = scmp.eq.s32.totalorder %s32, 1
    %p147 = por %p145, %p146
    %p149 = scmp.ne.s32.totalorder %s132, %s148
    %p150 = scmp.eq.s32.totalorder %s32, 0
    %p151 = por %p149, %p150
    %s152 = ssub.s32 %s34, %s41
    %p153 = scmp.eq.s32.totalorder %s152, 0
    %s155 = sadd.s32 %s154, 1
    %s156 = scalar_select %p153, %s154, %s155
    %p159 = pneg %p153
    %p160 = scmp.eq.s32.totalorder %s26, 1
    %p161 = por %p159, %p160
    %p162 = scmp.ne.s32.totalorder %s154, %s157
    %p163 = scmp.eq.s32.totalorder %s26, 0
    %p164 = por %p162, %p163
    %p165 = scmp.ne.s32.totalorder %s154, %s157
    %p166 = scmp.eq.s32.totalorder %s31, 1
    %p167 = por %p165, %p166
    %p168 = scmp.ne.s32.totalorder %s157, %s158
    %p169 = scmp.eq.s32.totalorder %s31, 0
    %p170 = por %p168, %p169
    %p171 = scmp.ne.s32.totalorder %s157, %s158
    %p172 = scmp.eq.s32.totalorder %s32, 1
    %p173 = por %p171, %p172
    %p175 = scmp.ne.s32.totalorder %s158, %s174
    %p176 = scmp.eq.s32.totalorder %s32, 0
    %p177 = por %p175, %p176
    %s178 = ssub.s32 %s34, %s41
    %p179 = scmp.eq.s32.totalorder %s178, 0
    %s181 = sadd.s32 %s180, 1
    %s182 = scalar_select %p179, %s180, %s181
    %p185 = pneg %p179
    %p186 = scmp.eq.s32.totalorder %s26, 1
    %p187 = por %p185, %p186
    %p188 = scmp.ne.s32.totalorder %s180, %s183
    %p189 = scmp.eq.s32.totalorder %s26, 0
    %p190 = por %p188, %p189
    %p191 = scmp.ne.s32.totalorder %s180, %s183
    %p192 = scmp.eq.s32.totalorder %s31, 1
    %p193 = por %p191, %p192
    %p194 = scmp.ne.s32.totalorder %s183, %s184
    %p195 = scmp.eq.s32.totalorder %s31, 0
    %p196 = por %p194, %p195
    %p197 = scmp.ne.s32.totalorder %s183, %s184
    %p198 = scmp.eq.s32.totalorder %s32, 1
    %p199 = por %p197, %p198
    %p201 = scmp.ne.s32.totalorder %s184, %s200
    %p202 = scmp.eq.s32.totalorder %s32, 0
    %p203 = por %p201, %p202
    %s204 = ssub.s32 %s34, %s41
    %p205 = scmp.eq.s32.totalorder %s204, 0
    %s207 = sadd.s32 %s206, 1
    %s208 = scalar_select %p205, %s206, %s207
    %p211 = pneg %p205
    %p212 = scmp.eq.s32.totalorder %s26, 1
    %p213 = por %p211, %p212
    %p214 = scmp.ne.s32.totalorder %s206, %s209
    %p215 = scmp.eq.s32.totalorder %s26, 0
    %p216 = por %p214, %p215
    %p217 = scmp.ne.s32.totalorder %s206, %s209
    %p218 = scmp.eq.s32.totalorder %s31, 1
    %p219 = por %p217, %p218
    %p220 = scmp.ne.s32.totalorder %s209, %s210
    %p221 = scmp.eq.s32.totalorder %s31, 0
    %p222 = por %p220, %p221
    %p223 = scmp.ne.s32.totalorder %s209, %s210
    %p224 = scmp.eq.s32.totalorder %s32, 1
    %p225 = por %p223, %p224
    %p227 = scmp.ne.s32.totalorder %s210, %s226
    %p228 = scmp.eq.s32.totalorder %s32, 0
    %p229 = por %p227, %p228
    %s230 = ssub.s32 %s34, %s41
    %p231 = scmp.eq.s32.totalorder %s230, 0
    %s233 = sadd.s32 %s232, 1
    %s234 = scalar_select %p231, %s232, %s233
    %p237 = pneg %p231
    %p238 = scmp.eq.s32.totalorder %s26, 1
    %p239 = por %p237, %p238
    %p240 = scmp.ne.s32.totalorder %s232, %s235
    %p241 = scmp.eq.s32.totalorder %s26, 0
    %p242 = por %p240, %p241
    %p243 = scmp.ne.s32.totalorder %s232, %s235
    %p244 = scmp.eq.s32.totalorder %s31, 1
    %p245 = por %p243, %p244
    %p246 = scmp.ne.s32.totalorder %s235, %s236
    %p247 = scmp.eq.s32.totalorder %s31, 0
    %p248 = por %p246, %p247
    %p249 = scmp.ne.s32.totalorder %s235, %s236
    %p250 = scmp.eq.s32.totalorder %s32, 1
    %p251 = por %p249, %p250
    %p253 = scmp.ne.s32.totalorder %s236, %s252
    %p254 = scmp.eq.s32.totalorder %s32, 0
    %p255 = por %p253, %p254
    %s256 = ssub.s32 %s34, %s41
    %p257 = scmp.eq.s32.totalorder %s256, 0
    %s259 = sadd.s32 %s258, 1
    %s260 = scalar_select %p257, %s258, %s259
    %p263 = pneg %p257
    %p264 = scmp.eq.s32.totalorder %s26, 1
    %p265 = por %p263, %p264
    %p266 = scmp.ne.s32.totalorder %s258, %s261
    %p267 = scmp.eq.s32.totalorder %s26, 0
    %p268 = por %p266, %p267
    %p269 = scmp.ne.s32.totalorder %s258, %s261
    %p270 = scmp.eq.s32.totalorder %s31, 1
    %p271 = por %p269, %p270
    %p272 = scmp.ne.s32.totalorder %s261, %s262
    %p273 = scmp.eq.s32.totalorder %s31, 0
    %p274 = por %p272, %p273
    %p275 = scmp.ne.s32.totalorder %s261, %s262
    %p276 = scmp.eq.s32.totalorder %s32, 1
    %p277 = por %p275, %p276
    %p279 = scmp.ne.s32.totalorder %s262, %s278
    %p280 = scmp.eq.s32.totalorder %s32, 0
    %p281 = por %p279, %p280
    %s282 = ssub.s32 %s34, %s41
    %p283 = scmp.eq.s32.totalorder %s282, 0
    %s285 = sadd.s32 %s284, 1
    %s286 = scalar_select %p283, %s284, %s285
    %p289 = pneg %p283
    %p290 = scmp.eq.s32.totalorder %s26, 1
    %p291 = por %p289, %p290
    %p292 = scmp.ne.s32.totalorder %s284, %s287
    %p293 = scmp.eq.s32.totalorder %s26, 0
    %p294 = por %p292, %p293
    %p295 = scmp.ne.s32.totalorder %s284, %s287
    %p296 = scmp.eq.s32.totalorder %s31, 1
    %p297 = por %p295, %p296
    %p298 = scmp.ne.s32.totalorder %s287, %s288
    %p299 = scmp.eq.s32.totalorder %s31, 0
    %p300 = por %p298, %p299
    %p301 = scmp.ne.s32.totalorder %s287, %s288
    %p302 = scmp.eq.s32.totalorder %s32, 1
    %p303 = por %p301, %p302
    %p305 = scmp.ne.s32.totalorder %s288, %s304
    %p306 = scmp.eq.s32.totalorder %s32, 0
    %p307 = por %p305, %p306
    %s308 = ssub.s32 %s34, %s41
    %p309 = scmp.eq.s32.totalorder %s308, 0
    %s311 = sadd.s32 %s310, 1
    %s312 = scalar_select %p309, %s310, %s311
    %p315 = pneg %p309
    %p316 = scmp.eq.s32.totalorder %s26, 1
    %p317 = por %p315, %p316
    %p318 = scmp.ne.s32.totalorder %s310, %s313
    %p319 = scmp.eq.s32.totalorder %s26, 0
    %p320 = por %p318, %p319
    %p321 = scmp.ne.s32.totalorder %s310, %s313
    %p322 = scmp.eq.s32.totalorder %s31, 1
    %p323 = por %p321, %p322
    %p324 = scmp.ne.s32.totalorder %s313, %s314
    %p325 = scmp.eq.s32.totalorder %s31, 0
    %p326 = por %p324, %p325
    %p327 = scmp.ne.s32.totalorder %s313, %s314
    %p328 = scmp.eq.s32.totalorder %s32, 1
    %p329 = por %p327, %p328
    %p331 = scmp.ne.s32.totalorder %s314, %s330
    %p332 = scmp.eq.s32.totalorder %s32, 0
    %p333 = por %p331, %p332
    %s334 = ssub.s32 %s34, %s41
    %p335 = scmp.eq.s32.totalorder %s334, 0
    %s337 = sadd.s32 %s336, 1
    %s338 = scalar_select %p335, %s336, %s337
    %p341 = pneg %p335
    %p342 = scmp.eq.s32.totalorder %s26, 1
    %p343 = por %p341, %p342
    %p344 = scmp.ne.s32.totalorder %s336, %s339
    %p345 = scmp.eq.s32.totalorder %s26, 0
    %p346 = por %p344, %p345
    %p347 = scmp.ne.s32.totalorder %s336, %s339
    %p348 = scmp.eq.s32.totalorder %s31, 1
    %p349 = por %p347, %p348
    %p350 = scmp.ne.s32.totalorder %s339, %s340
    %p351 = scmp.eq.s32.totalorder %s31, 0
    %p352 = por %p350, %p351
    %p353 = scmp.ne.s32.totalorder %s339, %s340
    %p354 = scmp.eq.s32.totalorder %s32, 1
    %p355 = por %p353, %p354
    %p357 = scmp.ne.s32.totalorder %s340, %s356
    %p358 = scmp.eq.s32.totalorder %s32, 0
    %p359 = por %p357, %p358
    %s360 = ssub.s32 %s34, %s41
    %p361 = scmp.eq.s32.totalorder %s360, 0
    %s363 = sadd.s32 %s362, 1
    %s364 = scalar_select %p361, %s362, %s363
    %p367 = pneg %p361
    %p368 = scmp.eq.s32.totalorder %s26, 1
    %p369 = por %p367, %p368
    %p370 = scmp.ne.s32.totalorder %s362, %s365
    %p371 = scmp.eq.s32.totalorder %s26, 0
    %p372 = por %p370, %p371
    %p373 = scmp.ne.s32.totalorder %s362, %s365
    %p374 = scmp.eq.s32.totalorder %s31, 1
    %p375 = por %p373, %p374
    %p376 = scmp.ne.s32.totalorder %s365, %s366
    %p377 = scmp.eq.s32.totalorder %s31, 0
    %p378 = por %p376, %p377
    %p379 = scmp.ne.s32.totalorder %s365, %s366
    %p380 = scmp.eq.s32.totalorder %s32, 1
    %p381 = por %p379, %p380
    %p383 = scmp.ne.s32.totalorder %s366, %s382
    %p384 = scmp.eq.s32.totalorder %s32, 0
    %p385 = por %p383, %p384
    %s386 = ssub.s32 %s34, %s41
    %p387 = scmp.eq.s32.totalorder %s386, 0
    %s389 = sadd.s32 %s388, 1
    %s390 = scalar_select %p387, %s388, %s389
    %p393 = pneg %p387
    %p394 = scmp.eq.s32.totalorder %s26, 1
    %p395 = por %p393, %p394
    %p396 = scmp.ne.s32.totalorder %s388, %s391
    %p397 = scmp.eq.s32.totalorder %s26, 0
    %p398 = por %p396, %p397
    %p399 = scmp.ne.s32.totalorder %s388, %s391
    %p400 = scmp.eq.s32.totalorder %s31, 1
    %p401 = por %p399, %p400
    %p402 = scmp.ne.s32.totalorder %s391, %s392
    %p403 = scmp.eq.s32.totalorder %s31, 0
    %p404 = por %p402, %p403
    %p405 = scmp.ne.s32.totalorder %s391, %s392
    %p406 = scmp.eq.s32.totalorder %s32, 1
    %p407 = por %p405, %p406
    %p409 = scmp.ne.s32.totalorder %s392, %s408
    %p410 = scmp.eq.s32.totalorder %s32, 0
    %p411 = por %p409, %p410
    %s412 = ssub.s32 %s34, %s41
    %p413 = scmp.eq.s32.totalorder %s412, 0
    %s415 = sadd.s32 %s414, 1
    %s416 = scalar_select %p413, %s414, %s415
    %p419 = pneg %p413
    %p420 = scmp.eq.s32.totalorder %s26, 1
    %p421 = por %p419, %p420
    %p422 = scmp.ne.s32.totalorder %s414, %s417
    %p423 = scmp.eq.s32.totalorder %s26, 0
    %p424 = por %p422, %p423
    %p425 = scmp.ne.s32.totalorder %s414, %s417
    %p426 = scmp.eq.s32.totalorder %s31, 1
    %p427 = por %p425, %p426
    %p428 = scmp.ne.s32.totalorder %s417, %s418
    %p429 = scmp.eq.s32.totalorder %s31, 0
    %p430 = por %p428, %p429
    %p431 = scmp.ne.s32.totalorder %s417, %s418
    %p432 = scmp.eq.s32.totalorder %s32, 1
    %p433 = por %p431, %p432
    %p435 = scmp.ne.s32.totalorder %s418, %s434
    %p436 = scmp.eq.s32.totalorder %s32, 0
    %p437 = por %p435, %p436
    %s438 = ssub.s32 %s34, %s41
    %p439 = scmp.eq.s32.totalorder %s438, 0
    %s441 = sadd.s32 %s440, 1
    %s442 = scalar_select %p439, %s440, %s441
    %p445 = pneg %p439
    %p446 = scmp.eq.s32.totalorder %s26, 1
    %p447 = por %p445, %p446
    %p448 = scmp.ne.s32.totalorder %s440, %s443
    %p449 = scmp.eq.s32.totalorder %s26, 0
    %p450 = por %p448, %p449
    %p451 = scmp.ne.s32.totalorder %s440, %s443
    %p452 = scmp.eq.s32.totalorder %s31, 1
    %p453 = por %p451, %p452
    %p454 = scmp.ne.s32.totalorder %s443, %s444
    %p455 = scmp.eq.s32.totalorder %s31, 0
    %p456 = por %p454, %p455
    %p457 = scmp.ne.s32.totalorder %s443, %s444
    %p458 = scmp.eq.s32.totalorder %s32, 1
    %p459 = por %p457, %p458
    %p461 = scmp.ne.s32.totalorder %s444, %s460
    %p462 = scmp.eq.s32.totalorder %s32, 0
    %p463 = por %p461, %p462
    %s464 = ssub.s32 %s34, %s41
    %p465 = scmp.eq.s32.totalorder %s464, 0
    %s467 = sadd.s32 %s466, 1
    %s468 = scalar_select %p465, %s466, %s467
    %p471 = pneg %p465
    %p472 = scmp.eq.s32.totalorder %s26, 1
    %p473 = por %p471, %p472
    %p474 = scmp.ne.s32.totalorder %s466, %s469
    %p475 = scmp.eq.s32.totalorder %s26, 0
    %p476 = por %p474, %p475
    %p477 = scmp.ne.s32.totalorder %s466, %s469
    %p478 = scmp.eq.s32.totalorder %s31, 1
    %p479 = por %p477, %p478
    %p480 = scmp.ne.s32.totalorder %s469, %s470
    %p481 = scmp.eq.s32.totalorder %s31, 0
    %p482 = por %p480, %p481
    %p483 = scmp.ne.s32.totalorder %s469, %s470
    %p484 = scmp.eq.s32.totalorder %s32, 1
    %p485 = por %p483, %p484
    %p487 = scmp.ne.s32.totalorder %s470, %s486
    %p488 = scmp.eq.s32.totalorder %s32, 0
    %p489 = por %p487, %p488
    %s490 = ssub.s32 %s34, %s41
    %p491 = scmp.eq.s32.totalorder %s490, 0
    %s493 = sadd.s32 %s492, 1
    %s494 = scalar_select %p491, %s492, %s493
    %p497 = pneg %p491
    %p498 = scmp.eq.s32.totalorder %s26, 1
    %p499 = por %p497, %p498
    %p500 = scmp.ne.s32.totalorder %s492, %s495
    %p501 = scmp.eq.s32.totalorder %s26, 0
    %p502 = por %p500, %p501
    %p503 = scmp.ne.s32.totalorder %s492, %s495
    %p504 = scmp.eq.s32.totalorder %s31, 1
    %p505 = por %p503, %p504
    %p506 = scmp.ne.s32.totalorder %s495, %s496
    %p507 = scmp.eq.s32.totalorder %s31, 0
    %p508 = por %p506, %p507
    %p509 = scmp.ne.s32.totalorder %s495, %s496
    %p510 = scmp.eq.s32.totalorder %s32, 1
    %p511 = por %p509, %p510
    %p513 = scmp.ne.s32.totalorder %s496, %s512
    %p514 = scmp.eq.s32.totalorder %s32, 0
    %p515 = por %p513, %p514
    %s517 = sadd.s32 %s516, 1
    %p520 = scmp.eq.s32.totalorder %s26, 1
    %p521 = scmp.ne.s32.totalorder %s516, %s518
    %p522 = scmp.eq.s32.totalorder %s26, 0
    %p523 = por %p521, %p522
    %p524 = scmp.ne.s32.totalorder %s516, %s518
    %p525 = scmp.eq.s32.totalorder %s31, 1
    %p526 = por %p524, %p525
    %p527 = scmp.ne.s32.totalorder %s518, %s519
    %p528 = scmp.eq.s32.totalorder %s31, 0
    %p529 = por %p527, %p528
    %p530 = scmp.ne.s32.totalorder %s518, %s519
    %p531 = scmp.eq.s32.totalorder %s32, 1
    %p532 = por %p530, %p531
    %p534 = scmp.ne.s32.totalorder %s519, %s533
    %p535 = scmp.eq.s32.totalorder %s32, 0
    %p536 = por %p534, %p535
    %s538 = sadd.s32 %s537, 1
    %p541 = scmp.eq.s32.totalorder %s26, 1
    %p542 = scmp.ne.s32.totalorder %s537, %s539
    %p543 = scmp.eq.s32.totalorder %s26, 0
    %p544 = por %p542, %p543
    %p545 = scmp.ne.s32.totalorder %s537, %s539
    %p546 = scmp.eq.s32.totalorder %s31, 1
    %p547 = por %p545, %p546
    %p548 = scmp.ne.s32.totalorder %s539, %s540
    %p549 = scmp.eq.s32.totalorder %s31, 0
    %p550 = por %p548, %p549
    %p551 = scmp.ne.s32.totalorder %s539, %s540
    %p552 = scmp.eq.s32.totalorder %s32, 1
    %p553 = por %p551, %p552
    %p555 = scmp.ne.s32.totalorder %s540, %s554
    %p556 = scmp.eq.s32.totalorder %s32, 0
    %p557 = por %p555, %p556
    %s558 = ssub.s32 %s33, %s45
    %p559 = scmp.eq.s32.totalorder %s558, 0
    %s561 = sadd.s32 %s560, 1
    %s562 = scalar_select %p559, %s560, %s561
    %p565 = pneg %p559
    %p566 = scmp.eq.s32.totalorder %s26, 1
    %p567 = por %p565, %p566
    %p568 = scmp.ne.s32.totalorder %s560, %s563
    %p569 = scmp.eq.s32.totalorder %s26, 0
    %p570 = por %p568, %p569
    %p571 = scmp.ne.s32.totalorder %s560, %s563
    %p572 = scmp.eq.s32.totalorder %s31, 1
    %p573 = por %p571, %p572
    %p574 = scmp.ne.s32.totalorder %s563, %s564
    %p575 = scmp.eq.s32.totalorder %s31, 0
    %p576 = por %p574, %p575
    %p577 = scmp.ne.s32.totalorder %s563, %s564
    %p578 = scmp.eq.s32.totalorder %s32, 1
    %p579 = por %p577, %p578
    %p581 = scmp.ne.s32.totalorder %s564, %s580
    %p582 = scmp.eq.s32.totalorder %s32, 0
    %p583 = por %p581, %p582
    %p584 = scmp.le.s32.totalorder 1, %s26
    %p585 = scmp.lt.s32.totalorder %s26, 3
    %p586 = pnand %p584, %p585
    %p587 = pneg %p586
    // Predicated region
    $region9: #{decoder_transformer_forward.1} parent=5 // pred_check
      _
    $region10: #{decoder_transformer_forward.1} parent=5 // pred_check_branch
      %589 = sbr.rel (%p586) target = $region12
    $region11: #{decoder_transformer_forward.1} parent=5 // pred_region
      %s590 = ssub.s32 %s26, 1
      // Predicated region
      $region13: #{decoder_transformer_forward.1} parent=11 // pred_check
        %p591 = pneg %p64
      $region14: #{decoder_transformer_forward.1} parent=11 // pred_check_branch
        %593 = sbr.rel (%p591) target = $region16
      $region15: #{decoder_transformer_forward.1} parent=11 // pred_region
        %s594 = smul.u32 2, %s35
        %p595 = scmp.lt.s32.totalorder %s594, 1
        %s596 = scalar_select %p595, %s594, 1
        %s597 = smul.addr %s596, 8
        %s598 = scalar_lea.vmem %s0, %s597
        %s599 = smul.u32 2, %s35
      $region16: #{decoder_transformer_forward.1} parent=11 // pred_fallthru
        _
      // Predicated region
      $region17: #{decoder_transformer_forward.1} parent=11 // pred_check
        %p600 = pneg %p90
      $region18: #{decoder_transformer_forward.1} parent=11 // pred_check_branch
        %602 = sbr.rel (%p600) target = $region20
      $region19: #{decoder_transformer_forward.1} parent=11 // pred_region
        %s603 = smul.u32 2, %s35
        %p604 = scmp.lt.s32.totalorder %s603, 1
        %s605 = scalar_select %p604, %s603, 1
        %s606 = scalar_lea.vmem %s1, %s605
        %s607 = smul.u32 2, %s35
      $region20: #{decoder_transformer_forward.1} parent=11 // pred_fallthru
        _
      // Predicated region
      $region21: #{decoder_transformer_forward.1} parent=11 // pred_check
        %p608 = pneg %p116
      $region22: #{decoder_transformer_forward.1} parent=11 // pred_check_branch
        %610 = sbr.rel (%p608) target = $region24
      $region23: #{decoder_transformer_forward.1} parent=11 // pred_region
        %s611 = smul.u32 2, %s35
        %p612 = scmp.lt.s32.totalorder %s611, 1
        %s613 = scalar_select %p612, %s611, 1
        %s614 = smul.addr %s613, 8
        %s615 = scalar_lea.vmem %s2, %s614
        %s616 = smul.u32 2, %s35
      $region24: #{decoder_transformer_forward.1} parent=11 // pred_fallthru
        _
      // Predicated region
      $region25: #{decoder_transformer_forward.1} parent=11 // pred_check
        %p617 = pneg %p529
      $region26: #{decoder_transformer_forward.1} parent=11 // pred_check_branch
        %619 = sbr.rel (%p617) target = $region28
      $region27: #{decoder_transformer_forward.1} parent=11 // pred_region
        _
      $region28: #{decoder_transformer_forward.1} parent=11 // pred_fallthru
        _
      // Predicated region
      $region29: #{decoder_transformer_forward.1} parent=11 // pred_check
        %p620 = pneg %p550
      $region30: #{decoder_transformer_forward.1} parent=11 // pred_check_branch
        %622 = sbr.rel (%p620) target = $region32
      $region31: #{decoder_transformer_forward.1} parent=11 // pred_region
        _
      $region32: #{decoder_transformer_forward.1} parent=11 // pred_fallthru
        _
    $region12: #{decoder_transformer_forward.1} parent=5 // pred_fallthru
      _
    %p623 = scmp.lt.s32.totalorder %s26, 2
    // Predicated region
    $region33: #{decoder_transformer_forward.1} parent=5 // pred_check
      %p624 = pneg %p623
    $region34: #{decoder_transformer_forward.1} parent=5 // pred_check_branch
      %626 = sbr.rel (%p624) target = $region36
    $region35: #{decoder_transformer_forward.1} parent=5 // pred_region
      // Predicated region
      $region37: #{decoder_transformer_forward.1} parent=35 // pred_check
        %p627 = pneg %p138
      $region38: #{decoder_transformer_forward.1} parent=35 // pred_check_branch
        %629 = sbr.rel (%p627) target = $region40
      $region39: #{decoder_transformer_forward.1} parent=35 // pred_region
        %s630 = smul.u32 2, %s33
        %p631 = scmp.lt.s32.totalorder %s34, 1
        %s632 = scalar_select %p631, %s34, 1
        %p633 = scmp.lt.s32.totalorder %s630, 1
        %s634 = scalar_select %p633, %s630, 1
        %s635 = smul.addr %s632, 2
        %s636 = sadd.s32 %s634, %s635
        %s637 = scalar_lea.vmem %s3, %s636
        %s638 = smul.u32 2, %s33
      $region40: #{decoder_transformer_forward.1} parent=35 // pred_fallthru
        _
      // Predicated region
      $region41: #{decoder_transformer_forward.1} parent=35 // pred_check
        %p639 = pneg %p164
      $region42: #{decoder_transformer_forward.1} parent=35 // pred_check_branch
        %641 = sbr.rel (%p639) target = $region44
      $region43: #{decoder_transformer_forward.1} parent=35 // pred_region
        %p642 = scmp.lt.s32.totalorder %s34, 1
        %s643 = scalar_select %p642, %s34, 1
        %s644 = smul.addr %s643, 48
        %s645 = smul.addr %s644, 8
        %s646 = scalar_lea.vmem %s4, %s645
      $region44: #{decoder_transformer_forward.1} parent=35 // pred_fallthru
        _
      // Predicated region
      $region45: #{decoder_transformer_forward.1} parent=35 // pred_check
        %p647 = pneg %p190
      $region46: #{decoder_transformer_forward.1} parent=35 // pred_check_branch
        %649 = sbr.rel (%p647) target = $region48
      $region47: #{decoder_transformer_forward.1} parent=35 // pred_region
        %p650 = scmp.lt.s32.totalorder %s34, 1
        %s651 = scalar_select %p650, %s34, 1
        %s652 = smul.addr %s651, 3
        %s653 = scalar_lea.vmem %s5, %s652
      $region48: #{decoder_transformer_forward.1} parent=35 // pred_fallthru
        _
      // Predicated region
      $region49: #{decoder_transformer_forward.1} parent=35 // pred_check
        %p654 = pneg %p216
      $region50: #{decoder_transformer_forward.1} parent=35 // pred_check_branch
        %656 = sbr.rel (%p654) target = $region52
      $region51: #{decoder_transformer_forward.1} parent=35 // pred_region
        %p657 = scmp.lt.s32.totalorder %s34, 1
        %s658 = scalar_select %p657, %s34, 1
        %s659 = smul.addr %s658, 16
        %s660 = smul.addr %s659, 8
        %s661 = scalar_lea.vmem %s6, %s660
      $region52: #{decoder_transformer_forward.1} parent=35 // pred_fallthru
        _
      // Predicated region
      $region53: #{decoder_transformer_forward.1} parent=35 // pred_check
        %p662 = pneg %p242
      $region54: #{decoder_transformer_forward.1} parent=35 // pred_check_branch
        %664 = sbr.rel (%p662) target = $region56
      $region55: #{decoder_transformer_forward.1} parent=35 // pred_region
        %p665 = scmp.lt.s32.totalorder %s34, 1
        %s666 = scalar_select %p665, %s34, 1
        %s667 = scalar_lea.vmem %s7, %s666
      $region56: #{decoder_transformer_forward.1} parent=35 // pred_fallthru
        _
      // Predicated region
      $region57: #{decoder_transformer_forward.1} parent=35 // pred_check
        %p668 = pneg %p268
      $region58: #{decoder_transformer_forward.1} parent=35 // pred_check_branch
        %670 = sbr.rel (%p668) target = $region60
      $region59: #{decoder_transformer_forward.1} parent=35 // pred_region
        %p671 = scmp.lt.s32.totalorder %s34, 1
        %s672 = scalar_select %p671, %s34, 1
        %s673 = scalar_lea.vmem %s8, %s672
      $region60: #{decoder_transformer_forward.1} parent=35 // pred_fallthru
        _
      // Predicated region
      $region61: #{decoder_transformer_forward.1} parent=35 // pred_check
        %p674 = pneg %p294
      $region62: #{decoder_transformer_forward.1} parent=35 // pred_check_branch
        %676 = sbr.rel (%p674) target = $region64
      $region63: #{decoder_transformer_forward.1} parent=35 // pred_region
        %p677 = scmp.lt.s32.totalorder %s34, 1
        %s678 = scalar_select %p677, %s34, 1
        %s679 = scalar_lea.vmem %s9, %s678
      $region64: #{decoder_transformer_forward.1} parent=35 // pred_fallthru
        _
      // Predicated region
      $region65: #{decoder_transformer_forward.1} parent=35 // pred_check
        %p680 = pneg %p320
      $region66: #{decoder_transformer_forward.1} parent=35 // pred_check_branch
        %682 = sbr.rel (%p680) target = $region68
      $region67: #{decoder_transformer_forward.1} parent=35 // pred_region
        %p683 = scmp.lt.s32.totalorder %s34, 1
        %s684 = scalar_select %p683, %s34, 1
        %s685 = scalar_lea.vmem %s10, %s684
      $region68: #{decoder_transformer_forward.1} parent=35 // pred_fallthru
        _
      // Predicated region
      $region69: #{decoder_transformer_forward.1} parent=35 // pred_check
        %p686 = pneg %p346
      $region70: #{decoder_transformer_forward.1} parent=35 // pred_check_branch
        %688 = sbr.rel (%p686) target = $region72
      $region71: #{decoder_transformer_forward.1} parent=35 // pred_region
        %p689 = scmp.lt.s32.totalorder %s34, 1
        %s690 = scalar_select %p689, %s34, 1
        %s691 = scalar_lea.vmem %s11, %s690
      $region72: #{decoder_transformer_forward.1} parent=35 // pred_fallthru
        _
      // Predicated region
      $region73: #{decoder_transformer_forward.1} parent=35 // pred_check
        %p692 = pneg %p372
      $region74: #{decoder_transformer_forward.1} parent=35 // pred_check_branch
        %694 = sbr.rel (%p692) target = $region76
      $region75: #{decoder_transformer_forward.1} parent=35 // pred_region
        %p695 = scmp.lt.s32.totalorder %s34, 1
        %s696 = scalar_select %p695, %s34, 1
        %s697 = scalar_lea.vmem %s12, %s696
      $region76: #{decoder_transformer_forward.1} parent=35 // pred_fallthru
        _
      // Predicated region
      $region77: #{decoder_transformer_forward.1} parent=35 // pred_check
        %p698 = pneg %p398
      $region78: #{decoder_transformer_forward.1} parent=35 // pred_check_branch
        %700 = sbr.rel (%p698) target = $region80
      $region79: #{decoder_transformer_forward.1} parent=35 // pred_region
        %p701 = scmp.lt.s32.totalorder %s34, 1
        %s702 = scalar_select %p701, %s34, 1
        %s703 = scalar_lea.vmem %s13, %s702
      $region80: #{decoder_transformer_forward.1} parent=35 // pred_fallthru
        _
      // Predicated region
      $region81: #{decoder_transformer_forward.1} parent=35 // pred_check
        %p704 = pneg %p424
      $region82: #{decoder_transformer_forward.1} parent=35 // pred_check_branch
        %706 = sbr.rel (%p704) target = $region84
      $region83: #{decoder_transformer_forward.1} parent=35 // pred_region
        %p707 = scmp.lt.s32.totalorder %s34, 1
        %s708 = scalar_select %p707, %s34, 1
        %s709 = smul.addr %s708, 32
        %s710 = smul.addr %s709, 8
        %s711 = scalar_lea.vmem %s14, %s710
      $region84: #{decoder_transformer_forward.1} parent=35 // pred_fallthru
        _
      // Predicated region
      $region85: #{decoder_transformer_forward.1} parent=35 // pred_check
        %p712 = pneg %p450
      $region86: #{decoder_transformer_forward.1} parent=35 // pred_check_branch
        %714 = sbr.rel (%p712) target = $region88
      $region87: #{decoder_transformer_forward.1} parent=35 // pred_region
        %p715 = scmp.lt.s32.totalorder %s34, 1
        %s716 = scalar_select %p715, %s34, 1
        %s717 = smul.addr %s716, 2
        %s718 = scalar_lea.vmem %s15, %s717
      $region88: #{decoder_transformer_forward.1} parent=35 // pred_fallthru
        _
      // Predicated region
      $region89: #{decoder_transformer_forward.1} parent=35 // pred_check
        %p719 = pneg %p476
      $region90: #{decoder_transformer_forward.1} parent=35 // pred_check_branch
        %721 = sbr.rel (%p719) target = $region92
      $region91: #{decoder_transformer_forward.1} parent=35 // pred_region
        %p722 = scmp.lt.s32.totalorder %s34, 1
        %s723 = scalar_select %p722, %s34, 1
        %s724 = smul.addr %s723, 32
        %s725 = smul.addr %s724, 8
        %s726 = scalar_lea.vmem %s16, %s725
      $region92: #{decoder_transformer_forward.1} parent=35 // pred_fallthru
        _
      // Predicated region
      $region93: #{decoder_transformer_forward.1} parent=35 // pred_check
        %p727 = pneg %p502
      $region94: #{decoder_transformer_forward.1} parent=35 // pred_check_branch
        %729 = sbr.rel (%p727) target = $region96
      $region95: #{decoder_transformer_forward.1} parent=35 // pred_region
        %p730 = scmp.lt.s32.totalorder %s34, 1
        %s731 = scalar_select %p730, %s34, 1
        %s732 = scalar_lea.vmem %s17, %s731
      $region96: #{decoder_transformer_forward.1} parent=35 // pred_fallthru
        _
    $region36: #{decoder_transformer_forward.1} parent=5 // pred_fallthru
      _
    %p733 = scmp.le.s32.totalorder 1, %s26
    %p734 = scmp.lt.s32.totalorder %s26, 3
    %p735 = pnand %p733, %p734
    %p736 = pneg %p735
    // Predicated region
    $region97: #{decoder_transformer_forward.1} parent=5 // pred_check
      _
    $region98: #{decoder_transformer_forward.1} parent=5 // pred_check_branch
      %738 = sbr.rel (%p735) target = $region100
    $region99: #{decoder_transformer_forward.1} parent=5 // pred_region
      %s739 = ssub.s32 %s26, 1
      %s740 = smul.u32 2, %s35
      %p741 = scmp.lt.s32.totalorder %s740, 1
      %s742 = scalar_select %p741, %s740, 1
      %s743 = smul.addr %s742, 8
      %s744 = scalar_lea.vmem %s0, %s743
      %p745 = pneg %p64
      %p746 = pneg %p61
      %s747 = smul.u32 2, %s35
      %p748 = scmp.lt.s32.totalorder %s747, 1
      %s749 = scalar_select %p748, %s747, 1
      %s750 = scalar_lea.vmem %s1, %s749
      %p751 = pneg %p90
      %p752 = pneg %p87
      %s753 = smul.u32 2, %s35
      %p754 = scmp.lt.s32.totalorder %s753, 1
      %s755 = scalar_select %p754, %s753, 1
      %s756 = smul.addr %s755, 8
      %s757 = scalar_lea.vmem %s2, %s756
      %p758 = pneg %p116
      %p759 = pneg %p113
      %s760 = smul.u32 2, %s35
      %p761 = scmp.lt.s32.totalorder %s36, 1
      %s762 = scalar_select %p761, %s36, 1
      %p763 = scmp.lt.s32.totalorder %s760, 1
      %s764 = scalar_select %p763, %s760, 1
      %s765 = smul.addr %s762, 2
      %s766 = sadd.s32 %s764, %s765
      %s767 = scalar_lea.vmem %s3, %s766
      %p768 = pneg %p144
      %p769 = pneg %p141
      %p770 = scmp.lt.s32.totalorder %s36, 1
      %s771 = scalar_select %p770, %s36, 1
      %s772 = smul.addr %s771, 48
      %s773 = smul.addr %s772, 8
      %s774 = scalar_lea.vmem %s4, %s773
      %p775 = pneg %p170
      %p776 = pneg %p167
      %p777 = scmp.lt.s32.totalorder %s36, 1
      %s778 = scalar_select %p777, %s36, 1
      %s779 = smul.addr %s778, 3
      %s780 = scalar_lea.vmem %s5, %s779
      %p781 = pneg %p196
      %p782 = pneg %p193
      %p783 = scmp.lt.s32.totalorder %s36, 1
      %s784 = scalar_select %p783, %s36, 1
      %s785 = smul.addr %s784, 16
      %s786 = smul.addr %s785, 8
      %s787 = scalar_lea.vmem %s6, %s786
      %p788 = pneg %p222
      %p789 = pneg %p219
      %p790 = scmp.lt.s32.totalorder %s36, 1
      %s791 = scalar_select %p790, %s36, 1
      %s792 = scalar_lea.vmem %s7, %s791
      %p793 = pneg %p248
      %p794 = pneg %p245
      %p795 = scmp.lt.s32.totalorder %s36, 1
      %s796 = scalar_select %p795, %s36, 1
      %s797 = scalar_lea.vmem %s8, %s796
      %p798 = pneg %p274
      %p799 = pneg %p271
      %p800 = scmp.lt.s32.totalorder %s36, 1
      %s801 = scalar_select %p800, %s36, 1
      %s802 = scalar_lea.vmem %s9, %s801
      %p803 = pneg %p300
      %p804 = pneg %p297
      %p805 = scmp.lt.s32.totalorder %s36, 1
      %s806 = scalar_select %p805, %s36, 1
      %s807 = scalar_lea.vmem %s10, %s806
      %p808 = pneg %p326
      %p809 = pneg %p323
      %p810 = scmp.lt.s32.totalorder %s36, 1
      %s811 = scalar_select %p810, %s36, 1
      %s812 = scalar_lea.vmem %s11, %s811
      %p813 = pneg %p352
      %p814 = pneg %p349
      %p815 = scmp.lt.s32.totalorder %s36, 1
      %s816 = scalar_select %p815, %s36, 1
      %s817 = scalar_lea.vmem %s12, %s816
      %p818 = pneg %p378
      %p819 = pneg %p375
      %p820 = scmp.lt.s32.totalorder %s36, 1
      %s821 = scalar_select %p820, %s36, 1
      %s822 = scalar_lea.vmem %s13, %s821
      %p823 = pneg %p404
      %p824 = pneg %p401
      %p825 = scmp.lt.s32.totalorder %s36, 1
      %s826 = scalar_select %p825, %s36, 1
      %s827 = smul.addr %s826, 32
      %s828 = smul.addr %s827, 8
      %s829 = scalar_lea.vmem %s14, %s828
      %p830 = pneg %p430
      %p831 = pneg %p427
      %p832 = scmp.lt.s32.totalorder %s36, 1
      %s833 = scalar_select %p832, %s36, 1
      %s834 = smul.addr %s833, 2
      %s835 = scalar_lea.vmem %s15, %s834
      %p836 = pneg %p456
      %p837 = pneg %p453
      %p838 = scmp.lt.s32.totalorder %s36, 1
      %s839 = scalar_select %p838, %s36, 1
      %s840 = smul.addr %s839, 32
      %s841 = smul.addr %s840, 8
      %s842 = scalar_lea.vmem %s16, %s841
      %p843 = pneg %p482
      %p844 = pneg %p479
      %p845 = scmp.lt.s32.totalorder %s36, 1
      %s846 = scalar_select %p845, %s36, 1
      %s847 = scalar_lea.vmem %s17, %s846
      %p848 = pneg %p508
      %p849 = pneg %p505
      %p850 = pneg %p529
      %p851 = pneg %p526
      %p852 = pneg %p550
      %p853 = pneg %p547
      %p854 = pneg %p576
      %p855 = pneg %p573
      %s856 = smul.u32 2, %s35
      %p857 = scmp.lt.s32.totalorder %s856, 1
      %s858 = scalar_select %p857, %s856, 1
      %s859 = smul.addr %s858, 8
      %s860 = scalar_lea.vmem %s20, %s859
      %s861 = smul.u32 2, %s35
      %p862 = scmp.lt.s32.totalorder %s861, 1
      %s863 = scalar_select %p862, %s861, 1
      %s864 = smul.addr %s863, 8
      %s865 = scalar_lea.vmem %s0, %s864
      %s866 = smul.u32 2, %s35
      %s867 = smul.u32 2, %s35
      %p868 = scmp.lt.s32.totalorder %s867, 1
      %s869 = scalar_select %p868, %s867, 1
      %s870 = scalar_lea.vmem %s1, %s869
      %s871 = smul.u32 2, %s35
      %s872 = smul.u32 2, %s35
      %p873 = scmp.lt.s32.totalorder %s872, 1
      %s874 = scalar_select %p873, %s872, 1
      %s875 = smul.addr %s874, 8
      %s876 = scalar_lea.vmem %s2, %s875
      %s877 = smul.u32 2, %s35
      %s878 = smul.u32 2, %s35
      %p879 = scmp.lt.s32.totalorder %s36, 1
      %s880 = scalar_select %p879, %s36, 1
      %p881 = scmp.lt.s32.totalorder %s878, 1
      %s882 = scalar_select %p881, %s878, 1
      %s883 = smul.addr %s880, 2
      %s884 = sadd.s32 %s882, %s883
      %s885 = scalar_lea.vmem %s3, %s884
      %s886 = smul.u32 2, %s35
      %p887 = scmp.lt.s32.totalorder %s36, 1
      %s888 = scalar_select %p887, %s36, 1
      %s889 = smul.addr %s888, 48
      %s890 = smul.addr %s889, 8
      %s891 = scalar_lea.vmem %s4, %s890
      %p892 = scmp.lt.s32.totalorder %s36, 1
      %s893 = scalar_select %p892, %s36, 1
      %s894 = smul.addr %s893, 3
      %s895 = scalar_lea.vmem %s5, %s894
      %p896 = scmp.lt.s32.totalorder %s36, 1
      %s897 = scalar_select %p896, %s36, 1
      %s898 = smul.addr %s897, 16
      %s899 = smul.addr %s898, 8
      %s900 = scalar_lea.vmem %s6, %s899
      %p901 = scmp.lt.s32.totalorder %s36, 1
      %s902 = scalar_select %p901, %s36, 1
      %s903 = scalar_lea.vmem %s7, %s902
      %p904 = scmp.lt.s32.totalorder %s36, 1
      %s905 = scalar_select %p904, %s36, 1
      %s906 = scalar_lea.vmem %s8, %s905
      %p907 = scmp.lt.s32.totalorder %s36, 1
      %s908 = scalar_select %p907, %s36, 1
      %s909 = scalar_lea.vmem %s9, %s908
      %p910 = scmp.lt.s32.totalorder %s36, 1
      %s911 = scalar_select %p910, %s36, 1
      %s912 = scalar_lea.vmem %s10, %s911
      %p913 = scmp.lt.s32.totalorder %s36, 1
      %s914 = scalar_select %p913, %s36, 1
      %s915 = scalar_lea.vmem %s11, %s914
      %p916 = scmp.lt.s32.totalorder %s36, 1
      %s917 = scalar_select %p916, %s36, 1
      %s918 = scalar_lea.vmem %s12, %s917
      %p919 = scmp.lt.s32.totalorder %s36, 1
      %s920 = scalar_select %p919, %s36, 1
      %s921 = scalar_lea.vmem %s13, %s920
      %p922 = scmp.lt.s32.totalorder %s36, 1
      %s923 = scalar_select %p922, %s36, 1
      %s924 = smul.addr %s923, 32
      %s925 = smul.addr %s924, 8
      %s926 = scalar_lea.vmem %s14, %s925
      %p927 = scmp.lt.s32.totalorder %s36, 1
      %s928 = scalar_select %p927, %s36, 1
      %s929 = smul.addr %s928, 2
      %s930 = scalar_lea.vmem %s15, %s929
      %p931 = scmp.lt.s32.totalorder %s36, 1
      %s932 = scalar_select %p931, %s36, 1
      %s933 = smul.addr %s932, 32
      %s934 = smul.addr %s933, 8
      %s935 = scalar_lea.vmem %s16, %s934
      %p936 = scmp.lt.s32.totalorder %s36, 1
      %s937 = scalar_select %p936, %s36, 1
      %s938 = scalar_lea.vmem %s17, %s937
      %s939 = smul.u32 2, %s35
      %p940 = scmp.lt.s32.totalorder %s939, 1
      %s941 = scalar_select %p940, %s939, 1
      %s942 = smul.addr %s941, 8
      %s943 = scalar_lea.vmem %s20, %s942
      %s944 = smul.u32 2, %s35
      %p945 = scmp.eq.s32.totalorder %s36, 0
      // Predicated region
      $region101: #{decoder_transformer_forward.1} parent=99 // pred_check
        %p946 = pneg %p945
      $region102: #{decoder_transformer_forward.1} parent=99 // pred_check_branch
        %948 = sbr.rel (%p946) target = $region104
      $region103: #{decoder_transformer_forward.1} parent=99 // pred_region
        %v949 = vld [vmem:[%s865] sm:$0xff]
        %v950 = vld [vmem:[%s865 + $0x8] sm:$0xff]
        %951 = vst [vmem:[#allocation2] sm:$0xff] %v949
        %952 = vst [vmem:[#allocation2 + $0x8] sm:$0xff] %v950
      $region104: #{decoder_transformer_forward.1} parent=99 // pred_fallthru
        _
      %v953 = vld [vmem:[#allocation2] sm:$0xff]
      %v954 = vld [vmem:[#allocation2 + $0x8] sm:$0xff]
      %v955 = vld [vmem:[%s891] sm:$0xff]
      %v956 = vld [vmem:[%s891 + $0x8] sm:$0xff]
      %v957 = vld [vmem:[%s891 + $0x10] sm:$0xff]
      %v958 = vld [vmem:[%s891 + $0x18] sm:$0xff]
      %v959 = vld [vmem:[%s891 + $0x20] sm:$0xff]
      %v960 = vld [vmem:[%s891 + $0x28] sm:$0xff]
      %v961 = vld [vmem:[%s891 + $0x30] sm:$0xff]
      %v962 = vld [vmem:[%s891 + $0x38] sm:$0xff]
      %v963 = vld [vmem:[%s891 + $0x40] sm:$0xff]
      %v964 = vld [vmem:[%s891 + $0x48] sm:$0xff]
      %v965 = vld [vmem:[%s891 + $0x50] sm:$0xff]
      %v966 = vld [vmem:[%s891 + $0x58] sm:$0xff]
      %v967 = vld [vmem:[%s891 + $0x60] sm:$0xff]
      %v968 = vld [vmem:[%s891 + $0x68] sm:$0xff]
      %v969 = vld [vmem:[%s891 + $0x70] sm:$0xff]
      %v970 = vld [vmem:[%s891 + $0x78] sm:$0xff]
      %v971 = vld [vmem:[%s891 + $0x80] sm:$0xff]
      %v972 = vld [vmem:[%s891 + $0x88] sm:$0xff]
      %v973 = vld [vmem:[%s891 + $0x90] sm:$0xff]
      %v974 = vld [vmem:[%s891 + $0x98] sm:$0xff]
      %v975 = vld [vmem:[%s891 + $0xa0] sm:$0xff]
      %v976 = vld [vmem:[%s891 + $0xa8] sm:$0xff]
      %v977 = vld [vmem:[%s891 + $0xb0] sm:$0xff]
      %v978 = vld [vmem:[%s891 + $0xb8] sm:$0xff]
      %v979 = vld [vmem:[%s891 + $0xc0] sm:$0xff]
      %v980 = vld [vmem:[%s891 + $0xc8] sm:$0xff]
      %v981 = vld [vmem:[%s891 + $0xd0] sm:$0xff]
      %v982 = vld [vmem:[%s891 + $0xd8] sm:$0xff]
      %v983 = vld [vmem:[%s891 + $0xe0] sm:$0xff]
      %v984 = vld [vmem:[%s891 + $0xe8] sm:$0xff]
      %v985 = vld [vmem:[%s891 + $0xf0] sm:$0xff]
      %v986 = vld [vmem:[%s891 + $0xf8] sm:$0xff]
      %v987 = vld [vmem:[%s891 + $0x100] sm:$0xff]
      %v988 = vld [vmem:[%s891 + $0x108] sm:$0xff]
      %v989 = vld [vmem:[%s891 + $0x110] sm:$0xff]
      %v990 = vld [vmem:[%s891 + $0x118] sm:$0xff]
      %v991 = vld [vmem:[%s891 + $0x120] sm:$0xff]
      %v992 = vld [vmem:[%s891 + $0x128] sm:$0xff]
      %v993 = vld [vmem:[%s891 + $0x130] sm:$0xff]
      %v994 = vld [vmem:[%s891 + $0x138] sm:$0xff]
      %v995 = vld [vmem:[%s891 + $0x140] sm:$0xff]
      %v996 = vld [vmem:[%s891 + $0x148] sm:$0xff]
      %v997 = vld [vmem:[%s891 + $0x150] sm:$0xff]
      %v998 = vld [vmem:[%s891 + $0x158] sm:$0xff]
      %v999 = vld [vmem:[%s891 + $0x160] sm:$0xff]
      %v1000 = vld [vmem:[%s891 + $0x168] sm:$0xff]
      %v1001 = vld [vmem:[%s891 + $0x170] sm:$0xff]
      %v1002 = vld [vmem:[%s891 + $0x178] sm:$0xff]
      %v1003 = vld [vmem:[%s895] sm:$0x7]
      %v1005 = vlaneseq
      %v1006 = vshrl.u32 %v1005, 7
      %v1007 = vsub.s32 0, %v1006
      %v1008 = vrot.slane %v1003, %v1007
      %v1009 = vlaneseq
      %v1010 = vshrl.u32 %v1009, 7
      %v1011 = vsub.s32 1, %v1010
      %v1012 = vrot.slane %v1003, %v1011
      %v1013 = vlaneseq
      %v1014 = vshrl.u32 %v1013, 7
      %v1015 = vsub.s32 2, %v1014
      %v1016 = vrot.slane %v1003, %v1015
      %1020 = vmatprep.subr.mxu0 %v956
      %1021 = vmatpush1.msra.mxu0 %v955
      %1022 = vmatprep.subr.mxu0 %v959
      %1023 = vmatpush1.msra.mxu0 %v958
      %1024 = vmatprep.subr.mxu0 %v962
      %1025 = vmatpush1.msra.mxu0 %v961
      %1026 = vmatprep.subr.mxu0 %v965
      %1027 = vmatpush1.msra.mxu0 %v964
      %1028 = vmatprep.subr.mxu0 %v968
      %1029 = vmatpush1.msra.mxu0 %v967
      %1030 = vmatprep.subr.mxu0 %v971
      %1031 = vmatpush1.msra.mxu0 %v970
      %1032 = vmatprep.subr.mxu0 %v974
      %1033 = vmatpush1.msra.mxu0 %v973
      %1034 = vmatprep.subr.mxu0 %v977
      %1035 = vmatpush1.msra.mxu0 %v976
      %1036 = vmatprep.subr.mxu0 %v980
      %1037 = vmatpush1.msra.mxu0 %v979
      %1038 = vmatprep.subr.mxu0 %v983
      %1039 = vmatpush1.msra.mxu0 %v982
      %1040 = vmatprep.subr.mxu0 %v986
      %1041 = vmatpush1.msra.mxu0 %v985
      %1042 = vmatprep.subr.mxu0 %v989
      %1043 = vmatpush1.msra.mxu0 %v988
      %1044 = vmatprep.subr.mxu0 %v992
      %1045 = vmatpush1.msra.mxu0 %v991
      %1046 = vmatprep.subr.mxu0 %v995
      %1047 = vmatpush1.msra.mxu0 %v994
      %1048 = vmatprep.subr.mxu0 %v998
      %1049 = vmatpush1.msra.mxu0 %v997
      %1050 = vmatprep.subr.mxu0 %v1001
      %1051 = vmatpush1.msra.mxu0 %v1000
      %1052 = vmatprep.subr.mxu0 0.0
      %1053 = vmatpush1.msra.mxu0 0.0
      %1054 = vmatprep.subr.mxu0 0.0
      %1055 = vmatpush1.msra.mxu0 0.0
      %1056 = vmatprep.subr.mxu0 0.0
      %1057 = vmatpush1.msra.mxu0 0.0
      %1058 = vmatprep.subr.mxu0 0.0
      %1059 = vmatpush1.msra.mxu0 0.0
      %1060 = vmatprep.subr.mxu0 0.0
      %1061 = vmatpush1.msra.mxu0 0.0
      %1062 = vmatprep.subr.mxu0 0.0
      %1063 = vmatpush1.msra.mxu0 0.0
      %1064 = vmatprep.subr.mxu0 0.0
      %1065 = vmatpush1.msra.mxu0 0.0
      %1066 = vmatprep.subr.mxu0 0.0
      %1067 = vmatpush1.msra.mxu0 0.0
      %1068 = vmatprep.subr.mxu0 0.0
      %1069 = vmatpush1.msra.mxu0 0.0
      %1070 = vmatprep.subr.mxu0 0.0
      %1071 = vmatpush1.msra.mxu0 0.0
      %1072 = vmatprep.subr.mxu0 0.0
      %1073 = vmatpush1.msra.mxu0 0.0
      %1074 = vmatprep.subr.mxu0 0.0
      %1075 = vmatpush1.msra.mxu0 0.0
      %1076 = vmatprep.subr.mxu0 0.0
      %1077 = vmatpush1.msra.mxu0 0.0
      %1078 = vmatprep.subr.mxu0 0.0
      %1079 = vmatpush1.msra.mxu0 0.0
      %1080 = vmatprep.subr.mxu0 0.0
      %1081 = vmatpush1.msra.mxu0 0.0
      %1082 = vmatprep.subr.mxu0 0.0
      %1083 = vmatpush1.msra.mxu0 0.0
      %1084 = vmatprep.mubr.f32.mxu0 0.0
      %1085 = vmatmul.mubr.f32.gmra.mrb[0].mxu0 %v953
      %v1086 = vpop.f32.mrb[0].mxu0
      %v1087 = vadd.f32 %v1008, %v1086
      %v1088 = vpop.f32.mrb[0].mxu0
      %v1089 = vadd.f32 %v1012, %v1088
      %1090 = vmatprep.mubr.f32.mxu0 0.0
      %1091 = vmatmul.mubr.f32.gmra.mrb[0].mxu0 %v954
      %v1092 = vpop.f32.mrb[0].mxu0
      %v1093 = vadd.f32 %v1008, %v1092
      %v1094 = vpop.f32.mrb[0].mxu0
      %v1095 = vadd.f32 %v1012, %v1094
      %1096 = vdwg.mxu0
      %1097 = vmatprep.subr.mxu0 0.0
      %1098 = vmatpush1.msra.mxu0 %v957
      %1099 = vmatprep.subr.mxu0 0.0
      %1100 = vmatpush1.msra.mxu0 %v960
      %1101 = vmatprep.subr.mxu0 0.0
      %1102 = vmatpush1.msra.mxu0 %v963
      %1103 = vmatprep.subr.mxu0 0.0
      %1104 = vmatpush1.msra.mxu0 %v966
      %1105 = vmatprep.subr.mxu0 0.0
      %1106 = vmatpush1.msra.mxu0 %v969
      %1107 = vmatprep.subr.mxu0 0.0
      %1108 = vmatpush1.msra.mxu0 %v972
      %1109 = vmatprep.subr.mxu0 0.0
      %1110 = vmatpush1.msra.mxu0 %v975
      %1111 = vmatprep.subr.mxu0 0.0
      %1112 = vmatpush1.msra.mxu0 %v978
      %1113 = vmatprep.subr.mxu0 0.0
      %1114 = vmatpush1.msra.mxu0 %v981
      %1115 = vmatprep.subr.mxu0 0.0
      %1116 = vmatpush1.msra.mxu0 %v984
      %1117 = vmatprep.subr.mxu0 0.0
      %1118 = vmatpush1.msra.mxu0 %v987
      %1119 = vmatprep.subr.mxu0 0.0
      %1120 = vmatpush1.msra.mxu0 %v990
      %1121 = vmatprep.subr.mxu0 0.0
      %1122 = vmatpush1.msra.mxu0 %v993
      %1123 = vmatprep.subr.mxu0 0.0
      %1124 = vmatpush1.msra.mxu0 %v996
      %1125 = vmatprep.subr.mxu0 0.0
      %1126 = vmatpush1.msra.mxu0 %v999
      %1127 = vmatprep.subr.mxu0 0.0
      %1128 = vmatpush1.msra.mxu0 %v1002
      %1129 = vmatprep.subr.mxu0 0.0
      %1130 = vmatpush1.msra.mxu0 0.0
      %1131 = vmatprep.subr.mxu0 0.0
      %1132 = vmatpush1.msra.mxu0 0.0
      %1133 = vmatprep.subr.mxu0 0.0
      %1134 = vmatpush1.msra.mxu0 0.0
      %1135 = vmatprep.subr.mxu0 0.0
      %1136 = vmatpush1.msra.mxu0 0.0
      %1137 = vmatprep.subr.mxu0 0.0
      %1138 = vmatpush1.msra.mxu0 0.0
      %1139 = vmatprep.subr.mxu0 0.0
      %1140 = vmatpush1.msra.mxu0 0.0
      %1141 = vmatprep.subr.mxu0 0.0
      %1142 = vmatpush1.msra.mxu0 0.0
      %1143 = vmatprep.subr.mxu0 0.0
      %1144 = vmatpush1.msra.mxu0 0.0
      %1145 = vmatprep.subr.mxu0 0.0
      %1146 = vmatpush1.msra.mxu0 0.0
      %1147 = vmatprep.subr.mxu0 0.0
      %1148 = vmatpush1.msra.mxu0 0.0
      %1149 = vmatprep.subr.mxu0 0.0
      %1150 = vmatpush1.msra.mxu0 0.0
      %1151 = vmatprep.subr.mxu0 0.0
      %1152 = vmatpush1.msra.mxu0 0.0
      %1153 = vmatprep.subr.mxu0 0.0
      %1154 = vmatpush1.msra.mxu0 0.0
      %1155 = vmatprep.subr.mxu0 0.0
      %1156 = vmatpush1.msra.mxu0 0.0
      %1157 = vmatprep.subr.mxu0 0.0
      %1158 = vmatpush1.msra.mxu0 0.0
      %1159 = vmatprep.subr.mxu0 0.0
      %1160 = vmatpush1.msra.mxu0 0.0
      %1161 = vmatprep.mubr.f32.mxu0 0.0
      %1162 = vmatmul.mubr.f32.gmra.mrb[0].mxu0 %v953
      %v1163 = vpop.f32.mrb[0].mxu0
      %v1164 = vadd.f32 %v1016, %v1163
      %v1165 = vpop.f32.mrb[0].mxu0
      %1166 = vmatprep.mubr.f32.mxu0 0.0
      %1167 = vmatmul.mubr.f32.gmra.mrb[0].mxu0 %v954
      %v1168 = vpop.f32.mrb[0].mxu0
      %v1169 = vadd.f32 %v1016, %v1168
      %v1170 = vpop.f32.mrb[0].mxu0
      %1171 = vdwg.mxu0
      %v1172 = vld [vmem:[%s870] sm:$0x1]
      %v1174 = vlaneseq
      %v1175 = vshrl.u32 %v1174, 7
      %v1176 = vsub.s32 0, %v1175
      %v1177 = vrot.slane %v1172, %v1176
      %vm1179 = vcmask 261120
      %v1181 = vsel %vm1179, %v1087, 0
      %v1184 = vsel %vm1179, %v1089, 0
      %1186 = vmatprep.subr.mxu0 0.0
      %1187 = vmatpush1.xpose.msra.mxu0 %v1184
      %1188 = vmatprep.subr.mxu0 0.0
      %1189 = vmatpush1.xpose.msra.mxu0 0.0
      %1190 = vmatprep.subr.mxu0 0.0
      %1191 = vmatpush1.xpose.msra.mxu0 0.0
      %1192 = vmatprep.subr.mxu0 0.0
      %1193 = vmatpush1.xpose.msra.mxu0 0.0
      %1194 = vmatprep.subr.mxu0 0.0
      %1195 = vmatpush1.xpose.msra.mxu0 0.0
      %1196 = vmatprep.subr.mxu0 0.0
      %1197 = vmatpush1.xpose.msra.mxu0 0.0
      %1198 = vmatprep.subr.mxu0 0.0
      %1199 = vmatpush1.xpose.msra.mxu0 0.0
      %1200 = vmatprep.subr.mxu0 0.0
      %1201 = vmatpush1.xpose.msra.mxu0 0.0
      %1202 = vmatprep.subr.mxu0 0.0
      %1203 = vmatpush1.xpose.msra.mxu0 0.0
      %1204 = vmatprep.subr.mxu0 0.0
      %1205 = vmatpush1.xpose.msra.mxu0 0.0
      %1206 = vmatprep.subr.mxu0 0.0
      %1207 = vmatpush1.xpose.msra.mxu0 0.0
      %1208 = vmatprep.subr.mxu0 0.0
      %1209 = vmatpush1.xpose.msra.mxu0 0.0
      %1210 = vmatprep.subr.mxu0 0.0
      %1211 = vmatpush1.xpose.msra.mxu0 0.0
      %1212 = vmatprep.subr.mxu0 0.0
      %1213 = vmatpush1.xpose.msra.mxu0 0.0
      %1214 = vmatprep.subr.mxu0 0.0
      %1215 = vmatpush1.xpose.msra.mxu0 0.0
      %1216 = vmatprep.subr.mxu0 0.0
      %1217 = vmatpush1.xpose.msra.mxu0 0.0
      %1218 = vmatprep.subr.mxu0 0.0
      %1219 = vmatpush1.xpose.msra.mxu0 0.0
      %1220 = vmatprep.subr.mxu0 0.0
      %1221 = vmatpush1.xpose.msra.mxu0 0.0
      %1222 = vmatprep.subr.mxu0 0.0
      %1223 = vmatpush1.xpose.msra.mxu0 0.0
      %1224 = vmatprep.subr.mxu0 0.0
      %1225 = vmatpush1.xpose.msra.mxu0 0.0
      %1226 = vmatprep.subr.mxu0 0.0
      %1227 = vmatpush1.xpose.msra.mxu0 0.0
      %1228 = vmatprep.subr.mxu0 0.0
      %1229 = vmatpush1.xpose.msra.mxu0 0.0
      %1230 = vmatprep.subr.mxu0 0.0
      %1231 = vmatpush1.xpose.msra.mxu0 0.0
      %1232 = vmatprep.subr.mxu0 0.0
      %1233 = vmatpush1.xpose.msra.mxu0 0.0
      %1234 = vmatprep.subr.mxu0 0.0
      %1235 = vmatpush1.xpose.msra.mxu0 0.0
      %1236 = vmatprep.subr.mxu0 0.0
      %1237 = vmatpush1.xpose.msra.mxu0 0.0
      %1238 = vmatprep.subr.mxu0 0.0
      %1239 = vmatpush1.xpose.msra.mxu0 0.0
      %1240 = vmatprep.subr.mxu0 0.0
      %1241 = vmatpush1.xpose.msra.mxu0 0.0
      %1242 = vmatprep.subr.mxu0 0.0
      %1243 = vmatpush1.xpose.msra.mxu0 0.0
      %1244 = vmatprep.subr.mxu0 0.0
      %1245 = vmatpush1.xpose.msra.mxu0 0.0
      %1246 = vmatprep.subr.mxu0 0.0
      %1247 = vmatpush1.xpose.msra.mxu0 0.0
      %1248 = vmatprep.subr.mxu0 0.0
      %1249 = vmatpush1.xpose.msra.mxu0 0.0
      %1250 = vmatprep.mubr.f32.mxu0 0.0
      %1251 = vmatmul.mubr.f32.gmra.mrb[0].mxu0 %v1181
      %v1252 = vpop.f32.mrb[0].mxu0
      %v1253 = vadd.f32 %v1177, %v1252
      %v1254 = vpop.f32.mrb[0].mxu0
      %1255 = vdwg.mxu0
      %vm1256 = vcmask 64512
      %v1257 = vsel %vm1256, %v1253, -inf
      %1258 = vmax.xlane.f32.xlu0 %v1257
      %v1259 = vpop.xlane.xlu0 %1258
      %v1260 = vsub.f32 %v1253, %v1259
      %v1261 = vmul.f32 %v1260, 1.442695
      %v1262 = vpow.pop %v1261
      %v1263 = vsel %vm1256, %v1262, 0.0
      %1264 = vadd.xlane.f32.xlu0 %v1263
      %v1265 = vpop.xlane.xlu0 %1264
      %v1266 = vrcp.pop %v1265
      %v1267 = vmul.f32 %v1262, %v1266
      %v1269 = vsel %vm1256, %v1267, 0
      %1271 = vmatprep.subr.mxu0 0.0
      %1272 = vmatpush1.msra.mxu0 %v1164
      %1273 = vmatprep.subr.mxu0 0.0
      %1274 = vmatpush1.msra.mxu0 0.0
      %1275 = vmatprep.subr.mxu0 0.0
      %1276 = vmatpush1.msra.mxu0 0.0
      %1277 = vmatprep.subr.mxu0 0.0
      %1278 = vmatpush1.msra.mxu0 0.0
      %1279 = vmatprep.subr.mxu0 0.0
      %1280 = vmatpush1.msra.mxu0 0.0
      %1281 = vmatprep.subr.mxu0 0.0
      %1282 = vmatpush1.msra.mxu0 0.0
      %1283 = vmatprep.subr.mxu0 0.0
      %1284 = vmatpush1.msra.mxu0 0.0
      %1285 = vmatprep.subr.mxu0 0.0
      %1286 = vmatpush1.msra.mxu0 0.0
      %1287 = vmatprep.subr.mxu0 0.0
      %1288 = vmatpush1.msra.mxu0 0.0
      %1289 = vmatprep.subr.mxu0 0.0
      %1290 = vmatpush1.msra.mxu0 0.0
      %1291 = vmatprep.subr.mxu0 0.0
      %1292 = vmatpush1.msra.mxu0 0.0
      %1293 = vmatprep.subr.mxu0 0.0
      %1294 = vmatpush1.msra.mxu0 0.0
      %1295 = vmatprep.subr.mxu0 0.0
      %1296 = vmatpush1.msra.mxu0 0.0
      %1297 = vmatprep.subr.mxu0 0.0
      %1298 = vmatpush1.msra.mxu0 0.0
      %1299 = vmatprep.subr.mxu0 0.0
      %1300 = vmatpush1.msra.mxu0 0.0
      %1301 = vmatprep.subr.mxu0 0.0
      %1302 = vmatpush1.msra.mxu0 0.0
      %1303 = vmatprep.subr.mxu0 0.0
      %1304 = vmatpush1.msra.mxu0 0.0
      %1305 = vmatprep.subr.mxu0 0.0
      %1306 = vmatpush1.msra.mxu0 0.0
      %1307 = vmatprep.subr.mxu0 0.0
      %1308 = vmatpush1.msra.mxu0 0.0
      %1309 = vmatprep.subr.mxu0 0.0
      %1310 = vmatpush1.msra.mxu0 0.0
      %1311 = vmatprep.subr.mxu0 0.0
      %1312 = vmatpush1.msra.mxu0 0.0
      %1313 = vmatprep.subr.mxu0 0.0
      %1314 = vmatpush1.msra.mxu0 0.0
      %1315 = vmatprep.subr.mxu0 0.0
      %1316 = vmatpush1.msra.mxu0 0.0
      %1317 = vmatprep.subr.mxu0 0.0
      %1318 = vmatpush1.msra.mxu0 0.0
      %1319 = vmatprep.subr.mxu0 0.0
      %1320 = vmatpush1.msra.mxu0 0.0
      %1321 = vmatprep.subr.mxu0 0.0
      %1322 = vmatpush1.msra.mxu0 0.0
      %1323 = vmatprep.subr.mxu0 0.0
      %1324 = vmatpush1.msra.mxu0 0.0
      %1325 = vmatprep.subr.mxu0 0.0
      %1326 = vmatpush1.msra.mxu0 0.0
      %1327 = vmatprep.subr.mxu0 0.0
      %1328 = vmatpush1.msra.mxu0 0.0
      %1329 = vmatprep.subr.mxu0 0.0
      %1330 = vmatpush1.msra.mxu0 0.0
      %1331 = vmatprep.subr.mxu0 0.0
      %1332 = vmatpush1.msra.mxu0 0.0
      %1333 = vmatprep.subr.mxu0 0.0
      %1334 = vmatpush1.msra.mxu0 0.0
      %1335 = vmatprep.mubr.f32.mxu0 0.0
      %1336 = vmatmul.mubr.f32.gmra.mrb[0].mxu0 %v1269
      %v1337 = vpop.f32.mrb[0].mxu0
      %v1338 = vadd.f32 0.0, %v1337
      %v1339 = vpop.f32.mrb[0].mxu0
      %1340 = vdwg.mxu0
      %1341 = vrot.lane.b32.xlu0 %v1087, 96
      %v1342 = vpop.permute.xlu0 %1341
      %1343 = vrot.lane.b32.xlu0 %v1089, 96
      %v1344 = vpop.permute.xlu0 %1343
      %v1345 = vsel %vm1179, %v1342, 0
      %v1347 = vsel %vm1179, %v1344, 0
      %1349 = vmatprep.subr.mxu0 0.0
      %1350 = vmatpush1.xpose.msra.mxu0 %v1347
      %1351 = vmatprep.subr.mxu0 0.0
      %1352 = vmatpush1.xpose.msra.mxu0 0.0
      %1353 = vmatprep.subr.mxu0 0.0
      %1354 = vmatpush1.xpose.msra.mxu0 0.0
      %1355 = vmatprep.subr.mxu0 0.0
      %1356 = vmatpush1.xpose.msra.mxu0 0.0
      %1357 = vmatprep.subr.mxu0 0.0
      %1358 = vmatpush1.xpose.msra.mxu0 0.0
      %1359 = vmatprep.subr.mxu0 0.0
      %1360 = vmatpush1.xpose.msra.mxu0 0.0
      %1361 = vmatprep.subr.mxu0 0.0
      %1362 = vmatpush1.xpose.msra.mxu0 0.0
      %1363 = vmatprep.subr.mxu0 0.0
      %1364 = vmatpush1.xpose.msra.mxu0 0.0
      %1365 = vmatprep.subr.mxu0 0.0
      %1366 = vmatpush1.xpose.msra.mxu0 0.0
      %1367 = vmatprep.subr.mxu0 0.0
      %1368 = vmatpush1.xpose.msra.mxu0 0.0
      %1369 = vmatprep.subr.mxu0 0.0
      %1370 = vmatpush1.xpose.msra.mxu0 0.0
      %1371 = vmatprep.subr.mxu0 0.0
      %1372 = vmatpush1.xpose.msra.mxu0 0.0
      %1373 = vmatprep.subr.mxu0 0.0
      %1374 = vmatpush1.xpose.msra.mxu0 0.0
      %1375 = vmatprep.subr.mxu0 0.0
      %1376 = vmatpush1.xpose.msra.mxu0 0.0
      %1377 = vmatprep.subr.mxu0 0.0
      %1378 = vmatpush1.xpose.msra.mxu0 0.0
      %1379 = vmatprep.subr.mxu0 0.0
      %1380 = vmatpush1.xpose.msra.mxu0 0.0
      %1381 = vmatprep.subr.mxu0 0.0
      %1382 = vmatpush1.xpose.msra.mxu0 0.0
      %1383 = vmatprep.subr.mxu0 0.0
      %1384 = vmatpush1.xpose.msra.mxu0 0.0
      %1385 = vmatprep.subr.mxu0 0.0
      %1386 = vmatpush1.xpose.msra.mxu0 0.0
      %1387 = vmatprep.subr.mxu0 0.0
      %1388 = vmatpush1.xpose.msra.mxu0 0.0
      %1389 = vmatprep.subr.mxu0 0.0
      %1390 = vmatpush1.xpose.msra.mxu0 0.0
      %1391 = vmatprep.subr.mxu0 0.0
      %1392 = vmatpush1.xpose.msra.mxu0 0.0
      %1393 = vmatprep.subr.mxu0 0.0
      %1394 = vmatpush1.xpose.msra.mxu0 0.0
      %1395 = vmatprep.subr.mxu0 0.0
      %1396 = vmatpush1.xpose.msra.mxu0 0.0
      %1397 = vmatprep.subr.mxu0 0.0
      %1398 = vmatpush1.xpose.msra.mxu0 0.0
      %1399 = vmatprep.subr.mxu0 0.0
      %1400 = vmatpush1.xpose.msra.mxu0 0.0
      %1401 = vmatprep.subr.mxu0 0.0
      %1402 = vmatpush1.xpose.msra.mxu0 0.0
      %1403 = vmatprep.subr.mxu0 0.0
      %1404 = vmatpush1.xpose.msra.mxu0 0.0
      %1405 = vmatprep.subr.mxu0 0.0
      %1406 = vmatpush1.xpose.msra.mxu0 0.0
      %1407 = vmatprep.subr.mxu0 0.0
      %1408 = vmatpush1.xpose.msra.mxu0 0.0
      %1409 = vmatprep.subr.mxu0 0.0
      %1410 = vmatpush1.xpose.msra.mxu0 0.0
      %1411 = vmatprep.subr.mxu0 0.0
      %1412 = vmatpush1.xpose.msra.mxu0 0.0
      %1413 = vmatprep.mubr.f32.mxu0 0.0
      %1414 = vmatmul.mubr.f32.gmra.mrb[0].mxu0 %v1345
      %v1415 = vpop.f32.mrb[0].mxu0
      %v1416 = vadd.f32 %v1177, %v1415
      %v1417 = vpop.f32.mrb[0].mxu0
      %1418 = vdwg.mxu0
      %v1419 = vsel %vm1256, %v1416, -inf
      %1420 = vmax.xlane.f32.xlu0 %v1419
      %v1421 = vpop.xlane.xlu0 %1420
      %v1422 = vsub.f32 %v1416, %v1421
      %v1423 = vmul.f32 %v1422, 1.442695
      %v1424 = vpow.pop %v1423
      %v1425 = vsel %vm1256, %v1424, 0.0
      %1426 = vadd.xlane.f32.xlu0 %v1425
      %v1427 = vpop.xlane.xlu0 %1426
      %v1428 = vrcp.pop %v1427
      %v1429 = vmul.f32 %v1424, %v1428
      %1431 = vrot.lane.b32.xlu0 %v1164, 96
      %v1432 = vpop.permute.xlu0 %1431
      %v1435 = vsel %vm1256, %v1429, 0
      %1437 = vmatprep.subr.mxu0 0.0
      %1438 = vmatpush1.msra.mxu0 %v1432
      %1439 = vmatprep.subr.mxu0 0.0
      %1440 = vmatpush1.msra.mxu0 0.0
      %1441 = vmatprep.subr.mxu0 0.0
      %1442 = vmatpush1.msra.mxu0 0.0
      %1443 = vmatprep.subr.mxu0 0.0
      %1444 = vmatpush1.msra.mxu0 0.0
      %1445 = vmatprep.subr.mxu0 0.0
      %1446 = vmatpush1.msra.mxu0 0.0
      %1447 = vmatprep.subr.mxu0 0.0
      %1448 = vmatpush1.msra.mxu0 0.0
      %1449 = vmatprep.subr.mxu0 0.0
      %1450 = vmatpush1.msra.mxu0 0.0
      %1451 = vmatprep.subr.mxu0 0.0
      %1452 = vmatpush1.msra.mxu0 0.0
      %1453 = vmatprep.subr.mxu0 0.0
      %1454 = vmatpush1.msra.mxu0 0.0
      %1455 = vmatprep.subr.mxu0 0.0
      %1456 = vmatpush1.msra.mxu0 0.0
      %1457 = vmatprep.subr.mxu0 0.0
      %1458 = vmatpush1.msra.mxu0 0.0
      %1459 = vmatprep.subr.mxu0 0.0
      %1460 = vmatpush1.msra.mxu0 0.0
      %1461 = vmatprep.subr.mxu0 0.0
      %1462 = vmatpush1.msra.mxu0 0.0
      %1463 = vmatprep.subr.mxu0 0.0
      %1464 = vmatpush1.msra.mxu0 0.0
      %1465 = vmatprep.subr.mxu0 0.0
      %1466 = vmatpush1.msra.mxu0 0.0
      %1467 = vmatprep.subr.mxu0 0.0
      %1468 = vmatpush1.msra.mxu0 0.0
      %1469 = vmatprep.subr.mxu0 0.0
      %1470 = vmatpush1.msra.mxu0 0.0
      %1471 = vmatprep.subr.mxu0 0.0
      %1472 = vmatpush1.msra.mxu0 0.0
      %1473 = vmatprep.subr.mxu0 0.0
      %1474 = vmatpush1.msra.mxu0 0.0
      %1475 = vmatprep.subr.mxu0 0.0
      %1476 = vmatpush1.msra.mxu0 0.0
      %1477 = vmatprep.subr.mxu0 0.0
      %1478 = vmatpush1.msra.mxu0 0.0
      %1479 = vmatprep.subr.mxu0 0.0
      %1480 = vmatpush1.msra.mxu0 0.0
      %1481 = vmatprep.subr.mxu0 0.0
      %1482 = vmatpush1.msra.mxu0 0.0
      %1483 = vmatprep.subr.mxu0 0.0
      %1484 = vmatpush1.msra.mxu0 0.0
      %1485 = vmatprep.subr.mxu0 0.0
      %1486 = vmatpush1.msra.mxu0 0.0
      %1487 = vmatprep.subr.mxu0 0.0
      %1488 = vmatpush1.msra.mxu0 0.0
      %1489 = vmatprep.subr.mxu0 0.0
      %1490 = vmatpush1.msra.mxu0 0.0
      %1491 = vmatprep.subr.mxu0 0.0
      %1492 = vmatpush1.msra.mxu0 0.0
      %1493 = vmatprep.subr.mxu0 0.0
      %1494 = vmatpush1.msra.mxu0 0.0
      %1495 = vmatprep.subr.mxu0 0.0
      %1496 = vmatpush1.msra.mxu0 0.0
      %1497 = vmatprep.subr.mxu0 0.0
      %1498 = vmatpush1.msra.mxu0 0.0
      %1499 = vmatprep.subr.mxu0 0.0
      %1500 = vmatpush1.msra.mxu0 0.0
      %1501 = vmatprep.mubr.f32.mxu0 0.0
      %1502 = vmatmul.mubr.f32.gmra.mrb[0].mxu0 %v1435
      %v1503 = vpop.f32.mrb[0].mxu0
      %v1504 = vadd.f32 0.0, %v1503
      %v1505 = vpop.f32.mrb[0].mxu0
      %1506 = vdwg.mxu0
      %1507 = vrot.lane.b32.xlu0 %v1087, 64
      %v1508 = vpop.permute.xlu0 %1507
      %1509 = vrot.lane.b32.xlu0 %v1089, 64
      %v1510 = vpop.permute.xlu0 %1509
      %v1511 = vsel %vm1179, %v1508, 0
      %v1513 = vsel %vm1179, %v1510, 0
      %1515 = vmatprep.subr.mxu0 0.0
      %1516 = vmatpush1.xpose.msra.mxu0 %v1513
      %1517 = vmatprep.subr.mxu0 0.0
      %1518 = vmatpush1.xpose.msra.mxu0 0.0
      %1519 = vmatprep.subr.mxu0 0.0
      %1520 = vmatpush1.xpose.msra.mxu0 0.0
      %1521 = vmatprep.subr.mxu0 0.0
      %1522 = vmatpush1.xpose.msra.mxu0 0.0
      %1523 = vmatprep.subr.mxu0 0.0
      %1524 = vmatpush1.xpose.msra.mxu0 0.0
      %1525 = vmatprep.subr.mxu0 0.0
      %1526 = vmatpush1.xpose.msra.mxu0 0.0
      %1527 = vmatprep.subr.mxu0 0.0
      %1528 = vmatpush1.xpose.msra.mxu0 0.0
      %1529 = vmatprep.subr.mxu0 0.0
      %1530 = vmatpush1.xpose.msra.mxu0 0.0
      %1531 = vmatprep.subr.mxu0 0.0
      %1532 = vmatpush1.xpose.msra.mxu0 0.0
      %1533 = vmatprep.subr.mxu0 0.0
      %1534 = vmatpush1.xpose.msra.mxu0 0.0
      %1535 = vmatprep.subr.mxu0 0.0
      %1536 = vmatpush1.xpose.msra.mxu0 0.0
      %1537 = vmatprep.subr.mxu0 0.0
      %1538 = vmatpush1.xpose.msra.mxu0 0.0
      %1539 = vmatprep.subr.mxu0 0.0
      %1540 = vmatpush1.xpose.msra.mxu0 0.0
      %1541 = vmatprep.subr.mxu0 0.0
      %1542 = vmatpush1.xpose.msra.mxu0 0.0
      %1543 = vmatprep.subr.mxu0 0.0
      %1544 = vmatpush1.xpose.msra.mxu0 0.0
      %1545 = vmatprep.subr.mxu0 0.0
      %1546 = vmatpush1.xpose.msra.mxu0 0.0
      %1547 = vmatprep.subr.mxu0 0.0
      %1548 = vmatpush1.xpose.msra.mxu0 0.0
      %1549 = vmatprep.subr.mxu0 0.0
      %1550 = vmatpush1.xpose.msra.mxu0 0.0
      %1551 = vmatprep.subr.mxu0 0.0
      %1552 = vmatpush1.xpose.msra.mxu0 0.0
      %1553 = vmatprep.subr.mxu0 0.0
      %1554 = vmatpush1.xpose.msra.mxu0 0.0
      %1555 = vmatprep.subr.mxu0 0.0
      %1556 = vmatpush1.xpose.msra.mxu0 0.0
      %1557 = vmatprep.subr.mxu0 0.0
      %1558 = vmatpush1.xpose.msra.mxu0 0.0
      %1559 = vmatprep.subr.mxu0 0.0
      %1560 = vmatpush1.xpose.msra.mxu0 0.0
      %1561 = vmatprep.subr.mxu0 0.0
      %1562 = vmatpush1.xpose.msra.mxu0 0.0
      %1563 = vmatprep.subr.mxu0 0.0
      %1564 = vmatpush1.xpose.msra.mxu0 0.0
      %1565 = vmatprep.subr.mxu0 0.0
      %1566 = vmatpush1.xpose.msra.mxu0 0.0
      %1567 = vmatprep.subr.mxu0 0.0
      %1568 = vmatpush1.xpose.msra.mxu0 0.0
      %1569 = vmatprep.subr.mxu0 0.0
      %1570 = vmatpush1.xpose.msra.mxu0 0.0
      %1571 = vmatprep.subr.mxu0 0.0
      %1572 = vmatpush1.xpose.msra.mxu0 0.0
      %1573 = vmatprep.subr.mxu0 0.0
      %1574 = vmatpush1.xpose.msra.mxu0 0.0
      %1575 = vmatprep.subr.mxu0 0.0
      %1576 = vmatpush1.xpose.msra.mxu0 0.0
      %1577 = vmatprep.subr.mxu0 0.0
      %1578 = vmatpush1.xpose.msra.mxu0 0.0
      %1579 = vmatprep.mubr.f32.mxu0 0.0
      %1580 = vmatmul.mubr.f32.gmra.mrb[0].mxu0 %v1511
      %v1581 = vpop.f32.mrb[0].mxu0
      %v1582 = vadd.f32 %v1177, %v1581
      %v1583 = vpop.f32.mrb[0].mxu0
      %1584 = vdwg.mxu0
      %v1585 = vsel %vm1256, %v1582, -inf
      %1586 = vmax.xlane.f32.xlu0 %v1585
      %v1587 = vpop.xlane.xlu0 %1586
      %v1588 = vsub.f32 %v1582, %v1587
      %v1589 = vmul.f32 %v1588, 1.442695
      %v1590 = vpow.pop %v1589
      %v1591 = vsel %vm1256, %v1590, 0.0
      %1592 = vadd.xlane.f32.xlu0 %v1591
      %v1593 = vpop.xlane.xlu0 %1592
      %v1594 = vrcp.pop %v1593
      %v1595 = vmul.f32 %v1590, %v1594
      %1596 = vrot.lane.b32.xlu0 %v1164, 64
      %v1597 = vpop.permute.xlu0 %1596
      %v1600 = vsel %vm1256, %v1595, 0
      %1602 = vmatprep.subr.mxu0 0.0
      %1603 = vmatpush1.msra.mxu0 %v1597
      %1604 = vmatprep.subr.mxu0 0.0
      %1605 = vmatpush1.msra.mxu0 0.0
      %1606 = vmatprep.subr.mxu0 0.0
      %1607 = vmatpush1.msra.mxu0 0.0
      %1608 = vmatprep.subr.mxu0 0.0
      %1609 = vmatpush1.msra.mxu0 0.0
      %1610 = vmatprep.subr.mxu0 0.0
      %1611 = vmatpush1.msra.mxu0 0.0
      %1612 = vmatprep.subr.mxu0 0.0
      %1613 = vmatpush1.msra.mxu0 0.0
      %1614 = vmatprep.subr.mxu0 0.0
      %1615 = vmatpush1.msra.mxu0 0.0
      %1616 = vmatprep.subr.mxu0 0.0
      %1617 = vmatpush1.msra.mxu0 0.0
      %1618 = vmatprep.subr.mxu0 0.0
      %1619 = vmatpush1.msra.mxu0 0.0
      %1620 = vmatprep.subr.mxu0 0.0
      %1621 = vmatpush1.msra.mxu0 0.0
      %1622 = vmatprep.subr.mxu0 0.0
      %1623 = vmatpush1.msra.mxu0 0.0
      %1624 = vmatprep.subr.mxu0 0.0
      %1625 = vmatpush1.msra.mxu0 0.0
      %1626 = vmatprep.subr.mxu0 0.0
      %1627 = vmatpush1.msra.mxu0 0.0
      %1628 = vmatprep.subr.mxu0 0.0
      %1629 = vmatpush1.msra.mxu0 0.0
      %1630 = vmatprep.subr.mxu0 0.0
      %1631 = vmatpush1.msra.mxu0 0.0
      %1632 = vmatprep.subr.mxu0 0.0
      %1633 = vmatpush1.msra.mxu0 0.0
      %1634 = vmatprep.subr.mxu0 0.0
      %1635 = vmatpush1.msra.mxu0 0.0
      %1636 = vmatprep.subr.mxu0 0.0
      %1637 = vmatpush1.msra.mxu0 0.0
      %1638 = vmatprep.subr.mxu0 0.0
      %1639 = vmatpush1.msra.mxu0 0.0
      %1640 = vmatprep.subr.mxu0 0.0
      %1641 = vmatpush1.msra.mxu0 0.0
      %1642 = vmatprep.subr.mxu0 0.0
      %1643 = vmatpush1.msra.mxu0 0.0
      %1644 = vmatprep.subr.mxu0 0.0
      %1645 = vmatpush1.msra.mxu0 0.0
      %1646 = vmatprep.subr.mxu0 0.0
      %1647 = vmatpush1.msra.mxu0 0.0
      %1648 = vmatprep.subr.mxu0 0.0
      %1649 = vmatpush1.msra.mxu0 0.0
      %1650 = vmatprep.subr.mxu0 0.0
      %1651 = vmatpush1.msra.mxu0 0.0
      %1652 = vmatprep.subr.mxu0 0.0
      %1653 = vmatpush1.msra.mxu0 0.0
      %1654 = vmatprep.subr.mxu0 0.0
      %1655 = vmatpush1.msra.mxu0 0.0
      %1656 = vmatprep.subr.mxu0 0.0
      %1657 = vmatpush1.msra.mxu0 0.0
      %1658 = vmatprep.subr.mxu0 0.0
      %1659 = vmatpush1.msra.mxu0 0.0
      %1660 = vmatprep.subr.mxu0 0.0
      %1661 = vmatpush1.msra.mxu0 0.0
      %1662 = vmatprep.subr.mxu0 0.0
      %1663 = vmatpush1.msra.mxu0 0.0
      %1664 = vmatprep.subr.mxu0 0.0
      %1665 = vmatpush1.msra.mxu0 0.0
      %1666 = vmatprep.mubr.f32.mxu0 0.0
      %1667 = vmatmul.mubr.f32.gmra.mrb[0].mxu0 %v1600
      %v1668 = vpop.f32.mrb[0].mxu0
      %v1669 = vadd.f32 0.0, %v1668
      %v1670 = vpop.f32.mrb[0].mxu0
      %1671 = vdwg.mxu0
      %1672 = vrot.lane.b32.xlu0 %v1087, 32
      %v1673 = vpop.permute.xlu0 %1672
      %1674 = vrot.lane.b32.xlu0 %v1089, 32
      %v1675 = vpop.permute.xlu0 %1674
      %v1676 = vsel %vm1179, %v1673, 0
      %v1678 = vsel %vm1179, %v1675, 0
      %1680 = vmatprep.subr.mxu0 0.0
      %1681 = vmatpush1.xpose.msra.mxu0 %v1678
      %1682 = vmatprep.subr.mxu0 0.0
      %1683 = vmatpush1.xpose.msra.mxu0 0.0
      %1684 = vmatprep.subr.mxu0 0.0
      %1685 = vmatpush1.xpose.msra.mxu0 0.0
      %1686 = vmatprep.subr.mxu0 0.0
      %1687 = vmatpush1.xpose.msra.mxu0 0.0
      %1688 = vmatprep.subr.mxu0 0.0
      %1689 = vmatpush1.xpose.msra.mxu0 0.0
      %1690 = vmatprep.subr.mxu0 0.0
      %1691 = vmatpush1.xpose.msra.mxu0 0.0
      %1692 = vmatprep.subr.mxu0 0.0
      %1693 = vmatpush1.xpose.msra.mxu0 0.0
      %1694 = vmatprep.subr.mxu0 0.0
      %1695 = vmatpush1.xpose.msra.mxu0 0.0
      %1696 = vmatprep.subr.mxu0 0.0
      %1697 = vmatpush1.xpose.msra.mxu0 0.0
      %1698 = vmatprep.subr.mxu0 0.0
      %1699 = vmatpush1.xpose.msra.mxu0 0.0
      %1700 = vmatprep.subr.mxu0 0.0
      %1701 = vmatpush1.xpose.msra.mxu0 0.0
      %1702 = vmatprep.subr.mxu0 0.0
      %1703 = vmatpush1.xpose.msra.mxu0 0.0
      %1704 = vmatprep.subr.mxu0 0.0
      %1705 = vmatpush1.xpose.msra.mxu0 0.0
      %1706 = vmatprep.subr.mxu0 0.0
      %1707 = vmatpush1.xpose.msra.mxu0 0.0
      %1708 = vmatprep.subr.mxu0 0.0
      %1709 = vmatpush1.xpose.msra.mxu0 0.0
      %1710 = vmatprep.subr.mxu0 0.0
      %1711 = vmatpush1.xpose.msra.mxu0 0.0
      %1712 = vmatprep.subr.mxu0 0.0
      %1713 = vmatpush1.xpose.msra.mxu0 0.0
      %1714 = vmatprep.subr.mxu0 0.0
      %1715 = vmatpush1.xpose.msra.mxu0 0.0
      %1716 = vmatprep.subr.mxu0 0.0
      %1717 = vmatpush1.xpose.msra.mxu0 0.0
      %1718 = vmatprep.subr.mxu0 0.0
      %1719 = vmatpush1.xpose.msra.mxu0 0.0
      %1720 = vmatprep.subr.mxu0 0.0
      %1721 = vmatpush1.xpose.msra.mxu0 0.0
      %1722 = vmatprep.subr.mxu0 0.0
      %1723 = vmatpush1.xpose.msra.mxu0 0.0
      %1724 = vmatprep.subr.mxu0 0.0
      %1725 = vmatpush1.xpose.msra.mxu0 0.0
      %1726 = vmatprep.subr.mxu0 0.0
      %1727 = vmatpush1.xpose.msra.mxu0 0.0
      %1728 = vmatprep.subr.mxu0 0.0
      %1729 = vmatpush1.xpose.msra.mxu0 0.0
      %1730 = vmatprep.subr.mxu0 0.0
      %1731 = vmatpush1.xpose.msra.mxu0 0.0
      %1732 = vmatprep.subr.mxu0 0.0
      %1733 = vmatpush1.xpose.msra.mxu0 0.0
      %1734 = vmatprep.subr.mxu0 0.0
      %1735 = vmatpush1.xpose.msra.mxu0 0.0
      %1736 = vmatprep.subr.mxu0 0.0
      %1737 = vmatpush1.xpose.msra.mxu0 0.0
      %1738 = vmatprep.subr.mxu0 0.0
      %1739 = vmatpush1.xpose.msra.mxu0 0.0
      %1740 = vmatprep.subr.mxu0 0.0
      %1741 = vmatpush1.xpose.msra.mxu0 0.0
      %1742 = vmatprep.subr.mxu0 0.0
      %1743 = vmatpush1.xpose.msra.mxu0 0.0
      %1744 = vmatprep.mubr.f32.mxu0 0.0
      %1745 = vmatmul.mubr.f32.gmra.mrb[0].mxu0 %v1676
      %v1746 = vpop.f32.mrb[0].mxu0
      %v1747 = vadd.f32 %v1177, %v1746
      %v1748 = vpop.f32.mrb[0].mxu0
      %1749 = vdwg.mxu0
      %v1750 = vsel %vm1256, %v1747, -inf
      %1751 = vmax.xlane.f32.xlu0 %v1750
      %v1752 = vpop.xlane.xlu0 %1751
      %v1753 = vsub.f32 %v1747, %v1752
      %v1754 = vmul.f32 %v1753, 1.442695
      %v1755 = vpow.pop %v1754
      %v1756 = vsel %vm1256, %v1755, 0.0
      %1757 = vadd.xlane.f32.xlu0 %v1756
      %v1758 = vpop.xlane.xlu0 %1757
      %v1759 = vrcp.pop %v1758
      %v1760 = vmul.f32 %v1755, %v1759
      %1761 = vrot.lane.b32.xlu0 %v1164, 32
      %v1762 = vpop.permute.xlu0 %1761
      %v1765 = vsel %vm1256, %v1760, 0
      %1767 = vmatprep.subr.mxu0 0.0
      %1768 = vmatpush1.msra.mxu0 %v1762
      %1769 = vmatprep.subr.mxu0 0.0
      %1770 = vmatpush1.msra.mxu0 0.0
      %1771 = vmatprep.subr.mxu0 0.0
      %1772 = vmatpush1.msra.mxu0 0.0
      %1773 = vmatprep.subr.mxu0 0.0
      %1774 = vmatpush1.msra.mxu0 0.0
      %1775 = vmatprep.subr.mxu0 0.0
      %1776 = vmatpush1.msra.mxu0 0.0
      %1777 = vmatprep.subr.mxu0 0.0
      %1778 = vmatpush1.msra.mxu0 0.0
      %1779 = vmatprep.subr.mxu0 0.0
      %1780 = vmatpush1.msra.mxu0 0.0
      %1781 = vmatprep.subr.mxu0 0.0
      %1782 = vmatpush1.msra.mxu0 0.0
      %1783 = vmatprep.subr.mxu0 0.0
      %1784 = vmatpush1.msra.mxu0 0.0
      %1785 = vmatprep.subr.mxu0 0.0
      %1786 = vmatpush1.msra.mxu0 0.0
      %1787 = vmatprep.subr.mxu0 0.0
      %1788 = vmatpush1.msra.mxu0 0.0
      %1789 = vmatprep.subr.mxu0 0.0
      %1790 = vmatpush1.msra.mxu0 0.0
      %1791 = vmatprep.subr.mxu0 0.0
      %1792 = vmatpush1.msra.mxu0 0.0
      %1793 = vmatprep.subr.mxu0 0.0
      %1794 = vmatpush1.msra.mxu0 0.0
      %1795 = vmatprep.subr.mxu0 0.0
      %1796 = vmatpush1.msra.mxu0 0.0
      %1797 = vmatprep.subr.mxu0 0.0
      %1798 = vmatpush1.msra.mxu0 0.0
      %1799 = vmatprep.subr.mxu0 0.0
      %1800 = vmatpush1.msra.mxu0 0.0
      %1801 = vmatprep.subr.mxu0 0.0
      %1802 = vmatpush1.msra.mxu0 0.0
      %1803 = vmatprep.subr.mxu0 0.0
      %1804 = vmatpush1.msra.mxu0 0.0
      %1805 = vmatprep.subr.mxu0 0.0
      %1806 = vmatpush1.msra.mxu0 0.0
      %1807 = vmatprep.subr.mxu0 0.0
      %1808 = vmatpush1.msra.mxu0 0.0
      %1809 = vmatprep.subr.mxu0 0.0
      %1810 = vmatpush1.msra.mxu0 0.0
      %1811 = vmatprep.subr.mxu0 0.0
      %1812 = vmatpush1.msra.mxu0 0.0
      %1813 = vmatprep.subr.mxu0 0.0
      %1814 = vmatpush1.msra.mxu0 0.0
      %1815 = vmatprep.subr.mxu0 0.0
      %1816 = vmatpush1.msra.mxu0 0.0
      %1817 = vmatprep.subr.mxu0 0.0
      %1818 = vmatpush1.msra.mxu0 0.0
      %1819 = vmatprep.subr.mxu0 0.0
      %1820 = vmatpush1.msra.mxu0 0.0
      %1821 = vmatprep.subr.mxu0 0.0
      %1822 = vmatpush1.msra.mxu0 0.0
      %1823 = vmatprep.subr.mxu0 0.0
      %1824 = vmatpush1.msra.mxu0 0.0
      %1825 = vmatprep.subr.mxu0 0.0
      %1826 = vmatpush1.msra.mxu0 0.0
      %1827 = vmatprep.subr.mxu0 0.0
      %1828 = vmatpush1.msra.mxu0 0.0
      %1829 = vmatprep.subr.mxu0 0.0
      %1830 = vmatpush1.msra.mxu0 0.0
      %1831 = vmatprep.mubr.f32.mxu0 0.0
      %1832 = vmatmul.mubr.f32.gmra.mrb[0].mxu0 %v1765
      %v1833 = vpop.f32.mrb[0].mxu0
      %v1834 = vadd.f32 0.0, %v1833
      %v1835 = vpop.f32.mrb[0].mxu0
      %1836 = vdwg.mxu0
      %1838 = vrot.lane.b32.xlu0 %v1504, 32
      %v1839 = vpop.permute.xlu0 %1838
      %1842 = vrot.lane.b32.xlu0 %v1669, 64
      %v1843 = vpop.permute.xlu0 %1842
      %1846 = vrot.lane.b32.xlu0 %v1834, 96
      %v1847 = vpop.permute.xlu0 %1846
      %v1849 = vsel %vm1179, %v1338, %v1839
      %vm1850 = vcmask 523264
      %v1851 = vsel %vm1850, %v1849, %v1843
      %vm1852 = vcmask 785408
      %v1853 = vsel %vm1852, %v1851, %v1847
      %s1854 = scalar_lea.vmem %s870, 1
      %v1855 = vld [vmem:[%s1854] sm:$0x1]
      %v1857 = vlaneseq
      %v1858 = vshrl.u32 %v1857, 7
      %v1859 = vsub.s32 0, %v1858
      %v1860 = vrot.slane %v1855, %v1859
      %v1863 = vsel %vm1179, %v1093, 0
      %v1866 = vsel %vm1179, %v1095, 0
      %1868 = vmatprep.subr.mxu0 0.0
      %1869 = vmatpush1.xpose.msra.mxu0 %v1866
      %1870 = vmatprep.subr.mxu0 0.0
      %1871 = vmatpush1.xpose.msra.mxu0 0.0
      %1872 = vmatprep.subr.mxu0 0.0
      %1873 = vmatpush1.xpose.msra.mxu0 0.0
      %1874 = vmatprep.subr.mxu0 0.0
      %1875 = vmatpush1.xpose.msra.mxu0 0.0
      %1876 = vmatprep.subr.mxu0 0.0
      %1877 = vmatpush1.xpose.msra.mxu0 0.0
      %1878 = vmatprep.subr.mxu0 0.0
      %1879 = vmatpush1.xpose.msra.mxu0 0.0
      %1880 = vmatprep.subr.mxu0 0.0
      %1881 = vmatpush1.xpose.msra.mxu0 0.0
      %1882 = vmatprep.subr.mxu0 0.0
      %1883 = vmatpush1.xpose.msra.mxu0 0.0
      %1884 = vmatprep.subr.mxu0 0.0
      %1885 = vmatpush1.xpose.msra.mxu0 0.0
      %1886 = vmatprep.subr.mxu0 0.0
      %1887 = vmatpush1.xpose.msra.mxu0 0.0
      %1888 = vmatprep.subr.mxu0 0.0
      %1889 = vmatpush1.xpose.msra.mxu0 0.0
      %1890 = vmatprep.subr.mxu0 0.0
      %1891 = vmatpush1.xpose.msra.mxu0 0.0
      %1892 = vmatprep.subr.mxu0 0.0
      %1893 = vmatpush1.xpose.msra.mxu0 0.0
      %1894 = vmatprep.subr.mxu0 0.0
      %1895 = vmatpush1.xpose.msra.mxu0 0.0
      %1896 = vmatprep.subr.mxu0 0.0
      %1897 = vmatpush1.xpose.msra.mxu0 0.0
      %1898 = vmatprep.subr.mxu0 0.0
      %1899 = vmatpush1.xpose.msra.mxu0 0.0
      %1900 = vmatprep.subr.mxu0 0.0
      %1901 = vmatpush1.xpose.msra.mxu0 0.0
      %1902 = vmatprep.subr.mxu0 0.0
      %1903 = vmatpush1.xpose.msra.mxu0 0.0
      %1904 = vmatprep.subr.mxu0 0.0
      %1905 = vmatpush1.xpose.msra.mxu0 0.0
      %1906 = vmatprep.subr.mxu0 0.0
      %1907 = vmatpush1.xpose.msra.mxu0 0.0
      %1908 = vmatprep.subr.mxu0 0.0
      %1909 = vmatpush1.xpose.msra.mxu0 0.0
      %1910 = vmatprep.subr.mxu0 0.0
      %1911 = vmatpush1.xpose.msra.mxu0 0.0
      %1912 = vmatprep.subr.mxu0 0.0
      %1913 = vmatpush1.xpose.msra.mxu0 0.0
      %1914 = vmatprep.subr.mxu0 0.0
      %1915 = vmatpush1.xpose.msra.mxu0 0.0
      %1916 = vmatprep.subr.mxu0 0.0
      %1917 = vmatpush1.xpose.msra.mxu0 0.0
      %1918 = vmatprep.subr.mxu0 0.0
      %1919 = vmatpush1.xpose.msra.mxu0 0.0
      %1920 = vmatprep.subr.mxu0 0.0
      %1921 = vmatpush1.xpose.msra.mxu0 0.0
      %1922 = vmatprep.subr.mxu0 0.0
      %1923 = vmatpush1.xpose.msra.mxu0 0.0
      %1924 = vmatprep.subr.mxu0 0.0
      %1925 = vmatpush1.xpose.msra.mxu0 0.0
      %1926 = vmatprep.subr.mxu0 0.0
      %1927 = vmatpush1.xpose.msra.mxu0 0.0
      %1928 = vmatprep.subr.mxu0 0.0
      %1929 = vmatpush1.xpose.msra.mxu0 0.0
      %1930 = vmatprep.subr.mxu0 0.0
      %1931 = vmatpush1.xpose.msra.mxu0 0.0
      %1932 = vmatprep.mubr.f32.mxu0 0.0
      %1933 = vmatmul.mubr.f32.gmra.mrb[0].mxu0 %v1863
      %v1934 = vpop.f32.mrb[0].mxu0
      %v1935 = vadd.f32 %v1860, %v1934
      %v1936 = vpop.f32.mrb[0].mxu0
      %1937 = vdwg.mxu0
      %v1938 = vsel %vm1256, %v1935, -inf
      %1939 = vmax.xlane.f32.xlu0 %v1938
      %v1940 = vpop.xlane.xlu0 %1939
      %v1941 = vsub.f32 %v1935, %v1940
      %v1942 = vmul.f32 %v1941, 1.442695
      %v1943 = vpow.pop %v1942
      %v1944 = vsel %vm1256, %v1943, 0.0
      %1945 = vadd.xlane.f32.xlu0 %v1944
      %v1946 = vpop.xlane.xlu0 %1945
      %v1947 = vrcp.pop %v1946
      %v1948 = vmul.f32 %v1943, %v1947
      %v1950 = vsel %vm1256, %v1948, 0
      %1952 = vmatprep.subr.mxu0 0.0
      %1953 = vmatpush1.msra.mxu0 %v1169
      %1954 = vmatprep.subr.mxu0 0.0
      %1955 = vmatpush1.msra.mxu0 0.0
      %1956 = vmatprep.subr.mxu0 0.0
      %1957 = vmatpush1.msra.mxu0 0.0
      %1958 = vmatprep.subr.mxu0 0.0
      %1959 = vmatpush1.msra.mxu0 0.0
      %1960 = vmatprep.subr.mxu0 0.0
      %1961 = vmatpush1.msra.mxu0 0.0
      %1962 = vmatprep.subr.mxu0 0.0
      %1963 = vmatpush1.msra.mxu0 0.0
      %1964 = vmatprep.subr.mxu0 0.0
      %1965 = vmatpush1.msra.mxu0 0.0
      %1966 = vmatprep.subr.mxu0 0.0
      %1967 = vmatpush1.msra.mxu0 0.0
      %1968 = vmatprep.subr.mxu0 0.0
      %1969 = vmatpush1.msra.mxu0 0.0
      %1970 = vmatprep.subr.mxu0 0.0
      %1971 = vmatpush1.msra.mxu0 0.0
      %1972 = vmatprep.subr.mxu0 0.0
      %1973 = vmatpush1.msra.mxu0 0.0
      %1974 = vmatprep.subr.mxu0 0.0
      %1975 = vmatpush1.msra.mxu0 0.0
      %1976 = vmatprep.subr.mxu0 0.0
      %1977 = vmatpush1.msra.mxu0 0.0
      %1978 = vmatprep.subr.mxu0 0.0
      %1979 = vmatpush1.msra.mxu0 0.0
      %1980 = vmatprep.subr.mxu0 0.0
      %1981 = vmatpush1.msra.mxu0 0.0
      %1982 = vmatprep.subr.mxu0 0.0
      %1983 = vmatpush1.msra.mxu0 0.0
      %1984 = vmatprep.subr.mxu0 0.0
      %1985 = vmatpush1.msra.mxu0 0.0
      %1986 = vmatprep.subr.mxu0 0.0
      %1987 = vmatpush1.msra.mxu0 0.0
      %1988 = vmatprep.subr.mxu0 0.0
      %1989 = vmatpush1.msra.mxu0 0.0
      %1990 = vmatprep.subr.mxu0 0.0
      %1991 = vmatpush1.msra.mxu0 0.0
      %1992 = vmatprep.subr.mxu0 0.0
      %1993 = vmatpush1.msra.mxu0 0.0
      %1994 = vmatprep.subr.mxu0 0.0
      %1995 = vmatpush1.msra.mxu0 0.0
      %1996 = vmatprep.subr.mxu0 0.0
      %1997 = vmatpush1.msra.mxu0 0.0
      %1998 = vmatprep.subr.mxu0 0.0
      %1999 = vmatpush1.msra.mxu0 0.0
      %2000 = vmatprep.subr.mxu0 0.0
      %2001 = vmatpush1.msra.mxu0 0.0
      %2002 = vmatprep.subr.mxu0 0.0
      %2003 = vmatpush1.msra.mxu0 0.0
      %2004 = vmatprep.subr.mxu0 0.0
      %2005 = vmatpush1.msra.mxu0 0.0
      %2006 = vmatprep.subr.mxu0 0.0
      %2007 = vmatpush1.msra.mxu0 0.0
      %2008 = vmatprep.subr.mxu0 0.0
      %2009 = vmatpush1.msra.mxu0 0.0
      %2010 = vmatprep.subr.mxu0 0.0
      %2011 = vmatpush1.msra.mxu0 0.0
      %2012 = vmatprep.subr.mxu0 0.0
      %2013 = vmatpush1.msra.mxu0 0.0
      %2014 = vmatprep.subr.mxu0 0.0
      %2015 = vmatpush1.msra.mxu0 0.0
      %2016 = vmatprep.mubr.f32.mxu0 0.0
      %2017 = vmatmul.mubr.f32.gmra.mrb[0].mxu0 %v1950
      %v2018 = vpop.f32.mrb[0].mxu0
      %v2019 = vadd.f32 0.0, %v2018
      %v2020 = vpop.f32.mrb[0].mxu0
      %2021 = vdwg.mxu0
      %2022 = vrot.lane.b32.xlu0 %v1093, 96
      %v2023 = vpop.permute.xlu0 %2022
      %2024 = vrot.lane.b32.xlu0 %v1095, 96
      %v2025 = vpop.permute.xlu0 %2024
      %v2026 = vsel %vm1179, %v2023, 0
      %v2028 = vsel %vm1179, %v2025, 0
      %2030 = vmatprep.subr.mxu0 0.0
      %2031 = vmatpush1.xpose.msra.mxu0 %v2028
      %2032 = vmatprep.subr.mxu0 0.0
      %2033 = vmatpush1.xpose.msra.mxu0 0.0
      %2034 = vmatprep.subr.mxu0 0.0
      %2035 = vmatpush1.xpose.msra.mxu0 0.0
      %2036 = vmatprep.subr.mxu0 0.0
      %2037 = vmatpush1.xpose.msra.mxu0 0.0
      %2038 = vmatprep.subr.mxu0 0.0
      %2039 = vmatpush1.xpose.msra.mxu0 0.0
      %2040 = vmatprep.subr.mxu0 0.0
      %2041 = vmatpush1.xpose.msra.mxu0 0.0
      %2042 = vmatprep.subr.mxu0 0.0
      %2043 = vmatpush1.xpose.msra.mxu0 0.0
      %2044 = vmatprep.subr.mxu0 0.0
      %2045 = vmatpush1.xpose.msra.mxu0 0.0
      %2046 = vmatprep.subr.mxu0 0.0
      %2047 = vmatpush1.xpose.msra.mxu0 0.0
      %2048 = vmatprep.subr.mxu0 0.0
      %2049 = vmatpush1.xpose.msra.mxu0 0.0
      %2050 = vmatprep.subr.mxu0 0.0
      %2051 = vmatpush1.xpose.msra.mxu0 0.0
      %2052 = vmatprep.subr.mxu0 0.0
      %2053 = vmatpush1.xpose.msra.mxu0 0.0
      %2054 = vmatprep.subr.mxu0 0.0
      %2055 = vmatpush1.xpose.msra.mxu0 0.0
      %2056 = vmatprep.subr.mxu0 0.0
      %2057 = vmatpush1.xpose.msra.mxu0 0.0
      %2058 = vmatprep.subr.mxu0 0.0
      %2059 = vmatpush1.xpose.msra.mxu0 0.0
      %2060 = vmatprep.subr.mxu0 0.0
      %2061 = vmatpush1.xpose.msra.mxu0 0.0
      %2062 = vmatprep.subr.mxu0 0.0
      %2063 = vmatpush1.xpose.msra.mxu0 0.0
      %2064 = vmatprep.subr.mxu0 0.0
      %2065 = vmatpush1.xpose.msra.mxu0 0.0
      %2066 = vmatprep.subr.mxu0 0.0
      %2067 = vmatpush1.xpose.msra.mxu0 0.0
      %2068 = vmatprep.subr.mxu0 0.0
      %2069 = vmatpush1.xpose.msra.mxu0 0.0
      %2070 = vmatprep.subr.mxu0 0.0
      %2071 = vmatpush1.xpose.msra.mxu0 0.0
      %2072 = vmatprep.subr.mxu0 0.0
      %2073 = vmatpush1.xpose.msra.mxu0 0.0
      %2074 = vmatprep.subr.mxu0 0.0
      %2075 = vmatpush1.xpose.msra.mxu0 0.0
      %2076 = vmatprep.subr.mxu0 0.0
      %2077 = vmatpush1.xpose.msra.mxu0 0.0
      %2078 = vmatprep.subr.mxu0 0.0
      %2079 = vmatpush1.xpose.msra.mxu0 0.0
      %2080 = vmatprep.subr.mxu0 0.0
      %2081 = vmatpush1.xpose.msra.mxu0 0.0
      %2082 = vmatprep.subr.mxu0 0.0
      %2083 = vmatpush1.xpose.msra.mxu0 0.0
      %2084 = vmatprep.subr.mxu0 0.0
      %2085 = vmatpush1.xpose.msra.mxu0 0.0
      %2086 = vmatprep.subr.mxu0 0.0
      %2087 = vmatpush1.xpose.msra.mxu0 0.0
      %2088 = vmatprep.subr.mxu0 0.0
      %2089 = vmatpush1.xpose.msra.mxu0 0.0
      %2090 = vmatprep.subr.mxu0 0.0
      %2091 = vmatpush1.xpose.msra.mxu0 0.0
      %2092 = vmatprep.subr.mxu0 0.0
      %2093 = vmatpush1.xpose.msra.mxu0 0.0
      %2094 = vmatprep.mubr.f32.mxu0 0.0
      %2095 = vmatmul.mubr.f32.gmra.mrb[0].mxu0 %v2026
      %v2096 = vpop.f32.mrb[0].mxu0
      %v2097 = vadd.f32 %v1860, %v2096
      %v2098 = vpop.f32.mrb[0].mxu0
      %2099 = vdwg.mxu0
      %v2100 = vsel %vm1256, %v2097, -inf
      %2101 = vmax.xlane.f32.xlu0 %v2100
      %v2102 = vpop.xlane.xlu0 %2101
      %v2103 = vsub.f32 %v2097, %v2102
      %v2104 = vmul.f32 %v2103, 1.442695
      %v2105 = vpow.pop %v2104
      %v2106 = vsel %vm1256, %v2105, 0.0
      %2107 = vadd.xlane.f32.xlu0 %v2106
      %v2108 = vpop.xlane.xlu0 %2107
      %v2109 = vrcp.pop %v2108
      %v2110 = vmul.f32 %v2105, %v2109
      %2112 = vrot.lane.b32.xlu0 %v1169, 96
      %v2113 = vpop.permute.xlu0 %2112
      %v2116 = vsel %vm1256, %v2110, 0
      %2118 = vmatprep.subr.mxu0 0.0
      %2119 = vmatpush1.msra.mxu0 %v2113
      %2120 = vmatprep.subr.mxu0 0.0
      %2121 = vmatpush1.msra.mxu0 0.0
      %2122 = vmatprep.subr.mxu0 0.0
      %2123 = vmatpush1.msra.mxu0 0.0
      %2124 = vmatprep.subr.mxu0 0.0
      %2125 = vmatpush1.msra.mxu0 0.0
      %2126 = vmatprep.subr.mxu0 0.0
      %2127 = vmatpush1.msra.mxu0 0.0
      %2128 = vmatprep.subr.mxu0 0.0
      %2129 = vmatpush1.msra.mxu0 0.0
      %2130 = vmatprep.subr.mxu0 0.0
      %2131 = vmatpush1.msra.mxu0 0.0
      %2132 = vmatprep.subr.mxu0 0.0
      %2133 = vmatpush1.msra.mxu0 0.0
      %2134 = vmatprep.subr.mxu0 0.0
      %2135 = vmatpush1.msra.mxu0 0.0
      %2136 = vmatprep.subr.mxu0 0.0
      %2137 = vmatpush1.msra.mxu0 0.0
      %2138 = vmatprep.subr.mxu0 0.0
      %2139 = vmatpush1.msra.mxu0 0.0
      %2140 = vmatprep.subr.mxu0 0.0
      %2141 = vmatpush1.msra.mxu0 0.0
      %2142 = vmatprep.subr.mxu0 0.0
      %2143 = vmatpush1.msra.mxu0 0.0
      %2144 = vmatprep.subr.mxu0 0.0
      %2145 = vmatpush1.msra.mxu0 0.0
      %2146 = vmatprep.subr.mxu0 0.0
      %2147 = vmatpush1.msra.mxu0 0.0
      %2148 = vmatprep.subr.mxu0 0.0
      %2149 = vmatpush1.msra.mxu0 0.0
      %2150 = vmatprep.subr.mxu0 0.0
      %2151 = vmatpush1.msra.mxu0 0.0
      %2152 = vmatprep.subr.mxu0 0.0
      %2153 = vmatpush1.msra.mxu0 0.0
      %2154 = vmatprep.subr.mxu0 0.0
      %2155 = vmatpush1.msra.mxu0 0.0
      %2156 = vmatprep.subr.mxu0 0.0
      %2157 = vmatpush1.msra.mxu0 0.0
      %2158 = vmatprep.subr.mxu0 0.0
      %2159 = vmatpush1.msra.mxu0 0.0
      %2160 = vmatprep.subr.mxu0 0.0
      %2161 = vmatpush1.msra.mxu0 0.0
      %2162 = vmatprep.subr.mxu0 0.0
      %2163 = vmatpush1.msra.mxu0 0.0
      %2164 = vmatprep.subr.mxu0 0.0
      %2165 = vmatpush1.msra.mxu0 0.0
      %2166 = vmatprep.subr.mxu0 0.0
      %2167 = vmatpush1.msra.mxu0 0.0
      %2168 = vmatprep.subr.mxu0 0.0
      %2169 = vmatpush1.msra.mxu0 0.0
      %2170 = vmatprep.subr.mxu0 0.0
      %2171 = vmatpush1.msra.mxu0 0.0
      %2172 = vmatprep.subr.mxu0 0.0
      %2173 = vmatpush1.msra.mxu0 0.0
      %2174 = vmatprep.subr.mxu0 0.0
      %2175 = vmatpush1.msra.mxu0 0.0
      %2176 = vmatprep.subr.mxu0 0.0
      %2177 = vmatpush1.msra.mxu0 0.0
      %2178 = vmatprep.subr.mxu0 0.0
      %2179 = vmatpush1.msra.mxu0 0.0
      %2180 = vmatprep.subr.mxu0 0.0
      %2181 = vmatpush1.msra.mxu0 0.0
      %2182 = vmatprep.mubr.f32.mxu0 0.0
      %2183 = vmatmul.mubr.f32.gmra.mrb[0].mxu0 %v2116
      %v2184 = vpop.f32.mrb[0].mxu0
      %v2185 = vadd.f32 0.0, %v2184
      %v2186 = vpop.f32.mrb[0].mxu0
      %2187 = vdwg.mxu0
      %2188 = vrot.lane.b32.xlu0 %v1093, 64
      %v2189 = vpop.permute.xlu0 %2188
      %2190 = vrot.lane.b32.xlu0 %v1095, 64
      %v2191 = vpop.permute.xlu0 %2190
      %v2192 = vsel %vm1179, %v2189, 0
      %v2194 = vsel %vm1179, %v2191, 0
      %2196 = vmatprep.subr.mxu0 0.0
      %2197 = vmatpush1.xpose.msra.mxu0 %v2194
      %2198 = vmatprep.subr.mxu0 0.0
      %2199 = vmatpush1.xpose.msra.mxu0 0.0
      %2200 = vmatprep.subr.mxu0 0.0
      %2201 = vmatpush1.xpose.msra.mxu0 0.0
      %2202 = vmatprep.subr.mxu0 0.0
      %2203 = vmatpush1.xpose.msra.mxu0 0.0
      %2204 = vmatprep.subr.mxu0 0.0
      %2205 = vmatpush1.xpose.msra.mxu0 0.0
      %2206 = vmatprep.subr.mxu0 0.0
      %2207 = vmatpush1.xpose.msra.mxu0 0.0
      %2208 = vmatprep.subr.mxu0 0.0
      %2209 = vmatpush1.xpose.msra.mxu0 0.0
      %2210 = vmatprep.subr.mxu0 0.0
      %2211 = vmatpush1.xpose.msra.mxu0 0.0
      %2212 = vmatprep.subr.mxu0 0.0
      %2213 = vmatpush1.xpose.msra.mxu0 0.0
      %2214 = vmatprep.subr.mxu0 0.0
      %2215 = vmatpush1.xpose.msra.mxu0 0.0
      %2216 = vmatprep.subr.mxu0 0.0
      %2217 = vmatpush1.xpose.msra.mxu0 0.0
      %2218 = vmatprep.subr.mxu0 0.0
      %2219 = vmatpush1.xpose.msra.mxu0 0.0
      %2220 = vmatprep.subr.mxu0 0.0
      %2221 = vmatpush1.xpose.msra.mxu0 0.0
      %2222 = vmatprep.subr.mxu0 0.0
      %2223 = vmatpush1.xpose.msra.mxu0 0.0
      %2224 = vmatprep.subr.mxu0 0.0
      %2225 = vmatpush1.xpose.msra.mxu0 0.0
      %2226 = vmatprep.subr.mxu0 0.0
      %2227 = vmatpush1.xpose.msra.mxu0 0.0
      %2228 = vmatprep.subr.mxu0 0.0
      %2229 = vmatpush1.xpose.msra.mxu0 0.0
      %2230 = vmatprep.subr.mxu0 0.0
      %2231 = vmatpush1.xpose.msra.mxu0 0.0
      %2232 = vmatprep.subr.mxu0 0.0
      %2233 = vmatpush1.xpose.msra.mxu0 0.0
      %2234 = vmatprep.subr.mxu0 0.0
      %2235 = vmatpush1.xpose.msra.mxu0 0.0
      %2236 = vmatprep.subr.mxu0 0.0
      %2237 = vmatpush1.xpose.msra.mxu0 0.0
      %2238 = vmatprep.subr.mxu0 0.0
      %2239 = vmatpush1.xpose.msra.mxu0 0.0
      %2240 = vmatprep.subr.mxu0 0.0
      %2241 = vmatpush1.xpose.msra.mxu0 0.0
      %2242 = vmatprep.subr.mxu0 0.0
      %2243 = vmatpush1.xpose.msra.mxu0 0.0
      %2244 = vmatprep.subr.mxu0 0.0
      %2245 = vmatpush1.xpose.msra.mxu0 0.0
      %2246 = vmatprep.subr.mxu0 0.0
      %2247 = vmatpush1.xpose.msra.mxu0 0.0
      %2248 = vmatprep.subr.mxu0 0.0
      %2249 = vmatpush1.xpose.msra.mxu0 0.0
      %2250 = vmatprep.subr.mxu0 0.0
      %2251 = vmatpush1.xpose.msra.mxu0 0.0
      %2252 = vmatprep.subr.mxu0 0.0
      %2253 = vmatpush1.xpose.msra.mxu0 0.0
      %2254 = vmatprep.subr.mxu0 0.0
      %2255 = vmatpush1.xpose.msra.mxu0 0.0
      %2256 = vmatprep.subr.mxu0 0.0
      %2257 = vmatpush1.xpose.msra.mxu0 0.0
      %2258 = vmatprep.subr.mxu0 0.0
      %2259 = vmatpush1.xpose.msra.mxu0 0.0
      %2260 = vmatprep.mubr.f32.mxu0 0.0
      %2261 = vmatmul.mubr.f32.gmra.mrb[0].mxu0 %v2192
      %v2262 = vpop.f32.mrb[0].mxu0
      %v2263 = vadd.f32 %v1860, %v2262
      %v2264 = vpop.f32.mrb[0].mxu0
      %2265 = vdwg.mxu0
      %v2266 = vsel %vm1256, %v2263, -inf
      %2267 = vmax.xlane.f32.xlu0 %v2266
      %v2268 = vpop.xlane.xlu0 %2267
      %v2269 = vsub.f32 %v2263, %v2268
      %v2270 = vmul.f32 %v2269, 1.442695
      %v2271 = vpow.pop %v2270
      %v2272 = vsel %vm1256, %v2271, 0.0
      %2273 = vadd.xlane.f32.xlu0 %v2272
      %v2274 = vpop.xlane.xlu0 %2273
      %v2275 = vrcp.pop %v2274
      %v2276 = vmul.f32 %v2271, %v2275
      %2277 = vrot.lane.b32.xlu0 %v1169, 64
      %v2278 = vpop.permute.xlu0 %2277
      %v2281 = vsel %vm1256, %v2276, 0
      %2283 = vmatprep.subr.mxu0 0.0
      %2284 = vmatpush1.msra.mxu0 %v2278
      %2285 = vmatprep.subr.mxu0 0.0
      %2286 = vmatpush1.msra.mxu0 0.0
      %2287 = vmatprep.subr.mxu0 0.0
      %2288 = vmatpush1.msra.mxu0 0.0
      %2289 = vmatprep.subr.mxu0 0.0
      %2290 = vmatpush1.msra.mxu0 0.0
      %2291 = vmatprep.subr.mxu0 0.0
      %2292 = vmatpush1.msra.mxu0 0.0
      %2293 = vmatprep.subr.mxu0 0.0
      %2294 = vmatpush1.msra.mxu0 0.0
      %2295 = vmatprep.subr.mxu0 0.0
      %2296 = vmatpush1.msra.mxu0 0.0
      %2297 = vmatprep.subr.mxu0 0.0
      %2298 = vmatpush1.msra.mxu0 0.0
      %2299 = vmatprep.subr.mxu0 0.0
      %2300 = vmatpush1.msra.mxu0 0.0
      %2301 = vmatprep.subr.mxu0 0.0
      %2302 = vmatpush1.msra.mxu0 0.0
      %2303 = vmatprep.subr.mxu0 0.0
      %2304 = vmatpush1.msra.mxu0 0.0
      %2305 = vmatprep.subr.mxu0 0.0
      %2306 = vmatpush1.msra.mxu0 0.0
      %2307 = vmatprep.subr.mxu0 0.0
      %2308 = vmatpush1.msra.mxu0 0.0
      %2309 = vmatprep.subr.mxu0 0.0
      %2310 = vmatpush1.msra.mxu0 0.0
      %2311 = vmatprep.subr.mxu0 0.0
      %2312 = vmatpush1.msra.mxu0 0.0
      %2313 = vmatprep.subr.mxu0 0.0
      %2314 = vmatpush1.msra.mxu0 0.0
      %2315 = vmatprep.subr.mxu0 0.0
      %2316 = vmatpush1.msra.mxu0 0.0
      %2317 = vmatprep.subr.mxu0 0.0
      %2318 = vmatpush1.msra.mxu0 0.0
      %2319 = vmatprep.subr.mxu0 0.0
      %2320 = vmatpush1.msra.mxu0 0.0
      %2321 = vmatprep.subr.mxu0 0.0
      %2322 = vmatpush1.msra.mxu0 0.0
      %2323 = vmatprep.subr.mxu0 0.0
      %2324 = vmatpush1.msra.mxu0 0.0
      %2325 = vmatprep.subr.mxu0 0.0
      %2326 = vmatpush1.msra.mxu0 0.0
      %2327 = vmatprep.subr.mxu0 0.0
      %2328 = vmatpush1.msra.mxu0 0.0
      %2329 = vmatprep.subr.mxu0 0.0
      %2330 = vmatpush1.msra.mxu0 0.0
      %2331 = vmatprep.subr.mxu0 0.0
      %2332 = vmatpush1.msra.mxu0 0.0
      %2333 = vmatprep.subr.mxu0 0.0
      %2334 = vmatpush1.msra.mxu0 0.0
      %2335 = vmatprep.subr.mxu0 0.0
      %2336 = vmatpush1.msra.mxu0 0.0
      %2337 = vmatprep.subr.mxu0 0.0
      %2338 = vmatpush1.msra.mxu0 0.0
      %2339 = vmatprep.subr.mxu0 0.0
      %2340 = vmatpush1.msra.mxu0 0.0
      %2341 = vmatprep.subr.mxu0 0.0
      %2342 = vmatpush1.msra.mxu0 0.0
      %2343 = vmatprep.subr.mxu0 0.0
      %2344 = vmatpush1.msra.mxu0 0.0
      %2345 = vmatprep.subr.mxu0 0.0
      %2346 = vmatpush1.msra.mxu0 0.0
      %2347 = vmatprep.mubr.f32.mxu0 0.0
      %2348 = vmatmul.mubr.f32.gmra.mrb[0].mxu0 %v2281
      %v2349 = vpop.f32.mrb[0].mxu0
      %v2350 = vadd.f32 0.0, %v2349
      %v2351 = vpop.f32.mrb[0].mxu0
      %2352 = vdwg.mxu0
      %2353 = vrot.lane.b32.xlu0 %v1093, 32
      %v2354 = vpop.permute.xlu0 %2353
      %2355 = vrot.lane.b32.xlu0 %v1095, 32
      %v2356 = vpop.permute.xlu0 %2355
      %v2357 = vsel %vm1179, %v2354, 0
      %v2359 = vsel %vm1179, %v2356, 0
      %2361 = vmatprep.subr.mxu0 0.0
      %2362 = vmatpush1.xpose.msra.mxu0 %v2359
      %2363 = vmatprep.subr.mxu0 0.0
      %2364 = vmatpush1.xpose.msra.mxu0 0.0
      %2365 = vmatprep.subr.mxu0 0.0
      %2366 = vmatpush1.xpose.msra.mxu0 0.0
      %2367 = vmatprep.subr.mxu0 0.0
      %2368 = vmatpush1.xpose.msra.mxu0 0.0
      %2369 = vmatprep.subr.mxu0 0.0
      %2370 = vmatpush1.xpose.msra.mxu0 0.0
      %2371 = vmatprep.subr.mxu0 0.0
      %2372 = vmatpush1.xpose.msra.mxu0 0.0
      %2373 = vmatprep.subr.mxu0 0.0
      %2374 = vmatpush1.xpose.msra.mxu0 0.0
      %2375 = vmatprep.subr.mxu0 0.0
      %2376 = vmatpush1.xpose.msra.mxu0 0.0
      %2377 = vmatprep.subr.mxu0 0.0
      %2378 = vmatpush1.xpose.msra.mxu0 0.0
      %2379 = vmatprep.subr.mxu0 0.0
      %2380 = vmatpush1.xpose.msra.mxu0 0.0
      %2381 = vmatprep.subr.mxu0 0.0
      %2382 = vmatpush1.xpose.msra.mxu0 0.0
      %2383 = vmatprep.subr.mxu0 0.0
      %2384 = vmatpush1.xpose.msra.mxu0 0.0
      %2385 = vmatprep.subr.mxu0 0.0
      %2386 = vmatpush1.xpose.msra.mxu0 0.0
      %2387 = vmatprep.subr.mxu0 0.0
      %2388 = vmatpush1.xpose.msra.mxu0 0.0
      %2389 = vmatprep.subr.mxu0 0.0
      %2390 = vmatpush1.xpose.msra.mxu0 0.0
      %2391 = vmatprep.subr.mxu0 0.0
      %2392 = vmatpush1.xpose.msra.mxu0 0.0
      %2393 = vmatprep.subr.mxu0 0.0
      %2394 = vmatpush1.xpose.msra.mxu0 0.0
      %2395 = vmatprep.subr.mxu0 0.0
      %2396 = vmatpush1.xpose.msra.mxu0 0.0
      %2397 = vmatprep.subr.mxu0 0.0
      %2398 = vmatpush1.xpose.msra.mxu0 0.0
      %2399 = vmatprep.subr.mxu0 0.0
      %2400 = vmatpush1.xpose.msra.mxu0 0.0
      %2401 = vmatprep.subr.mxu0 0.0
      %2402 = vmatpush1.xpose.msra.mxu0 0.0
      %2403 = vmatprep.subr.mxu0 0.0
      %2404 = vmatpush1.xpose.msra.mxu0 0.0
      %2405 = vmatprep.subr.mxu0 0.0
      %2406 = vmatpush1.xpose.msra.mxu0 0.0
      %2407 = vmatprep.subr.mxu0 0.0
      %2408 = vmatpush1.xpose.msra.mxu0 0.0
      %2409 = vmatprep.subr.mxu0 0.0
      %2410 = vmatpush1.xpose.msra.mxu0 0.0
      %2411 = vmatprep.subr.mxu0 0.0
      %2412 = vmatpush1.xpose.msra.mxu0 0.0
      %2413 = vmatprep.subr.mxu0 0.0
      %2414 = vmatpush1.xpose.msra.mxu0 0.0
      %2415 = vmatprep.subr.mxu0 0.0
      %2416 = vmatpush1.xpose.msra.mxu0 0.0
      %2417 = vmatprep.subr.mxu0 0.0
      %2418 = vmatpush1.xpose.msra.mxu0 0.0
      %2419 = vmatprep.subr.mxu0 0.0
      %2420 = vmatpush1.xpose.msra.mxu0 0.0
      %2421 = vmatprep.subr.mxu0 0.0
      %2422 = vmatpush1.xpose.msra.mxu0 0.0
      %2423 = vmatprep.subr.mxu0 0.0
      %2424 = vmatpush1.xpose.msra.mxu0 0.0
      %2425 = vmatprep.mubr.f32.mxu0 0.0
      %2426 = vmatmul.mubr.f32.gmra.mrb[0].mxu0 %v2357
      %v2427 = vpop.f32.mrb[0].mxu0
      %v2428 = vadd.f32 %v1860, %v2427
      %v2429 = vpop.f32.mrb[0].mxu0
      %2430 = vdwg.mxu0
      %v2431 = vsel %vm1256, %v2428, -inf
      %2432 = vmax.xlane.f32.xlu0 %v2431
      %v2433 = vpop.xlane.xlu0 %2432
      %v2434 = vsub.f32 %v2428, %v2433
      %v2435 = vmul.f32 %v2434, 1.442695
      %v2436 = vpow.pop %v2435
      %v2437 = vsel %vm1256, %v2436, 0.0
      %2438 = vadd.xlane.f32.xlu0 %v2437
      %v2439 = vpop.xlane.xlu0 %2438
      %v2440 = vrcp.pop %v2439
      %v2441 = vmul.f32 %v2436, %v2440
      %2442 = vrot.lane.b32.xlu0 %v1169, 32
      %v2443 = vpop.permute.xlu0 %2442
      %v2446 = vsel %vm1256, %v2441, 0
      %2448 = vmatprep.subr.mxu0 0.0
      %2449 = vmatpush1.msra.mxu0 %v2443
      %2450 = vmatprep.subr.mxu0 0.0
      %2451 = vmatpush1.msra.mxu0 0.0
      %2452 = vmatprep.subr.mxu0 0.0
      %2453 = vmatpush1.msra.mxu0 0.0
      %2454 = vmatprep.subr.mxu0 0.0
      %2455 = vmatpush1.msra.mxu0 0.0
      %2456 = vmatprep.subr.mxu0 0.0
      %2457 = vmatpush1.msra.mxu0 0.0
      %2458 = vmatprep.subr.mxu0 0.0
      %2459 = vmatpush1.msra.mxu0 0.0
      %2460 = vmatprep.subr.mxu0 0.0
      %2461 = vmatpush1.msra.mxu0 0.0
      %2462 = vmatprep.subr.mxu0 0.0
      %2463 = vmatpush1.msra.mxu0 0.0
      %2464 = vmatprep.subr.mxu0 0.0
      %2465 = vmatpush1.msra.mxu0 0.0
      %2466 = vmatprep.subr.mxu0 0.0
      %2467 = vmatpush1.msra.mxu0 0.0
      %2468 = vmatprep.subr.mxu0 0.0
      %2469 = vmatpush1.msra.mxu0 0.0
      %2470 = vmatprep.subr.mxu0 0.0
      %2471 = vmatpush1.msra.mxu0 0.0
      %2472 = vmatprep.subr.mxu0 0.0
      %2473 = vmatpush1.msra.mxu0 0.0
      %2474 = vmatprep.subr.mxu0 0.0
      %2475 = vmatpush1.msra.mxu0 0.0
      %2476 = vmatprep.subr.mxu0 0.0
      %2477 = vmatpush1.msra.mxu0 0.0
      %2478 = vmatprep.subr.mxu0 0.0
      %2479 = vmatpush1.msra.mxu0 0.0
      %2480 = vmatprep.subr.mxu0 0.0
      %2481 = vmatpush1.msra.mxu0 0.0
      %2482 = vmatprep.subr.mxu0 0.0
      %2483 = vmatpush1.msra.mxu0 0.0
      %2484 = vmatprep.subr.mxu0 0.0
      %2485 = vmatpush1.msra.mxu0 0.0
      %2486 = vmatprep.subr.mxu0 0.0
      %2487 = vmatpush1.msra.mxu0 0.0
      %2488 = vmatprep.subr.mxu0 0.0
      %2489 = vmatpush1.msra.mxu0 0.0
      %2490 = vmatprep.subr.mxu0 0.0
      %2491 = vmatpush1.msra.mxu0 0.0
      %2492 = vmatprep.subr.mxu0 0.0
      %2493 = vmatpush1.msra.mxu0 0.0
      %2494 = vmatprep.subr.mxu0 0.0
      %2495 = vmatpush1.msra.mxu0 0.0
      %2496 = vmatprep.subr.mxu0 0.0
      %2497 = vmatpush1.msra.mxu0 0.0
      %2498 = vmatprep.subr.mxu0 0.0
      %2499 = vmatpush1.msra.mxu0 0.0
      %2500 = vmatprep.subr.mxu0 0.0
      %2501 = vmatpush1.msra.mxu0 0.0
      %2502 = vmatprep.subr.mxu0 0.0
      %2503 = vmatpush1.msra.mxu0 0.0
      %2504 = vmatprep.subr.mxu0 0.0
      %2505 = vmatpush1.msra.mxu0 0.0
      %2506 = vmatprep.subr.mxu0 0.0
      %2507 = vmatpush1.msra.mxu0 0.0
      %2508 = vmatprep.subr.mxu0 0.0
      %2509 = vmatpush1.msra.mxu0 0.0
      %2510 = vmatprep.subr.mxu0 0.0
      %2511 = vmatpush1.msra.mxu0 0.0
      %2512 = vmatprep.mubr.f32.mxu0 0.0
      %2513 = vmatmul.mubr.f32.gmra.mrb[0].mxu0 %v2446
      %v2514 = vpop.f32.mrb[0].mxu0
      %v2515 = vadd.f32 0.0, %v2514
      %v2516 = vpop.f32.mrb[0].mxu0
      %2517 = vdwg.mxu0
      %2519 = vrot.lane.b32.xlu0 %v2185, 32
      %v2520 = vpop.permute.xlu0 %2519
      %2523 = vrot.lane.b32.xlu0 %v2350, 64
      %v2524 = vpop.permute.xlu0 %2523
      %2527 = vrot.lane.b32.xlu0 %v2515, 96
      %v2528 = vpop.permute.xlu0 %2527
      %v2530 = vsel %vm1179, %v2019, %v2520
      %v2531 = vsel %vm1850, %v2530, %v2524
      %v2532 = vsel %vm1852, %v2531, %v2528
      %v2533 = vld [vmem:[%s900] sm:$0xff]
      %v2534 = vld [vmem:[%s900 + $0x8] sm:$0xff]
      %v2535 = vld [vmem:[%s900 + $0x10] sm:$0xff]
      %v2536 = vld [vmem:[%s900 + $0x18] sm:$0xff]
      %v2537 = vld [vmem:[%s900 + $0x20] sm:$0xff]
      %v2538 = vld [vmem:[%s900 + $0x28] sm:$0xff]
      %v2539 = vld [vmem:[%s900 + $0x30] sm:$0xff]
      %v2540 = vld [vmem:[%s900 + $0x38] sm:$0xff]
      %v2541 = vld [vmem:[%s900 + $0x40] sm:$0xff]
      %v2542 = vld [vmem:[%s900 + $0x48] sm:$0xff]
      %v2543 = vld [vmem:[%s900 + $0x50] sm:$0xff]
      %v2544 = vld [vmem:[%s900 + $0x58] sm:$0xff]
      %v2545 = vld [vmem:[%s900 + $0x60] sm:$0xff]
      %v2546 = vld [vmem:[%s900 + $0x68] sm:$0xff]
      %v2547 = vld [vmem:[%s900 + $0x70] sm:$0xff]
      %v2548 = vld [vmem:[%s900 + $0x78] sm:$0xff]
      %v2549 = vld [vmem:[%s903] sm:$0x1]
      %v2551 = vlaneseq
      %v2552 = vshrl.u32 %v2551, 7
      %v2553 = vsub.s32 0, %v2552
      %v2554 = vrot.slane %v2549, %v2553
      %2556 = vmatprep.subr.mxu0 0.0
      %2557 = vmatpush1.msra.mxu0 %v2533
      %2558 = vmatprep.subr.mxu0 0.0
      %2559 = vmatpush1.msra.mxu0 %v2534
      %2560 = vmatprep.subr.mxu0 0.0
      %2561 = vmatpush1.msra.mxu0 %v2535
      %2562 = vmatprep.subr.mxu0 0.0
      %2563 = vmatpush1.msra.mxu0 %v2536
      %2564 = vmatprep.subr.mxu0 0.0
      %2565 = vmatpush1.msra.mxu0 %v2537
      %2566 = vmatprep.subr.mxu0 0.0
      %2567 = vmatpush1.msra.mxu0 %v2538
      %2568 = vmatprep.subr.mxu0 0.0
      %2569 = vmatpush1.msra.mxu0 %v2539
      %2570 = vmatprep.subr.mxu0 0.0
      %2571 = vmatpush1.msra.mxu0 %v2540
      %2572 = vmatprep.subr.mxu0 0.0
      %2573 = vmatpush1.msra.mxu0 %v2541
      %2574 = vmatprep.subr.mxu0 0.0
      %2575 = vmatpush1.msra.mxu0 %v2542
      %2576 = vmatprep.subr.mxu0 0.0
      %2577 = vmatpush1.msra.mxu0 %v2543
      %2578 = vmatprep.subr.mxu0 0.0
      %2579 = vmatpush1.msra.mxu0 %v2544
      %2580 = vmatprep.subr.mxu0 0.0
      %2581 = vmatpush1.msra.mxu0 %v2545
      %2582 = vmatprep.subr.mxu0 0.0
      %2583 = vmatpush1.msra.mxu0 %v2546
      %2584 = vmatprep.subr.mxu0 0.0
      %2585 = vmatpush1.msra.mxu0 %v2547
      %2586 = vmatprep.subr.mxu0 0.0
      %2587 = vmatpush1.msra.mxu0 %v2548
      %2588 = vmatprep.subr.mxu0 0.0
      %2589 = vmatpush1.msra.mxu0 0.0
      %2590 = vmatprep.subr.mxu0 0.0
      %2591 = vmatpush1.msra.mxu0 0.0
      %2592 = vmatprep.subr.mxu0 0.0
      %2593 = vmatpush1.msra.mxu0 0.0
      %2594 = vmatprep.subr.mxu0 0.0
      %2595 = vmatpush1.msra.mxu0 0.0
      %2596 = vmatprep.subr.mxu0 0.0
      %2597 = vmatpush1.msra.mxu0 0.0
      %2598 = vmatprep.subr.mxu0 0.0
      %2599 = vmatpush1.msra.mxu0 0.0
      %2600 = vmatprep.subr.mxu0 0.0
      %2601 = vmatpush1.msra.mxu0 0.0
      %2602 = vmatprep.subr.mxu0 0.0
      %2603 = vmatpush1.msra.mxu0 0.0
      %2604 = vmatprep.subr.mxu0 0.0
      %2605 = vmatpush1.msra.mxu0 0.0
      %2606 = vmatprep.subr.mxu0 0.0
      %2607 = vmatpush1.msra.mxu0 0.0
      %2608 = vmatprep.subr.mxu0 0.0
      %2609 = vmatpush1.msra.mxu0 0.0
      %2610 = vmatprep.subr.mxu0 0.0
      %2611 = vmatpush1.msra.mxu0 0.0
      %2612 = vmatprep.subr.mxu0 0.0
      %2613 = vmatpush1.msra.mxu0 0.0
      %2614 = vmatprep.subr.mxu0 0.0
      %2615 = vmatpush1.msra.mxu0 0.0
      %2616 = vmatprep.subr.mxu0 0.0
      %2617 = vmatpush1.msra.mxu0 0.0
      %2618 = vmatprep.subr.mxu0 0.0
      %2619 = vmatpush1.msra.mxu0 0.0
      %2620 = vmatprep.mubr.f32.mxu0 0.0
      %2621 = vmatmul.mubr.f32.gmra.mrb[0].mxu0 %v1853
      %v2622 = vpop.f32.mrb[0].mxu0
      %v2623 = vadd.f32 %v2554, %v2622
      %v2624 = vpop.f32.mrb[0].mxu0
      %2625 = vmatprep.mubr.f32.mxu0 0.0
      %2626 = vmatmul.mubr.f32.gmra.mrb[0].mxu0 %v2532
      %v2627 = vpop.f32.mrb[0].mxu0
      %v2628 = vadd.f32 %v2554, %v2627
      %v2629 = vpop.f32.mrb[0].mxu0
      %2630 = vdwg.mxu0
      %v2631 = vadd.f32 %v953, %v2623
      %v2632 = vadd.f32 %v954, %v2628
      %v2633 = vld [vmem:[%s906] sm:$0x1]
      %v2634 = vld [vmem:[%s909] sm:$0x1]
      %2635 = vadd.xlane.f32.xlu0 %v2631
      %v2636 = vpop.xlane.xlu0 %2635
      %2637 = vadd.xlane.f32.xlu0 %v2632
      %v2638 = vpop.xlane.xlu0 %2637
      %v2639 = vrcp.pop 128.0
      %v2640 = vmul.f32 %v2636, %v2639
      %v2641 = vmul.f32 %v2638, %v2639
      %v2642 = vsub.f32 %v2631, %v2640
      %v2643 = vsub.f32 %v2632, %v2641
      %v2644 = vmul.f32 %v2642, %v2642
      %v2645 = vmul.f32 %v2643, %v2643
      %2646 = vadd.xlane.f32.xlu0 %v2644
      %v2647 = vpop.xlane.xlu0 %2646
      %2648 = vadd.xlane.f32.xlu0 %v2645
      %v2649 = vpop.xlane.xlu0 %2648
      %v2650 = vmul.f32 %v2647, %v2639
      %v2651 = vmul.f32 %v2649, %v2639
      %v2652 = vadd.f32 %v2650, 1e-05
      %v2653 = vadd.f32 %v2651, 1e-05
      %v2654 = vrsqrt.pop %v2652
      %v2655 = vrsqrt.pop %v2653
      %v2656 = vmul.f32 %v2642, %v2654
      %v2657 = vmul.f32 %v2643, %v2655
      %v2659 = vlaneseq
      %v2660 = vshrl.u32 %v2659, 7
      %v2661 = vsub.s32 0, %v2660
      %v2662 = vrot.slane %v2633, %v2661
      %v2664 = vmul.f32 %v2656, %v2662
      %v2665 = vmul.f32 %v2657, %v2662
      %v2667 = vlaneseq
      %v2668 = vshrl.u32 %v2667, 7
      %v2669 = vsub.s32 0, %v2668
      %v2670 = vrot.slane %v2634, %v2669
      %v2672 = vadd.f32 %v2664, %v2670
      %v2673 = vadd.f32 %v2665, %v2670
      %v2674 = vld [vmem:[%s885] sm:$0x1]
      %v2676 = vlaneseq
      %v2677 = vshrl.u32 %v2676, 7
      %v2678 = vsub.s32 0, %v2677
      %v2679 = vrot.slane %v2674, %v2678
      %s2681 = scalar_lea.vmem %s885, 1
      %v2682 = vld [vmem:[%s2681] sm:$0x1]
      %v2684 = vlaneseq
      %v2685 = vshrl.u32 %v2684, 7
      %v2686 = vsub.s32 0, %v2685
      %v2687 = vrot.slane %v2682, %v2686
      %v2689 = vadd.f32 %v2672, %v2679
      %v2690 = vadd.f32 %v2673, %v2687
      %v2691 = vld [vmem:[%s912] sm:$0x1]
      %v2692 = vld [vmem:[%s915] sm:$0x1]
      %2693 = vadd.xlane.f32.xlu0 %v2689
      %v2694 = vpop.xlane.xlu0 %2693
      %2695 = vadd.xlane.f32.xlu0 %v2690
      %v2696 = vpop.xlane.xlu0 %2695
      %v2697 = vmul.f32 %v2694, %v2639
      %v2698 = vmul.f32 %v2696, %v2639
      %v2699 = vsub.f32 %v2689, %v2697
      %v2700 = vsub.f32 %v2690, %v2698
      %v2701 = vmul.f32 %v2699, %v2699
      %v2702 = vmul.f32 %v2700, %v2700
      %2703 = vadd.xlane.f32.xlu0 %v2701
      %v2704 = vpop.xlane.xlu0 %2703
      %2705 = vadd.xlane.f32.xlu0 %v2702
      %v2706 = vpop.xlane.xlu0 %2705
      %v2707 = vmul.f32 %v2704, %v2639
      %v2708 = vmul.f32 %v2706, %v2639
      %v2709 = vadd.f32 %v2707, 1e-05
      %v2710 = vadd.f32 %v2708, 1e-05
      %v2711 = vrsqrt.pop %v2709
      %v2712 = vrsqrt.pop %v2710
      %v2713 = vmul.f32 %v2699, %v2711
      %v2714 = vmul.f32 %v2700, %v2712
      %v2716 = vlaneseq
      %v2717 = vshrl.u32 %v2716, 7
      %v2718 = vsub.s32 0, %v2717
      %v2719 = vrot.slane %v2691, %v2718
      %v2721 = vmul.f32 %v2713, %v2719
      %v2722 = vmul.f32 %v2714, %v2719
      %v2724 = vlaneseq
      %v2725 = vshrl.u32 %v2724, 7
      %v2726 = vsub.s32 0, %v2725
      %v2727 = vrot.slane %v2692, %v2726
      %v2729 = vadd.f32 %v2721, %v2727
      %v2730 = vadd.f32 %v2722, %v2727
      %v2731 = vld [vmem:[%s926] sm:$0xff]
      %v2732 = vld [vmem:[%s926 + $0x8] sm:$0xff]
      %v2733 = vld [vmem:[%s926 + $0x10] sm:$0xff]
      %v2734 = vld [vmem:[%s926 + $0x18] sm:$0xff]
      %v2735 = vld [vmem:[%s926 + $0x20] sm:$0xff]
      %v2736 = vld [vmem:[%s926 + $0x28] sm:$0xff]
      %v2737 = vld [vmem:[%s926 + $0x30] sm:$0xff]
      %v2738 = vld [vmem:[%s926 + $0x38] sm:$0xff]
      %v2739 = vld [vmem:[%s926 + $0x40] sm:$0xff]
      %v2740 = vld [vmem:[%s926 + $0x48] sm:$0xff]
      %v2741 = vld [vmem:[%s926 + $0x50] sm:$0xff]
      %v2742 = vld [vmem:[%s926 + $0x58] sm:$0xff]
      %v2743 = vld [vmem:[%s926 + $0x60] sm:$0xff]
      %v2744 = vld [vmem:[%s926 + $0x68] sm:$0xff]
      %v2745 = vld [vmem:[%s926 + $0x70] sm:$0xff]
      %v2746 = vld [vmem:[%s926 + $0x78] sm:$0xff]
      %v2747 = vld [vmem:[%s926 + $0x80] sm:$0xff]
      %v2748 = vld [vmem:[%s926 + $0x88] sm:$0xff]
      %v2749 = vld [vmem:[%s926 + $0x90] sm:$0xff]
      %v2750 = vld [vmem:[%s926 + $0x98] sm:$0xff]
      %v2751 = vld [vmem:[%s926 + $0xa0] sm:$0xff]
      %v2752 = vld [vmem:[%s926 + $0xa8] sm:$0xff]
      %v2753 = vld [vmem:[%s926 + $0xb0] sm:$0xff]
      %v2754 = vld [vmem:[%s926 + $0xb8] sm:$0xff]
      %v2755 = vld [vmem:[%s926 + $0xc0] sm:$0xff]
      %v2756 = vld [vmem:[%s926 + $0xc8] sm:$0xff]
      %v2757 = vld [vmem:[%s926 + $0xd0] sm:$0xff]
      %v2758 = vld [vmem:[%s926 + $0xd8] sm:$0xff]
      %v2759 = vld [vmem:[%s926 + $0xe0] sm:$0xff]
      %v2760 = vld [vmem:[%s926 + $0xe8] sm:$0xff]
      %v2761 = vld [vmem:[%s926 + $0xf0] sm:$0xff]
      %v2762 = vld [vmem:[%s926 + $0xf8] sm:$0xff]
      %v2763 = vld [vmem:[%s930] sm:$0x3]
      %v2765 = vlaneseq
      %v2766 = vshrl.u32 %v2765, 7
      %v2767 = vsub.s32 0, %v2766
      %v2768 = vrot.slane %v2763, %v2767
      %v2769 = vlaneseq
      %v2770 = vshrl.u32 %v2769, 7
      %v2771 = vsub.s32 1, %v2770
      %v2772 = vrot.slane %v2763, %v2771
      %2775 = vmatprep.subr.mxu0 %v2732
      %2776 = vmatpush1.msra.mxu0 %v2731
      %2777 = vmatprep.subr.mxu0 %v2734
      %2778 = vmatpush1.msra.mxu0 %v2733
      %2779 = vmatprep.subr.mxu0 %v2736
      %2780 = vmatpush1.msra.mxu0 %v2735
      %2781 = vmatprep.subr.mxu0 %v2738
      %2782 = vmatpush1.msra.mxu0 %v2737
      %2783 = vmatprep.subr.mxu0 %v2740
      %2784 = vmatpush1.msra.mxu0 %v2739
      %2785 = vmatprep.subr.mxu0 %v2742
      %2786 = vmatpush1.msra.mxu0 %v2741
      %2787 = vmatprep.subr.mxu0 %v2744
      %2788 = vmatpush1.msra.mxu0 %v2743
      %2789 = vmatprep.subr.mxu0 %v2746
      %2790 = vmatpush1.msra.mxu0 %v2745
      %2791 = vmatprep.subr.mxu0 %v2748
      %2792 = vmatpush1.msra.mxu0 %v2747
      %2793 = vmatprep.subr.mxu0 %v2750
      %2794 = vmatpush1.msra.mxu0 %v2749
      %2795 = vmatprep.subr.mxu0 %v2752
      %2796 = vmatpush1.msra.mxu0 %v2751
      %2797 = vmatprep.subr.mxu0 %v2754
      %2798 = vmatpush1.msra.mxu0 %v2753
      %2799 = vmatprep.subr.mxu0 %v2756
      %2800 = vmatpush1.msra.mxu0 %v2755
      %2801 = vmatprep.subr.mxu0 %v2758
      %2802 = vmatpush1.msra.mxu0 %v2757
      %2803 = vmatprep.subr.mxu0 %v2760
      %2804 = vmatpush1.msra.mxu0 %v2759
      %2805 = vmatprep.subr.mxu0 %v2762
      %2806 = vmatpush1.msra.mxu0 %v2761
      %2807 = vmatprep.subr.mxu0 0.0
      %2808 = vmatpush1.msra.mxu0 0.0
      %2809 = vmatprep.subr.mxu0 0.0
      %2810 = vmatpush1.msra.mxu0 0.0
      %2811 = vmatprep.subr.mxu0 0.0
      %2812 = vmatpush1.msra.mxu0 0.0
      %2813 = vmatprep.subr.mxu0 0.0
      %2814 = vmatpush1.msra.mxu0 0.0
      %2815 = vmatprep.subr.mxu0 0.0
      %2816 = vmatpush1.msra.mxu0 0.0
      %2817 = vmatprep.subr.mxu0 0.0
      %2818 = vmatpush1.msra.mxu0 0.0
      %2819 = vmatprep.subr.mxu0 0.0
      %2820 = vmatpush1.msra.mxu0 0.0
      %2821 = vmatprep.subr.mxu0 0.0
      %2822 = vmatpush1.msra.mxu0 0.0
      %2823 = vmatprep.subr.mxu0 0.0
      %2824 = vmatpush1.msra.mxu0 0.0
      %2825 = vmatprep.subr.mxu0 0.0
      %2826 = vmatpush1.msra.mxu0 0.0
      %2827 = vmatprep.subr.mxu0 0.0
      %2828 = vmatpush1.msra.mxu0 0.0
      %2829 = vmatprep.subr.mxu0 0.0
      %2830 = vmatpush1.msra.mxu0 0.0
      %2831 = vmatprep.subr.mxu0 0.0
      %2832 = vmatpush1.msra.mxu0 0.0
      %2833 = vmatprep.subr.mxu0 0.0
      %2834 = vmatpush1.msra.mxu0 0.0
      %2835 = vmatprep.subr.mxu0 0.0
      %2836 = vmatpush1.msra.mxu0 0.0
      %2837 = vmatprep.subr.mxu0 0.0
      %2838 = vmatpush1.msra.mxu0 0.0
      %2839 = vmatprep.mubr.f32.mxu0 0.0
      %2840 = vmatmul.mubr.f32.gmra.mrb[0].mxu0 %v2729
      %v2841 = vpop.f32.mrb[0].mxu0
      %v2842 = vadd.f32 %v2768, %v2841
      %v2843 = vpop.f32.mrb[0].mxu0
      %v2844 = vadd.f32 %v2772, %v2843
      %2845 = vmatprep.mubr.f32.mxu0 0.0
      %2846 = vmatmul.mubr.f32.gmra.mrb[0].mxu0 %v2730
      %v2847 = vpop.f32.mrb[0].mxu0
      %v2848 = vadd.f32 %v2768, %v2847
      %v2849 = vpop.f32.mrb[0].mxu0
      %v2850 = vadd.f32 %v2772, %v2849
      %2851 = vdwg.mxu0
      %v2852 = vmul.f32 %v2842, 0.5
      %v2853 = vmul.f32 %v2844, 0.5
      %v2854 = vmul.f32 %v2848, 0.5
      %v2855 = vmul.f32 %v2850, 0.5
      %v2856 = vmul.f32 %v2842, 0.044715
      %v2857 = vmul.f32 %v2844, 0.044715
      %v2858 = vmul.f32 %v2848, 0.044715
      %v2859 = vmul.f32 %v2850, 0.044715
      %v2860 = vmul.f32 %v2856, %v2842
      %v2861 = vmul.f32 %v2857, %v2844
      %v2862 = vmul.f32 %v2858, %v2848
      %v2863 = vmul.f32 %v2859, %v2850
      %v2864 = vmul.f32 %v2860, %v2842
      %v2865 = vmul.f32 %v2861, %v2844
      %v2866 = vmul.f32 %v2862, %v2848
      %v2867 = vmul.f32 %v2863, %v2850
      %v2868 = vadd.f32 %v2842, %v2864
      %v2869 = vadd.f32 %v2844, %v2865
      %v2870 = vadd.f32 %v2848, %v2866
      %v2871 = vadd.f32 %v2850, %v2867
      %v2872 = vmul.f32 %v2868, 0.7978846
      %v2873 = vmul.f32 %v2869, 0.7978846
      %v2874 = vmul.f32 %v2870, 0.7978846
      %v2875 = vmul.f32 %v2871, 0.7978846
      %v2876 = vtanh.pop %v2872
      %v2877 = vtanh.pop %v2873
      %v2878 = vtanh.pop %v2874
      %v2879 = vtanh.pop %v2875
      %v2880 = vadd.f32 %v2876, 1.0
      %v2881 = vadd.f32 %v2877, 1.0
      %v2882 = vadd.f32 %v2878, 1.0
      %v2883 = vadd.f32 %v2879, 1.0
      %v2884 = vmul.f32 %v2852, %v2880
      %v2885 = vmul.f32 %v2853, %v2881
      %v2886 = vmul.f32 %v2854, %v2882
      %v2887 = vmul.f32 %v2855, %v2883
      %v2888 = vld [vmem:[%s935] sm:$0xff]
      %v2889 = vld [vmem:[%s935 + $0x8] sm:$0xff]
      %v2890 = vld [vmem:[%s935 + $0x10] sm:$0xff]
      %v2891 = vld [vmem:[%s935 + $0x18] sm:$0xff]
      %v2892 = vld [vmem:[%s935 + $0x20] sm:$0xff]
      %v2893 = vld [vmem:[%s935 + $0x28] sm:$0xff]
      %v2894 = vld [vmem:[%s935 + $0x30] sm:$0xff]
      %v2895 = vld [vmem:[%s935 + $0x38] sm:$0xff]
      %v2896 = vld [vmem:[%s935 + $0x40] sm:$0xff]
      %v2897 = vld [vmem:[%s935 + $0x48] sm:$0xff]
      %v2898 = vld [vmem:[%s935 + $0x50] sm:$0xff]
      %v2899 = vld [vmem:[%s935 + $0x58] sm:$0xff]
      %v2900 = vld [vmem:[%s935 + $0x60] sm:$0xff]
      %v2901 = vld [vmem:[%s935 + $0x68] sm:$0xff]
      %v2902 = vld [vmem:[%s935 + $0x70] sm:$0xff]
      %v2903 = vld [vmem:[%s935 + $0x78] sm:$0xff]
      %v2904 = vld [vmem:[%s935 + $0x80] sm:$0xff]
      %v2905 = vld [vmem:[%s935 + $0x88] sm:$0xff]
      %v2906 = vld [vmem:[%s935 + $0x90] sm:$0xff]
      %v2907 = vld [vmem:[%s935 + $0x98] sm:$0xff]
      %v2908 = vld [vmem:[%s935 + $0xa0] sm:$0xff]
      %v2909 = vld [vmem:[%s935 + $0xa8] sm:$0xff]
      %v2910 = vld [vmem:[%s935 + $0xb0] sm:$0xff]
      %v2911 = vld [vmem:[%s935 + $0xb8] sm:$0xff]
      %v2912 = vld [vmem:[%s935 + $0xc0] sm:$0xff]
      %v2913 = vld [vmem:[%s935 + $0xc8] sm:$0xff]
      %v2914 = vld [vmem:[%s935 + $0xd0] sm:$0xff]
      %v2915 = vld [vmem:[%s935 + $0xd8] sm:$0xff]
      %v2916 = vld [vmem:[%s935 + $0xe0] sm:$0xff]
      %v2917 = vld [vmem:[%s935 + $0xe8] sm:$0xff]
      %v2918 = vld [vmem:[%s935 + $0xf0] sm:$0xff]
      %v2919 = vld [vmem:[%s935 + $0xf8] sm:$0xff]
      %v2920 = vld [vmem:[%s938] sm:$0x1]
      %v2922 = vlaneseq
      %v2923 = vshrl.u32 %v2922, 7
      %v2924 = vsub.s32 0, %v2923
      %v2925 = vrot.slane %v2920, %v2924
      %2927 = vmatprep.subr.mxu0 0.0
      %2928 = vmatpush1.msra.mxu0 %v2888
      %2929 = vmatprep.subr.mxu0 0.0
      %2930 = vmatpush1.msra.mxu0 %v2889
      %2931 = vmatprep.subr.mxu0 0.0
      %2932 = vmatpush1.msra.mxu0 %v2890
      %2933 = vmatprep.subr.mxu0 0.0
      %2934 = vmatpush1.msra.mxu0 %v2891
      %2935 = vmatprep.subr.mxu0 0.0
      %2936 = vmatpush1.msra.mxu0 %v2892
      %2937 = vmatprep.subr.mxu0 0.0
      %2938 = vmatpush1.msra.mxu0 %v2893
      %2939 = vmatprep.subr.mxu0 0.0
      %2940 = vmatpush1.msra.mxu0 %v2894
      %2941 = vmatprep.subr.mxu0 0.0
      %2942 = vmatpush1.msra.mxu0 %v2895
      %2943 = vmatprep.subr.mxu0 0.0
      %2944 = vmatpush1.msra.mxu0 %v2896
      %2945 = vmatprep.subr.mxu0 0.0
      %2946 = vmatpush1.msra.mxu0 %v2897
      %2947 = vmatprep.subr.mxu0 0.0
      %2948 = vmatpush1.msra.mxu0 %v2898
      %2949 = vmatprep.subr.mxu0 0.0
      %2950 = vmatpush1.msra.mxu0 %v2899
      %2951 = vmatprep.subr.mxu0 0.0
      %2952 = vmatpush1.msra.mxu0 %v2900
      %2953 = vmatprep.subr.mxu0 0.0
      %2954 = vmatpush1.msra.mxu0 %v2901
      %2955 = vmatprep.subr.mxu0 0.0
      %2956 = vmatpush1.msra.mxu0 %v2902
      %2957 = vmatprep.subr.mxu0 0.0
      %2958 = vmatpush1.msra.mxu0 %v2903
      %2959 = vmatprep.subr.mxu0 0.0
      %2960 = vmatpush1.msra.mxu0 %v2904
      %2961 = vmatprep.subr.mxu0 0.0
      %2962 = vmatpush1.msra.mxu0 %v2905
      %2963 = vmatprep.subr.mxu0 0.0
      %2964 = vmatpush1.msra.mxu0 %v2906
      %2965 = vmatprep.subr.mxu0 0.0
      %2966 = vmatpush1.msra.mxu0 %v2907
      %2967 = vmatprep.subr.mxu0 0.0
      %2968 = vmatpush1.msra.mxu0 %v2908
      %2969 = vmatprep.subr.mxu0 0.0
      %2970 = vmatpush1.msra.mxu0 %v2909
      %2971 = vmatprep.subr.mxu0 0.0
      %2972 = vmatpush1.msra.mxu0 %v2910
      %2973 = vmatprep.subr.mxu0 0.0
      %2974 = vmatpush1.msra.mxu0 %v2911
      %2975 = vmatprep.subr.mxu0 0.0
      %2976 = vmatpush1.msra.mxu0 %v2912
      %2977 = vmatprep.subr.mxu0 0.0
      %2978 = vmatpush1.msra.mxu0 %v2913
      %2979 = vmatprep.subr.mxu0 0.0
      %2980 = vmatpush1.msra.mxu0 %v2914
      %2981 = vmatprep.subr.mxu0 0.0
      %2982 = vmatpush1.msra.mxu0 %v2915
      %2983 = vmatprep.subr.mxu0 0.0
      %2984 = vmatpush1.msra.mxu0 %v2916
      %2985 = vmatprep.subr.mxu0 0.0
      %2986 = vmatpush1.msra.mxu0 %v2917
      %2987 = vmatprep.subr.mxu0 0.0
      %2988 = vmatpush1.msra.mxu0 %v2918
      %2989 = vmatprep.subr.mxu0 0.0
      %2990 = vmatpush1.msra.mxu0 %v2919
      %2991 = vmatprep.mubr.f32.mxu0 %v2885
      %2992 = vmatmul.mubr.f32.gmra.mrb[0].mxu0 %v2884
      %v2993 = vpop.f32.mrb[0].mxu0
      %v2994 = vadd.f32 %v2925, %v2993
      %v2995 = vpop.f32.mrb[0].mxu0
      %2996 = vmatprep.mubr.f32.mxu0 %v2887
      %2997 = vmatmul.mubr.f32.gmra.mrb[0].mxu0 %v2886
      %v2998 = vpop.f32.mrb[0].mxu0
      %v2999 = vadd.f32 %v2925, %v2998
      %v3000 = vpop.f32.mrb[0].mxu0
      %3001 = vdwg.mxu0
      %v3002 = vadd.f32 %v2729, %v2994
      %v3003 = vadd.f32 %v2730, %v2999
      %v3004 = vld [vmem:[%s918] sm:$0x1]
      %v3005 = vld [vmem:[%s921] sm:$0x1]
      %3006 = vadd.xlane.f32.xlu0 %v3002
      %v3007 = vpop.xlane.xlu0 %3006
      %3008 = vadd.xlane.f32.xlu0 %v3003
      %v3009 = vpop.xlane.xlu0 %3008
      %v3010 = vmul.f32 %v3007, %v2639
      %v3011 = vmul.f32 %v3009, %v2639
      %v3012 = vsub.f32 %v3002, %v3010
      %v3013 = vsub.f32 %v3003, %v3011
      %v3014 = vmul.f32 %v3012, %v3012
      %v3015 = vmul.f32 %v3013, %v3013
      %3016 = vadd.xlane.f32.xlu0 %v3014
      %v3017 = vpop.xlane.xlu0 %3016
      %3018 = vadd.xlane.f32.xlu0 %v3015
      %v3019 = vpop.xlane.xlu0 %3018
      %v3020 = vmul.f32 %v3017, %v2639
      %v3021 = vmul.f32 %v3019, %v2639
      %v3022 = vadd.f32 %v3020, 1e-05
      %v3023 = vadd.f32 %v3021, 1e-05
      %v3024 = vrsqrt.pop %v3022
      %v3025 = vrsqrt.pop %v3023
      %v3026 = vmul.f32 %v3012, %v3024
      %v3027 = vmul.f32 %v3013, %v3025
      %v3029 = vlaneseq
      %v3030 = vshrl.u32 %v3029, 7
      %v3031 = vsub.s32 0, %v3030
      %v3032 = vrot.slane %v3004, %v3031
      %v3034 = vmul.f32 %v3026, %v3032
      %v3035 = vmul.f32 %v3027, %v3032
      %v3037 = vlaneseq
      %v3038 = vshrl.u32 %v3037, 7
      %v3039 = vsub.s32 0, %v3038
      %v3040 = vrot.slane %v3005, %v3039
      %v3042 = vadd.f32 %v3034, %v3040
      %v3043 = vadd.f32 %v3035, %v3040
      %3044 = vst [vmem:[#allocation2] sm:$0xff] %v3042
      %3045 = vst [vmem:[#allocation2 + $0x8] sm:$0xff] %v3043
      %p3046 = scmp.eq.s32.totalorder %s36, 1
      // Predicated region
      $region105: #{decoder_transformer_forward.1} parent=99 // pred_check
        %p3047 = pneg %p3046
      $region106: #{decoder_transformer_forward.1} parent=99 // pred_check_branch
        %3049 = sbr.rel (%p3047) target = $region108
      $region107: #{decoder_transformer_forward.1} parent=99 // pred_region
        %v3050 = vld [vmem:[%s18] sm:$0xff]
        %v3051 = vld [vmem:[%s18 + $0x8] sm:$0xff]
        %v3052 = vld [vmem:[%s18 + $0x10] sm:$0xff]
        %v3053 = vld [vmem:[%s18 + $0x18] sm:$0xff]
        %v3054 = vld [vmem:[%s18 + $0x20] sm:$0xff]
        %v3055 = vld [vmem:[%s18 + $0x28] sm:$0xff]
        %v3056 = vld [vmem:[%s18 + $0x30] sm:$0xff]
        %v3057 = vld [vmem:[%s18 + $0x38] sm:$0xff]
        %v3058 = vld [vmem:[%s18 + $0x40] sm:$0xff]
        %v3059 = vld [vmem:[%s18 + $0x48] sm:$0xff]
        %v3060 = vld [vmem:[%s18 + $0x50] sm:$0xff]
        %v3061 = vld [vmem:[%s18 + $0x58] sm:$0xff]
        %v3062 = vld [vmem:[%s18 + $0x60] sm:$0xff]
        %v3063 = vld [vmem:[%s18 + $0x68] sm:$0xff]
        %v3064 = vld [vmem:[%s18 + $0x70] sm:$0xff]
        %v3065 = vld [vmem:[%s18 + $0x78] sm:$0xff]
        %v3066 = vld [vmem:[%s19] sm:$0x1]
        %v3068 = vlaneseq
        %v3069 = vshrl.u32 %v3068, 7
        %v3070 = vsub.s32 0, %v3069
        %v3071 = vrot.slane %v3066, %v3070
        %3073 = vmatprep.subr.mxu0 0.0
        %3074 = vmatpush1.msra.mxu0 %v3050
        %3075 = vmatprep.subr.mxu0 0.0
        %3076 = vmatpush1.msra.mxu0 %v3051
        %3077 = vmatprep.subr.mxu0 0.0
        %3078 = vmatpush1.msra.mxu0 %v3052
        %3079 = vmatprep.subr.mxu0 0.0
        %3080 = vmatpush1.msra.mxu0 %v3053
        %3081 = vmatprep.subr.mxu0 0.0
        %3082 = vmatpush1.msra.mxu0 %v3054
        %3083 = vmatprep.subr.mxu0 0.0
        %3084 = vmatpush1.msra.mxu0 %v3055
        %3085 = vmatprep.subr.mxu0 0.0
        %3086 = vmatpush1.msra.mxu0 %v3056
        %3087 = vmatprep.subr.mxu0 0.0
        %3088 = vmatpush1.msra.mxu0 %v3057
        %3089 = vmatprep.subr.mxu0 0.0
        %3090 = vmatpush1.msra.mxu0 %v3058
        %3091 = vmatprep.subr.mxu0 0.0
        %3092 = vmatpush1.msra.mxu0 %v3059
        %3093 = vmatprep.subr.mxu0 0.0
        %3094 = vmatpush1.msra.mxu0 %v3060
        %3095 = vmatprep.subr.mxu0 0.0
        %3096 = vmatpush1.msra.mxu0 %v3061
        %3097 = vmatprep.subr.mxu0 0.0
        %3098 = vmatpush1.msra.mxu0 %v3062
        %3099 = vmatprep.subr.mxu0 0.0
        %3100 = vmatpush1.msra.mxu0 %v3063
        %3101 = vmatprep.subr.mxu0 0.0
        %3102 = vmatpush1.msra.mxu0 %v3064
        %3103 = vmatprep.subr.mxu0 0.0
        %3104 = vmatpush1.msra.mxu0 %v3065
        %3105 = vmatprep.subr.mxu0 0.0
        %3106 = vmatpush1.msra.mxu0 0.0
        %3107 = vmatprep.subr.mxu0 0.0
        %3108 = vmatpush1.msra.mxu0 0.0
        %3109 = vmatprep.subr.mxu0 0.0
        %3110 = vmatpush1.msra.mxu0 0.0
        %3111 = vmatprep.subr.mxu0 0.0
        %3112 = vmatpush1.msra.mxu0 0.0
        %3113 = vmatprep.subr.mxu0 0.0
        %3114 = vmatpush1.msra.mxu0 0.0
        %3115 = vmatprep.subr.mxu0 0.0
        %3116 = vmatpush1.msra.mxu0 0.0
        %3117 = vmatprep.subr.mxu0 0.0
        %3118 = vmatpush1.msra.mxu0 0.0
        %3119 = vmatprep.subr.mxu0 0.0
        %3120 = vmatpush1.msra.mxu0 0.0
        %3121 = vmatprep.subr.mxu0 0.0
        %3122 = vmatpush1.msra.mxu0 0.0
        %3123 = vmatprep.subr.mxu0 0.0
        %3124 = vmatpush1.msra.mxu0 0.0
        %3125 = vmatprep.subr.mxu0 0.0
        %3126 = vmatpush1.msra.mxu0 0.0
        %3127 = vmatprep.subr.mxu0 0.0
        %3128 = vmatpush1.msra.mxu0 0.0
        %3129 = vmatprep.subr.mxu0 0.0
        %3130 = vmatpush1.msra.mxu0 0.0
        %3131 = vmatprep.subr.mxu0 0.0
        %3132 = vmatpush1.msra.mxu0 0.0
        %3133 = vmatprep.subr.mxu0 0.0
        %3134 = vmatpush1.msra.mxu0 0.0
        %3135 = vmatprep.subr.mxu0 0.0
        %3136 = vmatpush1.msra.mxu0 0.0
        %3137 = vmatprep.mubr.f32.mxu0 0.0
        %3138 = vmatmul.mubr.f32.gmra.mrb[0].mxu0 %v3042
        %v3139 = vpop.f32.mrb[0].mxu0
        %v3140 = vadd.f32 %v3071, %v3139
        %v3141 = vpop.f32.mrb[0].mxu0
        %3142 = vmatprep.mubr.f32.mxu0 0.0
        %3143 = vmatmul.mubr.f32.gmra.mrb[0].mxu0 %v3043
        %v3144 = vpop.f32.mrb[0].mxu0
        %v3145 = vadd.f32 %v3071, %v3144
        %v3146 = vpop.f32.mrb[0].mxu0
        %3147 = vdwg.mxu0
        %v3148 = vld [vmem:[%s876] sm:$0xff]
        %s3149 = scalar_lea.vmem %s876, 8
        %v3150 = vld [vmem:[%s3149] sm:$0xff]
        %3152 = vset.pattern.permute.xlu0 0
        %3153 = vperm.xlu0 %3152, %v3148
        %v3154 = vpop.permute.xlu0 %3153
        %3157 = vset.pattern.permute.xlu0 0
        %3158 = vperm.xlu0 %3157, %v3150
        %v3159 = vpop.permute.xlu0 %3158
        %v3161 = vmul.f32 %v3140, %v3154
        %v3162 = vmul.f32 %v3145, %v3159
        %3163 = vst [vmem:[%s943] sm:$0xff] %v3161
        %3164 = vst [vmem:[%s943 + $0x8] sm:$0xff] %v3162
      $region108: #{decoder_transformer_forward.1} parent=99 // pred_fallthru
        _
      %s3165 = smul.u32 2, %s35
      %p3166 = scmp.lt.s32.totalorder %s3165, 1
      %s3167 = scalar_select %p3166, %s3165, 1
      %s3168 = smul.addr %s3167, 8
      %s3169 = scalar_lea.vmem %s20, %s3168
      // Predicated region
      $region109: #{decoder_transformer_forward.1} parent=99 // pred_check
        %p3170 = pneg %p573
      $region110: #{decoder_transformer_forward.1} parent=99 // pred_check_branch
        %3172 = sbr.rel (%p3170) target = $region112
      $region111: #{decoder_transformer_forward.1} parent=99 // pred_region
        %s3173 = smul.u32 2, %s35
      $region112: #{decoder_transformer_forward.1} parent=99 // pred_fallthru
        _
      // Predicated region
      $region113: #{decoder_transformer_forward.1} parent=99 // pred_check
        %p3174 = pneg %p573
      $region114: #{decoder_transformer_forward.1} parent=99 // pred_check_branch
        %3176 = sbr.rel (%p3174) target = $region116
      $region115: #{decoder_transformer_forward.1} parent=99 // pred_region
        %s3177 = smul.u32 2, %s35
        %p3178 = scmp.lt.s32.totalorder %s3177, 1
        %s3179 = scalar_select %p3178, %s3177, 1
        %s3180 = smul.addr %s3179, 8
        %s3181 = scalar_lea.vmem %s20, %s3180
      $region116: #{decoder_transformer_forward.1} parent=99 // pred_fallthru
        _
    $region100: #{decoder_transformer_forward.1} parent=5 // pred_fallthru
      _
    %p3182 = scmp.le.s32.totalorder 2, %s26
    // Predicated region
    $region117: #{decoder_transformer_forward.1} parent=5 // pred_check
      %p3183 = pneg %p3182
    $region118: #{decoder_transformer_forward.1} parent=5 // pred_check_branch
      %3185 = sbr.rel (%p3183) target = $region120
    $region119: #{decoder_transformer_forward.1} parent=5 // pred_region
      %s3186 = ssub.s32 %s26, 2
    $region120: #{decoder_transformer_forward.1} parent=5 // pred_fallthru
      _
  $region6: #{decoder_transformer_forward.1} parent=0 // loop_footer
    %s30 = sadd.s32 1, %s26
  $region7: #{decoder_transformer_forward.1} parent=0 // loop_footer_branch
    %25 = sbr.rel target = $region3
  $region8: #{decoder_transformer_forward.1} parent=0 // loop_exit
    _

</llo_original>
